<compile_context>
chip_gen: v6e
topology: v6e:2x2x1
jax: 0.10.0
libtpu: 0.0.40
codegen_flags: <defaults>
</compile_context>

<pallas_src>
import jax
import jax.numpy as jnp
from jax.experimental import pallas as pl
from jax.experimental.pallas import tpu as pltpu


def _round_up(x, m):
    return ((x + m - 1) // m) * m


# ---------------------------------------------------------------------------
# Pallas kernel: full Dynamic_MLP_C forward for one tile of TM tokens.
# ---------------------------------------------------------------------------
def dynamic_mlp_c_kernel(img_ref, loc_ref,          # (TM, C), (TM, L)   f32
                         w1i_ref, w1l_ref, b1_ref,  # (C, 2I), (L, 2I), (1, 2I)
                         w2_ref, b2_ref,            # (2I, 2*I*P), (1, 2*I*P)
                         sel_ref,                   # (I*P, P + 1)
                         w3_ref, lnb3_ref,          # (P, P), (3, P)
                         out_ref):                  # (TM, P)            f32
    w1i = w1i_ref[...]
    cdt = w1i.dtype                 # MXU operand dtype (bf16 fast / f32 exact)
    ip = sel_ref.shape[0]
    p = out_ref.shape[-1]

    img = img_ref[...].astype(cdt)
    loc = loc_ref[...].astype(cdt)

    # Merged conv11 + conv21 (Linear + ReLU) on the virtual concat [img, loc].
    # Weights are pre-split row-wise (img rows / loc rows) and stacked
    # column-wise ([W11 | W21]): h[:, :I] == relu(conv11), h[:, I:] == relu(conv21).
    h = jnp.maximum(
        jnp.dot(img, w1i, preferred_element_type=jnp.float32)
        + jnp.dot(loc, w1l_ref[...], preferred_element_type=jnp.float32)
        + b1_ref[...], 0.0)                                     # (TM, 2I) f32

    # One wide MXU matmul with a block-diagonal weight produces both halves:
    #   wide[:, :IP]  == conv12(h11) lane-replicated into the [i*P + p] layout
    #   wide[:, IP:]  == conv22(h21) in the [i*P + p] flat layout
    wide = (jnp.dot(h.astype(cdt), w2_ref[...],
                    preferred_element_type=jnp.float32)
            + b2_ref[...])                                      # (TM, 2*IP) f32
    prod = wide[:, :ip] * wide[:, ip:]                          # VPU, stays f32

    # Per-token bilinear contraction over i as a 0/1 selection matmul; the
    # extra SEL column (all 1/P) yields the LayerNorm mean for free:
    #   r[:, :P] = fea[m, q] = sum_i prod[m, i*P + q];   r[:, P] = mean_q fea
    r = jnp.dot(prod.astype(cdt), sel_ref[...],
                preferred_element_type=jnp.float32)             # (TM, P+1) f32
    fea = r[:, :p]
    mean = r[:, p:p + 1]

    # LayerNorm(planes) (PyTorch defaults: eps=1e-5, biased variance) + ReLU
    centered = fea - mean
    var = jnp.mean(centered * centered, axis=-1, keepdims=True)
    normed = centered * jax.lax.rsqrt(var + 1e-5)
    act = jnp.maximum(normed * lnb3_ref[0:1, :] + lnb3_ref[1:2, :], 0.0)

    # conv3 (Linear, no activation)
    out_ref[...] = (jnp.dot(act.astype(cdt), w3_ref[...],
                            preferred_element_type=jnp.float32)
                    + lnb3_ref[2:3, :]).astype(out_ref.dtype)


# ---------------------------------------------------------------------------
# One-time weight preprocessing (hoisted out of the forward pass)
# ---------------------------------------------------------------------------
def preprocess_params(params, planes, img_planes, *, use_bf16=True):
    inplanes = params["w12"].shape[0]
    ip = inplanes * planes
    wdt = jnp.bfloat16 if use_bf16 else jnp.float32

    # conv11 / conv21 stacked column-wise, then split row-wise (img / loc rows)
    # so the [img, loc] concat is never materialized in HBM.
    w1 = jnp.concatenate([params["w11"], params["w21"]], axis=1)       # (C+L, 2I)
    b1 = jnp.concatenate([params["b11"], params["b21"]], axis=1)       # (1, 2I)

    # Block-diagonal fused conv12 (lane-replicated) / conv22 weight.
    w12r = jnp.repeat(params["w12"], planes, axis=1)                   # (I, IP)
    b12r = jnp.repeat(params["b12"], planes, axis=1)                   # (1, IP)
    z = jnp.zeros((inplanes, ip), jnp.float32)
    w2 = jnp.concatenate(
        [jnp.concatenate([w12r, z], axis=0),                           # -> wide[:, :IP]
         jnp.concatenate([z, params["w22_flat"]], axis=0)],            # -> wide[:, IP:]
        axis=1)                                                        # (2I, 2*IP)
    b2 = jnp.concatenate([b12r, params["b22_flat"].reshape(1, ip)], axis=1)

    # 0/1 selection matrix for the bilinear contraction + one 1/P column
    # (LayerNorm mean folded into the same matmul).  Entries are exact in bf16.
    sel = jnp.concatenate(
        [jnp.tile(jnp.eye(planes, dtype=jnp.float32), (inplanes, 1)),
         jnp.full((ip, 1), 1.0 / planes, jnp.float32)], axis=1)        # (IP, P+1)

    lnb3 = jnp.concatenate([params["gamma"], params["beta"], params["b3"]],
                           axis=0)                                     # (3, P)

    return dict(
        w1i=w1[:img_planes].astype(wdt), w1l=w1[img_planes:].astype(wdt),
        b1=b1,                                     # biases stay f32 (added to f32 acc)
        w2=w2.astype(wdt), b2=b2,
        sel=sel.astype(wdt),
        w3=params["w3"].astype(wdt), lnb3=lnb3)


# ---------------------------------------------------------------------------
# Wrapper
# ---------------------------------------------------------------------------
def recursive_block_forward(img_fea, loc_fea, pp, *, tm=512, min_grid_steps=2):
    B, N, C = img_fea.shape
    L = loc_fea.shape[-1]
    M = B * N
    planes = pp["w3"].shape[1]
    two_i = pp["b1"].shape[1]
    two_ip = pp["b2"].shape[1]
    ip = two_ip // 2

    # Token-major 2-D views (free reshapes, nothing concatenated through HBM).
    img2d = img_fea.reshape(M, C)
    loc2d = loc_fea.reshape(M, L)

    # Token tile: multiple of 8 sublanes, capped so the grid keeps at least
    # `min_grid_steps` steps (keeps both v7x TensorCores busy on small M).
    tm_cap = _round_up(pl.cdiv(M, min_grid_steps), 8)
    tm_eff = max(8, min(_round_up(tm, 8), tm_cap))
    m_pad = _round_up(M, tm_eff)
    if m_pad != M:
        img2d = jnp.pad(img2d, ((0, m_pad - M), (0, 0)))
        loc2d = jnp.pad(loc2d, ((0, m_pad - M), (0, 0)))

    def const(r, c):
        return pl.BlockSpec((r, c), lambda m: (0, 0))

    out = pl.pallas_call(
        dynamic_mlp_c_kernel,
        out_shape=jax.ShapeDtypeStruct((m_pad, planes), jnp.float32),
        grid=(m_pad // tm_eff,),
        in_specs=[
            pl.BlockSpec((tm_eff, C), lambda m: (m, 0)),   # img token tile
            pl.BlockSpec((tm_eff, L), lambda m: (m, 0)),   # loc token tile
            const(C, two_i), const(L, two_i), const(1, two_i),   # merged conv11/21
            const(two_i, two_ip), const(1, two_ip),              # fused conv12/22
            const(ip, planes + 1),                               # SEL (+ mean column)
            const(planes, planes), const(3, planes),             # conv3, gamma/beta/b3
        ],
        out_specs=pl.BlockSpec((tm_eff, planes), lambda m: (m, 0)),
        compiler_params=pltpu.CompilerParams(
            dimension_semantics=("parallel",),
            # Explicit headroom: > v5e's 16 MiB default scoped VMEM,
            # comfortably < v7x's 64 MiB physical.
            vmem_limit_bytes=48 * 1024 * 1024),
    )(img2d, loc2d, pp["w1i"], pp["w1l"], pp["b1"], pp["w2"], pp["b2"],
      pp["sel"], pp["w3"], pp["lnb3"])

    return out[:M].reshape(B, N, planes), loc_fea


# ---------------------------------------------------------------------------
# Pure-JAX reference (mirrors the PyTorch module exactly, all f32)
# ---------------------------------------------------------------------------
def reference_forward(img_fea, loc_fea, params, inplanes, planes):
    cat = jnp.concatenate([img_fea, loc_fea], axis=-1)
    h11 = jax.nn.relu(cat @ params["w11"] + params["b11"][0])
    w12 = h11 @ params["w12"] + params["b12"][0]
    h21 = jax.nn.relu(cat @ params["w21"] + params["b21"][0])
    w22 = h21 @ params["w22_flat"] + params["b22_flat"]
    B, N, _ = img_fea.shape
    w22 = w22.reshape(B, N, inplanes, planes)
    fea = jnp.einsum("bni,bnip->bnp", w12, w22)
    mean = fea.mean(-1, keepdims=True)
    var = ((fea - mean) ** 2).mean(-1, keepdims=True)
    fea = (fea - mean) * jax.lax.rsqrt(var + 1e-5)
    fea = fea * params["gamma"][0] + params["beta"][0]
    fea = jax.nn.relu(fea)
    out = fea @ params["w3"] + params["b3"][0]
    return out, loc_fea


# ---------------------------------------------------------------------------
# Deterministic parameter construction (PyTorch nn.Linear-style init)
# ---------------------------------------------------------------------------
def make_params(key, inplanes, planes, loc_planes):
    cin = inplanes + loc_planes

    def linear(k, fan_in, fan_out):
        k1, k2 = jax.random.split(k)
        bound = 1.0 / (fan_in ** 0.5)
        w = jax.random.uniform(k1, (fan_in, fan_out), jnp.float32, -bound, bound)
        b = jax.random.uniform(k2, (1, fan_out), jnp.float32, -bound, bound)
        return w, b

    keys = jax.random.split(key, 5)
    w11, b11 = linear(keys[0], cin, inplanes)
    w12, b12 = linear(keys[1], inplanes, inplanes)
    w21, b21 = linear(keys[2], cin, inplanes)
    w22_flat, b22_flat = linear(keys[3], inplanes, inplanes * planes)
    w3, b3 = linear(keys[4], planes, planes)

    return dict(
        w11=w11, b11=b11, w12=w12, b12=b12, w21=w21, b21=b21,
        w22_flat=w22_flat, b22_flat=b22_flat[0],
        gamma=jnp.ones((1, planes), jnp.float32),   # LayerNorm defaults
        beta=jnp.zeros((1, planes), jnp.float32),
        w3=w3, b3=b3)


if __name__ == "__main__":
    # Small but non-trivial: B*N = 406 tokens exercises a multi-step grid and
    # the ragged-tail padding path (406 -> 416 at tm_eff=208, 480 at tm_eff=96).
    B, N = 2, 203
    inplanes, planes, loc_planes = 32, 32, 8

    key = jax.random.PRNGKey(0)
    k_img, k_loc, k_par = jax.random.split(key, 3)
    img_fea = jax.random.normal(k_img, (B, N, inplanes), jnp.float32)
    loc_fea = jax.random.normal(k_loc, (B, N, loc_planes), jnp.float32)
    params = make_params(k_par, inplanes, planes, loc_planes)

    ref_img, ref_loc = reference_forward(img_fea, loc_fea, params, inplanes, planes)

    # --- Exact-numerics path (f32 MXU operands): strict agreement check ------
    pp_f32 = preprocess_params(params, planes, inplanes, use_bf16=False)
    out_f32, out_loc = recursive_block_forward(img_fea, loc_fea, pp_f32, tm=512)
    out_f32 = jax.block_until_ready(out_f32)
    assert out_f32.shape == (B, N, planes)
    assert jnp.allclose(out_f32, ref_img, atol=1e-4, rtol=1e-4), (
        "f32 path max abs err = %g" % float(jnp.max(jnp.abs(out_f32 - ref_img))))
    assert jnp.array_equal(out_loc, loc_fea)

    # --- Fast path (bf16 MXU operands, f32 accumulation): default config -----
    pp_bf16 = preprocess_params(params, planes, inplanes, use_bf16=True)
    out_bf16, _ = recursive_block_forward(img_fea, loc_fea, pp_bf16, tm=96)
    out_bf16 = jax.block_until_ready(out_bf16)
    assert out_bf16.shape == (B, N, planes)
    assert jnp.allclose(out_bf16, ref_img, atol=5e-2, rtol=5e-2), (
        "bf16 path max abs err = %g" % float(jnp.max(jnp.abs(out_bf16 - ref_img))))

    print("KERNEL_OK")
</pallas_src>

<mosaic_0001>
module attributes {stable_mosaic.version = 11 : i64} {
  func.func @dynamic_mlp_c_kernel(%arg0: i32, %arg1: memref<208x32xf32, #tpu.memory_space<vmem>>, %arg2: memref<208x8xf32, #tpu.memory_space<vmem>>, %arg3: memref<32x64xf32, #tpu.memory_space<vmem>>, %arg4: memref<8x64xf32, #tpu.memory_space<vmem>>, %arg5: memref<1x64xf32, #tpu.memory_space<vmem>>, %arg6: memref<64x2048xf32, #tpu.memory_space<vmem>>, %arg7: memref<1x2048xf32, #tpu.memory_space<vmem>>, %arg8: memref<1024x33xf32, #tpu.memory_space<vmem>>, %arg9: memref<32x32xf32, #tpu.memory_space<vmem>>, %arg10: memref<3x32xf32, #tpu.memory_space<vmem>>, %arg11: memref<208x32xf32, #tpu.memory_space<vmem>>) attributes {dimension_semantics = [#tpu.dimension_semantics<parallel>], iteration_bounds = array<i64: 2>, scalar_prefetch = 0 : i64, scratch_operands = 0 : i64, tpu.core_type = #tpu.core_type<tc>, window_params = [{transform_indices = @transform_0, window_bounds = array<i64: 208, 32>}, {transform_indices = @transform_1, window_bounds = array<i64: 208, 8>}, {pipeline_mode = #tpu.pipeline_mode<synchronous>, transform_indices = @transform_2, window_bounds = array<i64: 32, 64>}, {pipeline_mode = #tpu.pipeline_mode<synchronous>, transform_indices = @transform_3, window_bounds = array<i64: 8, 64>}, {pipeline_mode = #tpu.pipeline_mode<synchronous>, transform_indices = @transform_4, window_bounds = array<i64: 1, 64>}, {pipeline_mode = #tpu.pipeline_mode<synchronous>, transform_indices = @transform_5, window_bounds = array<i64: 64, 2048>}, {pipeline_mode = #tpu.pipeline_mode<synchronous>, transform_indices = @transform_6, window_bounds = array<i64: 1, 2048>}, {pipeline_mode = #tpu.pipeline_mode<synchronous>, transform_indices = @transform_7, window_bounds = array<i64: 1024, 33>}, {pipeline_mode = #tpu.pipeline_mode<synchronous>, transform_indices = @transform_8, window_bounds = array<i64: 32, 32>}, {pipeline_mode = #tpu.pipeline_mode<synchronous>, transform_indices = @transform_9, window_bounds = array<i64: 3, 32>}, {transform_indices = @transform_10, window_bounds = array<i64: 208, 32>}]} {
    %c0 = arith.constant 0 : index
    %c0_0 = arith.constant 0 : index
    %0 = vector.load %arg3[%c0, %c0_0] : memref<32x64xf32, #tpu.memory_space<vmem>>, vector<32x64xf32>
    %c0_1 = arith.constant 0 : index
    %c0_2 = arith.constant 0 : index
    %1 = vector.load %arg1[%c0_1, %c0_2] : memref<208x32xf32, #tpu.memory_space<vmem>>, vector<208x32xf32>
    %c0_3 = arith.constant 0 : index
    %c0_4 = arith.constant 0 : index
    %2 = vector.load %arg2[%c0_3, %c0_4] : memref<208x8xf32, #tpu.memory_space<vmem>>, vector<208x8xf32>
    %cst = arith.constant dense<0.000000e+00> : vector<208x64xf32>
    %3 = tpu.matmul %1, %0, %cst {dimension_numbers = #tpu.dot_dimension_numbers<[1], [0], [0], [1], [0, 0, 1, 1], [], []>} : vector<208x32xf32>, vector<32x64xf32>, vector<208x64xf32> -> vector<208x64xf32>
    %c0_5 = arith.constant 0 : index
    %c0_6 = arith.constant 0 : index
    %4 = vector.load %arg4[%c0_5, %c0_6] : memref<8x64xf32, #tpu.memory_space<vmem>>, vector<8x64xf32>
    %cst_7 = arith.constant dense<0.000000e+00> : vector<208x64xf32>
    %5 = tpu.matmul %2, %4, %cst_7 {dimension_numbers = #tpu.dot_dimension_numbers<[1], [0], [0], [1], [0, 0, 1, 1], [], []>} : vector<208x8xf32>, vector<8x64xf32>, vector<208x64xf32> -> vector<208x64xf32>
    %6 = arith.addf %3, %5 : vector<208x64xf32>
    %c0_8 = arith.constant 0 : index
    %c0_9 = arith.constant 0 : index
    %7 = vector.load %arg5[%c0_8, %c0_9] : memref<1x64xf32, #tpu.memory_space<vmem>>, vector<1x64xf32>
    %8 = vector.broadcast %7 : vector<1x64xf32> to vector<208x64xf32>
    %9 = arith.addf %6, %8 : vector<208x64xf32>
    %cst_10 = arith.constant 0.000000e+00 : f32
    %10 = vector.broadcast %cst_10 : f32 to vector<208x64xf32>
    %11 = arith.maximumf %9, %10 : vector<208x64xf32>
    %c0_11 = arith.constant 0 : index
    %c0_12 = arith.constant 0 : index
    %12 = vector.load %arg6[%c0_11, %c0_12] : memref<64x2048xf32, #tpu.memory_space<vmem>>, vector<64x2048xf32>
    %cst_13 = arith.constant dense<0.000000e+00> : vector<208x2048xf32>
    %13 = tpu.matmul %11, %12, %cst_13 {dimension_numbers = #tpu.dot_dimension_numbers<[1], [0], [0], [1], [0, 0, 1, 1], [], []>} : vector<208x64xf32>, vector<64x2048xf32>, vector<208x2048xf32> -> vector<208x2048xf32>
    %c0_14 = arith.constant 0 : index
    %c0_15 = arith.constant 0 : index
    %14 = vector.load %arg7[%c0_14, %c0_15] : memref<1x2048xf32, #tpu.memory_space<vmem>>, vector<1x2048xf32>
    %15 = vector.broadcast %14 : vector<1x2048xf32> to vector<208x2048xf32>
    %16 = arith.addf %13, %15 : vector<208x2048xf32>
    %17 = vector.extract_strided_slice %16 {offsets = [0, 0], sizes = [208, 1024], strides = [1, 1]} : vector<208x2048xf32> to vector<208x1024xf32>
    %18 = vector.extract_strided_slice %16 {offsets = [0, 1024], sizes = [208, 1024], strides = [1, 1]} : vector<208x2048xf32> to vector<208x1024xf32>
    %19 = arith.mulf %17, %18 : vector<208x1024xf32>
    %c0_16 = arith.constant 0 : index
    %c0_17 = arith.constant 0 : index
    %20 = vector.load %arg8[%c0_16, %c0_17] : memref<1024x33xf32, #tpu.memory_space<vmem>>, vector<1024x33xf32>
    %cst_18 = arith.constant dense<0.000000e+00> : vector<208x33xf32>
    %21 = tpu.matmul %19, %20, %cst_18 {dimension_numbers = #tpu.dot_dimension_numbers<[1], [0], [0], [1], [0, 0, 1, 1], [], []>} : vector<208x1024xf32>, vector<1024x33xf32>, vector<208x33xf32> -> vector<208x33xf32>
    %22 = vector.extract_strided_slice %21 {offsets = [0, 0], sizes = [208, 32], strides = [1, 1]} : vector<208x33xf32> to vector<208x32xf32>
    %23 = vector.extract_strided_slice %21 {offsets = [0, 32], sizes = [208, 1], strides = [1, 1]} : vector<208x33xf32> to vector<208x1xf32>
    %24 = vector.broadcast %23 : vector<208x1xf32> to vector<208x32xf32>
    %25 = arith.subf %22, %24 : vector<208x32xf32>
    %26 = arith.mulf %25, %25 : vector<208x32xf32>
    %cst_19 = arith.constant dense<0.000000e+00> : vector<208xf32>
    %27 = vector.multi_reduction <add>, %26, %cst_19 [1] : vector<208x32xf32> to vector<208xf32>
    %28 = vector.shape_cast %27 : vector<208xf32> to vector<208x1xf32>
    %cst_20 = arith.constant 3.200000e+01 : f32
    %29 = vector.broadcast %cst_20 : f32 to vector<208x1xf32>
    %30 = arith.divf %28, %29 : vector<208x1xf32>
    %cst_21 = arith.constant 9.99999974E-6 : f32
    %31 = vector.broadcast %cst_21 : f32 to vector<208x1xf32>
    %32 = arith.addf %30, %31 : vector<208x1xf32>
    %33 = math.rsqrt %32 : vector<208x1xf32>
    %34 = vector.broadcast %33 : vector<208x1xf32> to vector<208x32xf32>
    %35 = arith.mulf %25, %34 : vector<208x32xf32>
    %c0_22 = arith.constant 0 : index
    %c0_23 = arith.constant 0 : index
    %36 = vector.load %arg10[%c0_22, %c0_23] : memref<3x32xf32, #tpu.memory_space<vmem>>, vector<1x32xf32>
    %37 = vector.broadcast %36 : vector<1x32xf32> to vector<208x32xf32>
    %38 = arith.mulf %35, %37 : vector<208x32xf32>
    %c1 = arith.constant 1 : index
    %c0_24 = arith.constant 0 : index
    %39 = vector.load %arg10[%c1, %c0_24] : memref<3x32xf32, #tpu.memory_space<vmem>>, vector<1x32xf32>
    %40 = vector.broadcast %39 : vector<1x32xf32> to vector<208x32xf32>
    %41 = arith.addf %38, %40 : vector<208x32xf32>
    %cst_25 = arith.constant 0.000000e+00 : f32
    %42 = vector.broadcast %cst_25 : f32 to vector<208x32xf32>
    %43 = arith.maximumf %41, %42 : vector<208x32xf32>
    %c0_26 = arith.constant 0 : index
    %c0_27 = arith.constant 0 : index
    %44 = vector.load %arg9[%c0_26, %c0_27] : memref<32x32xf32, #tpu.memory_space<vmem>>, vector<32x32xf32>
    %cst_28 = arith.constant dense<0.000000e+00> : vector<208x32xf32>
    %45 = tpu.matmul %43, %44, %cst_28 {dimension_numbers = #tpu.dot_dimension_numbers<[1], [0], [0], [1], [0, 0, 1, 1], [], []>} : vector<208x32xf32>, vector<32x32xf32>, vector<208x32xf32> -> vector<208x32xf32>
    %c2 = arith.constant 2 : index
    %c0_29 = arith.constant 0 : index
    %46 = vector.load %arg10[%c2, %c0_29] : memref<3x32xf32, #tpu.memory_space<vmem>>, vector<1x32xf32>
    %47 = vector.broadcast %46 : vector<1x32xf32> to vector<208x32xf32>
    %48 = arith.addf %45, %47 : vector<208x32xf32>
    %c0_30 = arith.constant 0 : index
    %c0_31 = arith.constant 0 : index
    %49 = vector.load %arg11[%c0_30, %c0_31] : memref<208x32xf32, #tpu.memory_space<vmem>>, vector<208x32xf32>
    tpu.vector_store %arg11[%c0_30, %c0_31], %48 {strides = array<i32>} : memref<208x32xf32, #tpu.memory_space<vmem>>, vector<208x32xf32>,
    return
  }
  func.func @transform_0(%arg0: i32) -> (i32, i32) {
    %c0_i32 = arith.constant 0 : i32
    %c0_i32_0 = arith.constant 0 : i32
    return %arg0, %c0_i32 : i32, i32
  }
  func.func @transform_1(%arg0: i32) -> (i32, i32) {
    %c0_i32 = arith.constant 0 : i32
    %c0_i32_0 = arith.constant 0 : i32
    return %arg0, %c0_i32 : i32, i32
  }
  func.func @transform_2(%arg0: i32) -> (i32, i32) {
    %c0_i32 = arith.constant 0 : i32
    %c0_i32_0 = arith.constant 0 : i32
    %c0_i32_1 = arith.constant 0 : i32
    return %c0_i32, %c0_i32_0 : i32, i32
  }
  func.func @transform_3(%arg0: i32) -> (i32, i32) {
    %c0_i32 = arith.constant 0 : i32
    %c0_i32_0 = arith.constant 0 : i32
    %c0_i32_1 = arith.constant 0 : i32
    return %c0_i32, %c0_i32_0 : i32, i32
  }
  func.func @transform_4(%arg0: i32) -> (i32, i32) {
    %c0_i32 = arith.constant 0 : i32
    %c0_i32_0 = arith.constant 0 : i32
    %c0_i32_1 = arith.constant 0 : i32
    return %c0_i32, %c0_i32_0 : i32, i32
  }
  func.func @transform_5(%arg0: i32) -> (i32, i32) {
    %c0_i32 = arith.constant 0 : i32
    %c0_i32_0 = arith.constant 0 : i32
    %c0_i32_1 = arith.constant 0 : i32
    return %c0_i32, %c0_i32_0 : i32, i32
  }
  func.func @transform_6(%arg0: i32) -> (i32, i32) {
    %c0_i32 = arith.constant 0 : i32
    %c0_i32_0 = arith.constant 0 : i32
    %c0_i32_1 = arith.constant 0 : i32
    return %c0_i32, %c0_i32_0 : i32, i32
  }
  func.func @transform_7(%arg0: i32) -> (i32, i32) {
    %c0_i32 = arith.constant 0 : i32
    %c0_i32_0 = arith.constant 0 : i32
    %c0_i32_1 = arith.constant 0 : i32
    return %c0_i32, %c0_i32_0 : i32, i32
  }
  func.func @transform_8(%arg0: i32) -> (i32, i32) {
    %c0_i32 = arith.constant 0 : i32
    %c0_i32_0 = arith.constant 0 : i32
    %c0_i32_1 = arith.constant 0 : i32
    return %c0_i32, %c0_i32_0 : i32, i32
  }
  func.func @transform_9(%arg0: i32) -> (i32, i32) {
    %c0_i32 = arith.constant 0 : i32
    %c0_i32_0 = arith.constant 0 : i32
    %c0_i32_1 = arith.constant 0 : i32
    return %c0_i32, %c0_i32_0 : i32, i32
  }
  func.func @transform_10(%arg0: i32) -> (i32, i32) {
    %c0_i32 = arith.constant 0 : i32
    %c0_i32_0 = arith.constant 0 : i32
    return %arg0, %c0_i32 : i32, i32
  }
}

</mosaic_0001>

<llo_original>
// kernel: tpu_custom_call.1
$region0: #{tpu_custom_call.1}
  #allocation0 [shape = 'u32[]', space=smem, size = 0x4, offset = 0x4, fixed_abs, tag = 'smem constant byte address 0x4 - core index']
  #allocation1 [shape = 'u32[144,128]{1,0:T(1,128)}', space=vmem, size = 0x12000, scoped, tag = 'internal scratch']
  %s0 = inlined_call_operand.vmem [shape: f32[416,32], index: 0, kind: input, shape index: {}]
  %s1 = inlined_call_operand.vmem [shape: f32[416,8], index: 1, kind: input, shape index: {}]
  %s2 = inlined_call_operand.vmem [shape: f32[32,64], index: 2, kind: input, shape index: {}]
  %s3 = inlined_call_operand.vmem [shape: f32[8,64], index: 3, kind: input, shape index: {}]
  %s4 = inlined_call_operand.vmem [shape: f32[1,64], index: 4, kind: input, shape index: {}]
  %s5 = inlined_call_operand.vmem [shape: f32[64,2048], index: 5, kind: input, shape index: {}]
  %s6 = inlined_call_operand.vmem [shape: f32[1,2048], index: 6, kind: input, shape index: {}]
  %s7 = inlined_call_operand.vmem [shape: f32[1024,33], index: 7, kind: input, shape index: {}]
  %s8 = inlined_call_operand.vmem [shape: f32[32,32], index: 8, kind: input, shape index: {}]
  %s9 = inlined_call_operand.vmem [shape: f32[3,32], index: 9, kind: input, shape index: {}]
  %s10 = inlined_call_operand.vmem [shape: f32[416,32], index: 10, kind: output, shape index: {}]
  %s11 = sld [smem:[#allocation0]]
  $region73: #{tpu_custom_call.1} parent=0
    _
  %s13 = ssub.s32 1, %s11
  %s14 = scalar_select 0, %s13, %s11
  loop: start=0, step=1, limit=4
  $region2: #{tpu_custom_call.1} parent=0 // loop_pre_header
    _
  $region3: #{tpu_custom_call.1} parent=0 // loop_header
    %s16 = sphi 0, %s20
    %p17 = scmp.ge.s32.totalorder %s16, 4
    %s26 = sphi 0, %s28
    %s29 = sphi 0, %s26
    %s30 = sphi 0, %s29
    %s46 = sphi 0, %s30
    %s52 = sphi 0, %s54
    %s55 = sphi 0, %s52
    %s56 = sphi 0, %s55
    %s72 = sphi 0, %s56
    %s76 = sphi 0, %s76
    %s78 = sphi 0, %s76
    %s79 = sphi 0, %s78
    %s93 = sphi 0, %s79
    %s97 = sphi 0, %s97
    %s99 = sphi 0, %s97
    %s100 = sphi 0, %s99
    %s114 = sphi 0, %s100
    %s118 = sphi 0, %s118
    %s120 = sphi 0, %s118
    %s121 = sphi 0, %s120
    %s135 = sphi 0, %s121
    %s139 = sphi 0, %s139
    %s141 = sphi 0, %s139
    %s142 = sphi 0, %s141
    %s156 = sphi 0, %s142
    %s160 = sphi 0, %s160
    %s162 = sphi 0, %s160
    %s163 = sphi 0, %s162
    %s177 = sphi 0, %s163
    %s181 = sphi 0, %s181
    %s183 = sphi 0, %s181
    %s184 = sphi 0, %s183
    %s198 = sphi 0, %s184
    %s202 = sphi 0, %s202
    %s204 = sphi 0, %s202
    %s205 = sphi 0, %s204
    %s219 = sphi 0, %s205
    %s223 = sphi 0, %s223
    %s225 = sphi 0, %s223
    %s226 = sphi 0, %s225
    %s240 = sphi 0, %s226
    %s246 = sphi 0, %s248
    %s249 = sphi 0, %s246
    %s250 = sphi 0, %s249
    %s266 = sphi 0, %s250
  $region4: #{tpu_custom_call.1} parent=0 // loop_header_branch
    %19 = sbr.rel (%p17) target = $region8
  $region5: #{tpu_custom_call.1} parent=0 // loop_body
    %s21 = ssub.s32 %s16, 1
    %s22 = ssub.s32 %s16, 2
    %s23 = sadd.s32 %s16, 1
    %s24 = ssub.s32 %s16, %s23
    %p25 = scmp.eq.s32.totalorder %s24, 0
    %s27 = sadd.s32 %s26, 1
    %s28 = scalar_select %p25, %s26, %s27
    %p31 = pneg %p25
    %p32 = scmp.eq.s32.totalorder %s16, 1
    %p33 = por %p31, %p32
    %p34 = scmp.ne.s32.totalorder %s26, %s29
    %p35 = scmp.eq.s32.totalorder %s16, 0
    %p36 = por %p34, %p35
    %p37 = scmp.ne.s32.totalorder %s26, %s29
    %p38 = scmp.eq.s32.totalorder %s21, 1
    %p39 = por %p37, %p38
    %p40 = scmp.ne.s32.totalorder %s29, %s30
    %p41 = scmp.eq.s32.totalorder %s21, 0
    %p42 = por %p40, %p41
    %p43 = scmp.ne.s32.totalorder %s29, %s30
    %p44 = scmp.eq.s32.totalorder %s22, 1
    %p45 = por %p43, %p44
    %p47 = scmp.ne.s32.totalorder %s30, %s46
    %p48 = scmp.eq.s32.totalorder %s22, 0
    %p49 = por %p47, %p48
    %s50 = ssub.s32 %s16, %s23
    %p51 = scmp.eq.s32.totalorder %s50, 0
    %s53 = sadd.s32 %s52, 1
    %s54 = scalar_select %p51, %s52, %s53
    %p57 = pneg %p51
    %p58 = scmp.eq.s32.totalorder %s16, 1
    %p59 = por %p57, %p58
    %p60 = scmp.ne.s32.totalorder %s52, %s55
    %p61 = scmp.eq.s32.totalorder %s16, 0
    %p62 = por %p60, %p61
    %p63 = scmp.ne.s32.totalorder %s52, %s55
    %p64 = scmp.eq.s32.totalorder %s21, 1
    %p65 = por %p63, %p64
    %p66 = scmp.ne.s32.totalorder %s55, %s56
    %p67 = scmp.eq.s32.totalorder %s21, 0
    %p68 = por %p66, %p67
    %p69 = scmp.ne.s32.totalorder %s55, %s56
    %p70 = scmp.eq.s32.totalorder %s22, 1
    %p71 = por %p69, %p70
    %p73 = scmp.ne.s32.totalorder %s56, %s72
    %p74 = scmp.eq.s32.totalorder %s22, 0
    %p75 = por %p73, %p74
    %s77 = sadd.s32 %s76, 1
    %p80 = scmp.eq.s32.totalorder %s16, 1
    %p81 = scmp.ne.s32.totalorder %s76, %s78
    %p82 = scmp.eq.s32.totalorder %s16, 0
    %p83 = por %p81, %p82
    %p84 = scmp.ne.s32.totalorder %s76, %s78
    %p85 = scmp.eq.s32.totalorder %s21, 1
    %p86 = por %p84, %p85
    %p87 = scmp.ne.s32.totalorder %s78, %s79
    %p88 = scmp.eq.s32.totalorder %s21, 0
    %p89 = por %p87, %p88
    %p90 = scmp.ne.s32.totalorder %s78, %s79
    %p91 = scmp.eq.s32.totalorder %s22, 1
    %p92 = por %p90, %p91
    %p94 = scmp.ne.s32.totalorder %s79, %s93
    %p95 = scmp.eq.s32.totalorder %s22, 0
    %p96 = por %p94, %p95
    %s98 = sadd.s32 %s97, 1
    %p101 = scmp.eq.s32.totalorder %s16, 1
    %p102 = scmp.ne.s32.totalorder %s97, %s99
    %p103 = scmp.eq.s32.totalorder %s16, 0
    %p104 = por %p102, %p103
    %p105 = scmp.ne.s32.totalorder %s97, %s99
    %p106 = scmp.eq.s32.totalorder %s21, 1
    %p107 = por %p105, %p106
    %p108 = scmp.ne.s32.totalorder %s99, %s100
    %p109 = scmp.eq.s32.totalorder %s21, 0
    %p110 = por %p108, %p109
    %p111 = scmp.ne.s32.totalorder %s99, %s100
    %p112 = scmp.eq.s32.totalorder %s22, 1
    %p113 = por %p111, %p112
    %p115 = scmp.ne.s32.totalorder %s100, %s114
    %p116 = scmp.eq.s32.totalorder %s22, 0
    %p117 = por %p115, %p116
    %s119 = sadd.s32 %s118, 1
    %p122 = scmp.eq.s32.totalorder %s16, 1
    %p123 = scmp.ne.s32.totalorder %s118, %s120
    %p124 = scmp.eq.s32.totalorder %s16, 0
    %p125 = por %p123, %p124
    %p126 = scmp.ne.s32.totalorder %s118, %s120
    %p127 = scmp.eq.s32.totalorder %s21, 1
    %p128 = por %p126, %p127
    %p129 = scmp.ne.s32.totalorder %s120, %s121
    %p130 = scmp.eq.s32.totalorder %s21, 0
    %p131 = por %p129, %p130
    %p132 = scmp.ne.s32.totalorder %s120, %s121
    %p133 = scmp.eq.s32.totalorder %s22, 1
    %p134 = por %p132, %p133
    %p136 = scmp.ne.s32.totalorder %s121, %s135
    %p137 = scmp.eq.s32.totalorder %s22, 0
    %p138 = por %p136, %p137
    %s140 = sadd.s32 %s139, 1
    %p143 = scmp.eq.s32.totalorder %s16, 1
    %p144 = scmp.ne.s32.totalorder %s139, %s141
    %p145 = scmp.eq.s32.totalorder %s16, 0
    %p146 = por %p144, %p145
    %p147 = scmp.ne.s32.totalorder %s139, %s141
    %p148 = scmp.eq.s32.totalorder %s21, 1
    %p149 = por %p147, %p148
    %p150 = scmp.ne.s32.totalorder %s141, %s142
    %p151 = scmp.eq.s32.totalorder %s21, 0
    %p152 = por %p150, %p151
    %p153 = scmp.ne.s32.totalorder %s141, %s142
    %p154 = scmp.eq.s32.totalorder %s22, 1
    %p155 = por %p153, %p154
    %p157 = scmp.ne.s32.totalorder %s142, %s156
    %p158 = scmp.eq.s32.totalorder %s22, 0
    %p159 = por %p157, %p158
    %s161 = sadd.s32 %s160, 1
    %p164 = scmp.eq.s32.totalorder %s16, 1
    %p165 = scmp.ne.s32.totalorder %s160, %s162
    %p166 = scmp.eq.s32.totalorder %s16, 0
    %p167 = por %p165, %p166
    %p168 = scmp.ne.s32.totalorder %s160, %s162
    %p169 = scmp.eq.s32.totalorder %s21, 1
    %p170 = por %p168, %p169
    %p171 = scmp.ne.s32.totalorder %s162, %s163
    %p172 = scmp.eq.s32.totalorder %s21, 0
    %p173 = por %p171, %p172
    %p174 = scmp.ne.s32.totalorder %s162, %s163
    %p175 = scmp.eq.s32.totalorder %s22, 1
    %p176 = por %p174, %p175
    %p178 = scmp.ne.s32.totalorder %s163, %s177
    %p179 = scmp.eq.s32.totalorder %s22, 0
    %p180 = por %p178, %p179
    %s182 = sadd.s32 %s181, 1
    %p185 = scmp.eq.s32.totalorder %s16, 1
    %p186 = scmp.ne.s32.totalorder %s181, %s183
    %p187 = scmp.eq.s32.totalorder %s16, 0
    %p188 = por %p186, %p187
    %p189 = scmp.ne.s32.totalorder %s181, %s183
    %p190 = scmp.eq.s32.totalorder %s21, 1
    %p191 = por %p189, %p190
    %p192 = scmp.ne.s32.totalorder %s183, %s184
    %p193 = scmp.eq.s32.totalorder %s21, 0
    %p194 = por %p192, %p193
    %p195 = scmp.ne.s32.totalorder %s183, %s184
    %p196 = scmp.eq.s32.totalorder %s22, 1
    %p197 = por %p195, %p196
    %p199 = scmp.ne.s32.totalorder %s184, %s198
    %p200 = scmp.eq.s32.totalorder %s22, 0
    %p201 = por %p199, %p200
    %s203 = sadd.s32 %s202, 1
    %p206 = scmp.eq.s32.totalorder %s16, 1
    %p207 = scmp.ne.s32.totalorder %s202, %s204
    %p208 = scmp.eq.s32.totalorder %s16, 0
    %p209 = por %p207, %p208
    %p210 = scmp.ne.s32.totalorder %s202, %s204
    %p211 = scmp.eq.s32.totalorder %s21, 1
    %p212 = por %p210, %p211
    %p213 = scmp.ne.s32.totalorder %s204, %s205
    %p214 = scmp.eq.s32.totalorder %s21, 0
    %p215 = por %p213, %p214
    %p216 = scmp.ne.s32.totalorder %s204, %s205
    %p217 = scmp.eq.s32.totalorder %s22, 1
    %p218 = por %p216, %p217
    %p220 = scmp.ne.s32.totalorder %s205, %s219
    %p221 = scmp.eq.s32.totalorder %s22, 0
    %p222 = por %p220, %p221
    %s224 = sadd.s32 %s223, 1
    %p227 = scmp.eq.s32.totalorder %s16, 1
    %p228 = scmp.ne.s32.totalorder %s223, %s225
    %p229 = scmp.eq.s32.totalorder %s16, 0
    %p230 = por %p228, %p229
    %p231 = scmp.ne.s32.totalorder %s223, %s225
    %p232 = scmp.eq.s32.totalorder %s21, 1
    %p233 = por %p231, %p232
    %p234 = scmp.ne.s32.totalorder %s225, %s226
    %p235 = scmp.eq.s32.totalorder %s21, 0
    %p236 = por %p234, %p235
    %p237 = scmp.ne.s32.totalorder %s225, %s226
    %p238 = scmp.eq.s32.totalorder %s22, 1
    %p239 = por %p237, %p238
    %p241 = scmp.ne.s32.totalorder %s226, %s240
    %p242 = scmp.eq.s32.totalorder %s22, 0
    %p243 = por %p241, %p242
    %s244 = ssub.s32 %s16, %s23
    %p245 = scmp.eq.s32.totalorder %s244, 0
    %s247 = sadd.s32 %s246, 1
    %s248 = scalar_select %p245, %s246, %s247
    %p251 = pneg %p245
    %p252 = scmp.eq.s32.totalorder %s16, 1
    %p253 = por %p251, %p252
    %p254 = scmp.ne.s32.totalorder %s246, %s249
    %p255 = scmp.eq.s32.totalorder %s16, 0
    %p256 = por %p254, %p255
    %p257 = scmp.ne.s32.totalorder %s246, %s249
    %p258 = scmp.eq.s32.totalorder %s21, 1
    %p259 = por %p257, %p258
    %p260 = scmp.ne.s32.totalorder %s249, %s250
    %p261 = scmp.eq.s32.totalorder %s21, 0
    %p262 = por %p260, %p261
    %p263 = scmp.ne.s32.totalorder %s249, %s250
    %p264 = scmp.eq.s32.totalorder %s22, 1
    %p265 = por %p263, %p264
    %p267 = scmp.ne.s32.totalorder %s250, %s266
    %p268 = scmp.eq.s32.totalorder %s22, 0
    %p269 = por %p267, %p268
    %p270 = scmp.le.s32.totalorder 1, %s16
    %p271 = scmp.lt.s32.totalorder %s16, 3
    %p272 = pnand %p270, %p271
    %p273 = pneg %p272
    // Predicated region
    $region9: #{tpu_custom_call.1} parent=5 // pred_check
      _
    $region10: #{tpu_custom_call.1} parent=5 // pred_check_branch
      %275 = sbr.rel (%p272) target = $region12
    $region11: #{tpu_custom_call.1} parent=5 // pred_region
      %s276 = ssub.s32 %s16, 1
      // Predicated region
      $region13: #{tpu_custom_call.1} parent=11 // pred_check
        %p277 = pneg %p89
      $region14: #{tpu_custom_call.1} parent=11 // pred_check_branch
        %279 = sbr.rel (%p277) target = $region16
      $region15: #{tpu_custom_call.1} parent=11 // pred_region
        _
      $region16: #{tpu_custom_call.1} parent=11 // pred_fallthru
        _
      // Predicated region
      $region17: #{tpu_custom_call.1} parent=11 // pred_check
        %p280 = pneg %p110
      $region18: #{tpu_custom_call.1} parent=11 // pred_check_branch
        %282 = sbr.rel (%p280) target = $region20
      $region19: #{tpu_custom_call.1} parent=11 // pred_region
        _
      $region20: #{tpu_custom_call.1} parent=11 // pred_fallthru
        _
      // Predicated region
      $region21: #{tpu_custom_call.1} parent=11 // pred_check
        %p283 = pneg %p131
      $region22: #{tpu_custom_call.1} parent=11 // pred_check_branch
        %285 = sbr.rel (%p283) target = $region24
      $region23: #{tpu_custom_call.1} parent=11 // pred_region
        _
      $region24: #{tpu_custom_call.1} parent=11 // pred_fallthru
        _
      // Predicated region
      $region25: #{tpu_custom_call.1} parent=11 // pred_check
        %p286 = pneg %p152
      $region26: #{tpu_custom_call.1} parent=11 // pred_check_branch
        %288 = sbr.rel (%p286) target = $region28
      $region27: #{tpu_custom_call.1} parent=11 // pred_region
        _
      $region28: #{tpu_custom_call.1} parent=11 // pred_fallthru
        _
      // Predicated region
      $region29: #{tpu_custom_call.1} parent=11 // pred_check
        %p289 = pneg %p173
      $region30: #{tpu_custom_call.1} parent=11 // pred_check_branch
        %291 = sbr.rel (%p289) target = $region32
      $region31: #{tpu_custom_call.1} parent=11 // pred_region
        _
      $region32: #{tpu_custom_call.1} parent=11 // pred_fallthru
        _
      // Predicated region
      $region33: #{tpu_custom_call.1} parent=11 // pred_check
        %p292 = pneg %p194
      $region34: #{tpu_custom_call.1} parent=11 // pred_check_branch
        %294 = sbr.rel (%p292) target = $region36
      $region35: #{tpu_custom_call.1} parent=11 // pred_region
        _
      $region36: #{tpu_custom_call.1} parent=11 // pred_fallthru
        _
      // Predicated region
      $region37: #{tpu_custom_call.1} parent=11 // pred_check
        %p295 = pneg %p215
      $region38: #{tpu_custom_call.1} parent=11 // pred_check_branch
        %297 = sbr.rel (%p295) target = $region40
      $region39: #{tpu_custom_call.1} parent=11 // pred_region
        _
      $region40: #{tpu_custom_call.1} parent=11 // pred_fallthru
        _
      // Predicated region
      $region41: #{tpu_custom_call.1} parent=11 // pred_check
        %p298 = pneg %p236
      $region42: #{tpu_custom_call.1} parent=11 // pred_check_branch
        %300 = sbr.rel (%p298) target = $region44
      $region43: #{tpu_custom_call.1} parent=11 // pred_region
        _
      $region44: #{tpu_custom_call.1} parent=11 // pred_fallthru
        _
    $region12: #{tpu_custom_call.1} parent=5 // pred_fallthru
      _
    %p301 = scmp.lt.s32.totalorder %s16, 2
    // Predicated region
    $region45: #{tpu_custom_call.1} parent=5 // pred_check
      %p302 = pneg %p301
    $region46: #{tpu_custom_call.1} parent=5 // pred_check_branch
      %304 = sbr.rel (%p302) target = $region48
    $region47: #{tpu_custom_call.1} parent=5 // pred_region
      // Predicated region
      $region49: #{tpu_custom_call.1} parent=47 // pred_check
        %p305 = pneg %p36
      $region50: #{tpu_custom_call.1} parent=47 // pred_check_branch
        %307 = sbr.rel (%p305) target = $region52
      $region51: #{tpu_custom_call.1} parent=47 // pred_region
        %s308 = smul.u32 26, %s16
        %p309 = scmp.lt.s32.totalorder %s308, 51
        %s310 = scalar_select %p309, %s308, 51
        %s311 = smul.addr %s310, 8
        %s312 = scalar_lea.vmem %s0, %s311
        %s313 = smul.u32 26, %s16
      $region52: #{tpu_custom_call.1} parent=47 // pred_fallthru
        _
      // Predicated region
      $region53: #{tpu_custom_call.1} parent=47 // pred_check
        %p314 = pneg %p62
      $region54: #{tpu_custom_call.1} parent=47 // pred_check_branch
        %316 = sbr.rel (%p314) target = $region56
      $region55: #{tpu_custom_call.1} parent=47 // pred_region
        %s317 = smul.u32 26, %s16
        %p318 = scmp.lt.s32.totalorder %s317, 51
        %s319 = scalar_select %p318, %s317, 51
        %s320 = smul.addr %s319, 8
        %s321 = scalar_lea.vmem %s1, %s320
        %s322 = smul.u32 26, %s16
      $region56: #{tpu_custom_call.1} parent=47 // pred_fallthru
        _
    $region48: #{tpu_custom_call.1} parent=5 // pred_fallthru
      _
    %p323 = scmp.le.s32.totalorder 1, %s16
    %p324 = scmp.lt.s32.totalorder %s16, 3
    %p325 = pnand %p323, %p324
    %p326 = pneg %p325
    // Predicated region
    $region57: #{tpu_custom_call.1} parent=5 // pred_check
      _
    $region58: #{tpu_custom_call.1} parent=5 // pred_check_branch
      %328 = sbr.rel (%p325) target = $region60
    $region59: #{tpu_custom_call.1} parent=5 // pred_region
      %s329 = ssub.s32 %s16, 1
      %s330 = smul.u32 26, %s21
      %p331 = scmp.lt.s32.totalorder %s330, 51
      %s332 = scalar_select %p331, %s330, 51
      %s333 = smul.addr %s332, 8
      %s334 = scalar_lea.vmem %s0, %s333
      %p335 = pneg %p42
      %p336 = pneg %p39
      %s337 = smul.u32 26, %s21
      %p338 = scmp.lt.s32.totalorder %s337, 51
      %s339 = scalar_select %p338, %s337, 51
      %s340 = smul.addr %s339, 8
      %s341 = scalar_lea.vmem %s1, %s340
      %p342 = pneg %p68
      %p343 = pneg %p65
      %p344 = pneg %p89
      %p345 = pneg %p86
      %p346 = pneg %p110
      %p347 = pneg %p107
      %p348 = pneg %p131
      %p349 = pneg %p128
      %p350 = pneg %p152
      %p351 = pneg %p149
      %p352 = pneg %p173
      %p353 = pneg %p170
      %p354 = pneg %p194
      %p355 = pneg %p191
      %p356 = pneg %p215
      %p357 = pneg %p212
      %p358 = pneg %p236
      %p359 = pneg %p233
      %p360 = pneg %p262
      %p361 = pneg %p259
      %s362 = smul.u32 26, %s21
      %p363 = scmp.lt.s32.totalorder %s362, 51
      %s364 = scalar_select %p363, %s362, 51
      %s365 = smul.addr %s364, 8
      %s366 = scalar_lea.vmem %s10, %s365
      %s367 = smul.u32 26, %s21
      %p368 = scmp.lt.s32.totalorder %s367, 51
      %s369 = scalar_select %p368, %s367, 51
      %s370 = smul.addr %s369, 8
      %s371 = scalar_lea.vmem %s0, %s370
      %s372 = smul.u32 26, %s21
      %s373 = smul.u32 26, %s21
      %p374 = scmp.lt.s32.totalorder %s373, 51
      %s375 = scalar_select %p374, %s373, 51
      %s376 = smul.addr %s375, 8
      %s377 = scalar_lea.vmem %s1, %s376
      %s378 = smul.u32 26, %s21
      %s379 = smul.u32 26, %s21
      %p380 = scmp.lt.s32.totalorder %s379, 51
      %s381 = scalar_select %p380, %s379, 51
      %s382 = smul.addr %s381, 8
      %s383 = scalar_lea.vmem %s10, %s382
      %s384 = smul.u32 26, %s21
      %v385 = vld [vmem:[%s2] sm:$0xff]
      %v386 = vld [vmem:[%s2 + $0x8] sm:$0xff]
      %v387 = vld [vmem:[%s2 + $0x10] sm:$0xff]
      %v388 = vld [vmem:[%s2 + $0x18] sm:$0xff]
      %v389 = vld [vmem:[%s371] sm:$0xff]
      %v390 = vld [vmem:[%s371 + $0x8] sm:$0xff]
      %v391 = vld [vmem:[%s371 + $0x10] sm:$0xff]
      %v392 = vld [vmem:[%s371 + $0x18] sm:$0xff]
      %v393 = vld [vmem:[%s371 + $0x20] sm:$0xff]
      %v394 = vld [vmem:[%s371 + $0x28] sm:$0xff]
      %v395 = vld [vmem:[%s371 + $0x30] sm:$0xff]
      %v396 = vld [vmem:[%s371 + $0x38] sm:$0xff]
      %v397 = vld [vmem:[%s371 + $0x40] sm:$0xff]
      %v398 = vld [vmem:[%s371 + $0x48] sm:$0xff]
      %v399 = vld [vmem:[%s371 + $0x50] sm:$0xff]
      %v400 = vld [vmem:[%s371 + $0x58] sm:$0xff]
      %v401 = vld [vmem:[%s371 + $0x60] sm:$0xff]
      %v402 = vld [vmem:[%s371 + $0x68] sm:$0xff]
      %v403 = vld [vmem:[%s371 + $0x70] sm:$0xff]
      %v404 = vld [vmem:[%s371 + $0x78] sm:$0xff]
      %v405 = vld [vmem:[%s371 + $0x80] sm:$0xff]
      %v406 = vld [vmem:[%s371 + $0x88] sm:$0xff]
      %v407 = vld [vmem:[%s371 + $0x90] sm:$0xff]
      %v408 = vld [vmem:[%s371 + $0x98] sm:$0xff]
      %v409 = vld [vmem:[%s371 + $0xa0] sm:$0xff]
      %v410 = vld [vmem:[%s371 + $0xa8] sm:$0xff]
      %v411 = vld [vmem:[%s371 + $0xb0] sm:$0xff]
      %v412 = vld [vmem:[%s371 + $0xb8] sm:$0xff]
      %v413 = vld [vmem:[%s371 + $0xc0] sm:$0xff]
      %v414 = vld [vmem:[%s371 + $0xc8] sm:$0xff]
      %v415 = vld [vmem:[%s377] sm:$0xff]
      %v416 = vld [vmem:[%s377 + $0x8] sm:$0xff]
      %v417 = vld [vmem:[%s377 + $0x10] sm:$0xff]
      %v418 = vld [vmem:[%s377 + $0x18] sm:$0xff]
      %v419 = vld [vmem:[%s377 + $0x20] sm:$0xff]
      %v420 = vld [vmem:[%s377 + $0x28] sm:$0xff]
      %v421 = vld [vmem:[%s377 + $0x30] sm:$0xff]
      %v422 = vld [vmem:[%s377 + $0x38] sm:$0xff]
      %v423 = vld [vmem:[%s377 + $0x40] sm:$0xff]
      %v424 = vld [vmem:[%s377 + $0x48] sm:$0xff]
      %v425 = vld [vmem:[%s377 + $0x50] sm:$0xff]
      %v426 = vld [vmem:[%s377 + $0x58] sm:$0xff]
      %v427 = vld [vmem:[%s377 + $0x60] sm:$0xff]
      %v428 = vld [vmem:[%s377 + $0x68] sm:$0xff]
      %v429 = vld [vmem:[%s377 + $0x70] sm:$0xff]
      %v430 = vld [vmem:[%s377 + $0x78] sm:$0xff]
      %v431 = vld [vmem:[%s377 + $0x80] sm:$0xff]
      %v432 = vld [vmem:[%s377 + $0x88] sm:$0xff]
      %v433 = vld [vmem:[%s377 + $0x90] sm:$0xff]
      %v434 = vld [vmem:[%s377 + $0x98] sm:$0xff]
      %v435 = vld [vmem:[%s377 + $0xa0] sm:$0xff]
      %v436 = vld [vmem:[%s377 + $0xa8] sm:$0xff]
      %v437 = vld [vmem:[%s377 + $0xb0] sm:$0xff]
      %v438 = vld [vmem:[%s377 + $0xb8] sm:$0xff]
      %v439 = vld [vmem:[%s377 + $0xc0] sm:$0xff]
      %v440 = vld [vmem:[%s377 + $0xc8] sm:$0xff]
      %v441 = vld [vmem:[%s3] sm:$0xff]
      %vm442 = vcmask 64512
      %v444 = vsel %vm442, %v415, 0
      %v447 = vsel %vm442, %v416, 0
      %v450 = vsel %vm442, %v417, 0
      %v453 = vsel %vm442, %v418, 0
      %v456 = vsel %vm442, %v419, 0
      %v459 = vsel %vm442, %v420, 0
      %v462 = vsel %vm442, %v421, 0
      %v465 = vsel %vm442, %v422, 0
      %v468 = vsel %vm442, %v423, 0
      %v471 = vsel %vm442, %v424, 0
      %v474 = vsel %vm442, %v425, 0
      %v477 = vsel %vm442, %v426, 0
      %v480 = vsel %vm442, %v427, 0
      %v483 = vsel %vm442, %v428, 0
      %v486 = vsel %vm442, %v429, 0
      %v489 = vsel %vm442, %v430, 0
      %v492 = vsel %vm442, %v431, 0
      %v495 = vsel %vm442, %v432, 0
      %v498 = vsel %vm442, %v433, 0
      %v501 = vsel %vm442, %v434, 0
      %v504 = vsel %vm442, %v435, 0
      %v507 = vsel %vm442, %v436, 0
      %v510 = vsel %vm442, %v437, 0
      %v513 = vsel %vm442, %v438, 0
      %v516 = vsel %vm442, %v439, 0
      %v519 = vsel %vm442, %v440, 0
      %521 = vmatprep.subr.mxu0 0.0
      %522 = vmatpush1.msra.mxu0 0.0
      %523 = vmatprep.subr.mxu0 0.0
      %524 = vmatpush1.msra.mxu0 0.0
      %525 = vmatprep.subr.mxu0 0.0
      %526 = vmatpush1.msra.mxu0 0.0
      %527 = vmatprep.subr.mxu0 0.0
      %528 = vmatpush1.msra.mxu0 0.0
      %529 = vmatprep.subr.mxu0 0.0
      %530 = vmatpush1.msra.mxu0 0.0
      %531 = vmatprep.subr.mxu0 0.0
      %532 = vmatpush1.msra.mxu0 0.0
      %533 = vmatprep.subr.mxu0 0.0
      %534 = vmatpush1.msra.mxu0 0.0
      %535 = vmatprep.subr.mxu0 0.0
      %536 = vmatpush1.msra.mxu0 0.0
      %537 = vmatprep.subr.mxu0 0.0
      %538 = vmatpush1.msra.mxu0 0.0
      %539 = vmatprep.subr.mxu0 0.0
      %540 = vmatpush1.msra.mxu0 0.0
      %541 = vmatprep.subr.mxu0 0.0
      %542 = vmatpush1.msra.mxu0 0.0
      %543 = vmatprep.subr.mxu0 0.0
      %544 = vmatpush1.msra.mxu0 0.0
      %545 = vmatprep.subr.mxu0 0.0
      %546 = vmatpush1.msra.mxu0 0.0
      %547 = vmatprep.subr.mxu0 0.0
      %548 = vmatpush1.msra.mxu0 0.0
      %549 = vmatprep.subr.mxu0 0.0
      %550 = vmatpush1.msra.mxu0 0.0
      %551 = vmatprep.subr.mxu0 0.0
      %552 = vmatpush1.msra.mxu0 %v441
      %553 = vmatprep.subr.mxu0 0.0
      %554 = vmatpush2.msra.mxu0 0.0
      %555 = vmatprep.subr.mxu0 0.0
      %556 = vmatpush2.msra.mxu0 0.0
      %557 = vmatprep.subr.mxu0 0.0
      %558 = vmatpush2.msra.mxu0 0.0
      %559 = vmatprep.subr.mxu0 0.0
      %560 = vmatpush2.msra.mxu0 0.0
      %561 = vmatprep.subr.mxu0 0.0
      %562 = vmatpush2.msra.mxu0 0.0
      %563 = vmatprep.subr.mxu0 0.0
      %564 = vmatpush2.msra.mxu0 0.0
      %565 = vmatprep.subr.mxu0 0.0
      %566 = vmatpush2.msra.mxu0 0.0
      %567 = vmatprep.subr.mxu0 0.0
      %568 = vmatpush2.msra.mxu0 0.0
      %569 = vmatprep.subr.mxu0 0.0
      %570 = vmatpush2.msra.mxu0 0.0
      %571 = vmatprep.subr.mxu0 0.0
      %572 = vmatpush2.msra.mxu0 0.0
      %573 = vmatprep.subr.mxu0 0.0
      %574 = vmatpush2.msra.mxu0 0.0
      %575 = vmatprep.subr.mxu0 0.0
      %576 = vmatpush2.msra.mxu0 0.0
      %577 = vmatprep.subr.mxu0 0.0
      %578 = vmatpush2.msra.mxu0 0.0
      %579 = vmatprep.subr.mxu0 0.0
      %580 = vmatpush2.msra.mxu0 0.0
      %581 = vmatprep.subr.mxu0 0.0
      %582 = vmatpush2.msra.mxu0 0.0
      %583 = vmatprep.subr.mxu0 0.0
      %584 = vmatpush2.msra.mxu0 0.0
      %585 = vmatprep.mubr.f32.mxu0 0.0
      %586 = vmatmul.mubr.f32.gmra.mxu0 %v444
      %v587 = vpop.f32.mrf.mxu0
      %v588 = vadd.f32 0.0, %v587
      %v589 = vpop.f32.mrf.mxu0
      %590 = vmatprep.mubr.f32.mxu0 0.0
      %591 = vmatmul.mubr.f32.gmra.mxu0 %v447
      %v592 = vpop.f32.mrf.mxu0
      %v593 = vadd.f32 0.0, %v592
      %v594 = vpop.f32.mrf.mxu0
      %595 = vmatprep.mubr.f32.mxu0 0.0
      %596 = vmatmul.mubr.f32.gmra.mxu0 %v450
      %v597 = vpop.f32.mrf.mxu0
      %v598 = vadd.f32 0.0, %v597
      %v599 = vpop.f32.mrf.mxu0
      %600 = vmatprep.mubr.f32.mxu0 0.0
      %601 = vmatmul.mubr.f32.gmra.mxu0 %v453
      %v602 = vpop.f32.mrf.mxu0
      %v603 = vadd.f32 0.0, %v602
      %v604 = vpop.f32.mrf.mxu0
      %605 = vmatprep.mubr.f32.mxu0 0.0
      %606 = vmatmul.mubr.f32.gmra.mxu0 %v456
      %v607 = vpop.f32.mrf.mxu0
      %v608 = vadd.f32 0.0, %v607
      %v609 = vpop.f32.mrf.mxu0
      %610 = vmatprep.mubr.f32.mxu0 0.0
      %611 = vmatmul.mubr.f32.gmra.mxu0 %v459
      %v612 = vpop.f32.mrf.mxu0
      %v613 = vadd.f32 0.0, %v612
      %v614 = vpop.f32.mrf.mxu0
      %615 = vmatprep.mubr.f32.mxu0 0.0
      %616 = vmatmul.mubr.f32.gmra.mxu0 %v462
      %v617 = vpop.f32.mrf.mxu0
      %v618 = vadd.f32 0.0, %v617
      %v619 = vpop.f32.mrf.mxu0
      %620 = vmatprep.mubr.f32.mxu0 0.0
      %621 = vmatmul.mubr.f32.gmra.mxu0 %v465
      %v622 = vpop.f32.mrf.mxu0
      %v623 = vadd.f32 0.0, %v622
      %v624 = vpop.f32.mrf.mxu0
      %625 = vmatprep.mubr.f32.mxu0 0.0
      %626 = vmatmul.mubr.f32.gmra.mxu0 %v468
      %v627 = vpop.f32.mrf.mxu0
      %v628 = vadd.f32 0.0, %v627
      %v629 = vpop.f32.mrf.mxu0
      %630 = vmatprep.mubr.f32.mxu0 0.0
      %631 = vmatmul.mubr.f32.gmra.mxu0 %v471
      %v632 = vpop.f32.mrf.mxu0
      %v633 = vadd.f32 0.0, %v632
      %v634 = vpop.f32.mrf.mxu0
      %635 = vmatprep.mubr.f32.mxu0 0.0
      %636 = vmatmul.mubr.f32.gmra.mxu0 %v474
      %v637 = vpop.f32.mrf.mxu0
      %v638 = vadd.f32 0.0, %v637
      %v639 = vpop.f32.mrf.mxu0
      %640 = vmatprep.mubr.f32.mxu0 0.0
      %641 = vmatmul.mubr.f32.gmra.mxu0 %v477
      %v642 = vpop.f32.mrf.mxu0
      %v643 = vadd.f32 0.0, %v642
      %v644 = vpop.f32.mrf.mxu0
      %645 = vmatprep.mubr.f32.mxu0 0.0
      %646 = vmatmul.mubr.f32.gmra.mxu0 %v480
      %v647 = vpop.f32.mrf.mxu0
      %v648 = vadd.f32 0.0, %v647
      %v649 = vpop.f32.mrf.mxu0
      %650 = vmatprep.mubr.f32.mxu0 0.0
      %651 = vmatmul.mubr.f32.gmra.mxu0 %v483
      %v652 = vpop.f32.mrf.mxu0
      %v653 = vadd.f32 0.0, %v652
      %v654 = vpop.f32.mrf.mxu0
      %655 = vmatprep.mubr.f32.mxu0 0.0
      %656 = vmatmul.mubr.f32.gmra.mxu0 %v486
      %v657 = vpop.f32.mrf.mxu0
      %v658 = vadd.f32 0.0, %v657
      %v659 = vpop.f32.mrf.mxu0
      %660 = vmatprep.mubr.f32.mxu0 0.0
      %661 = vmatmul.mubr.f32.gmra.mxu0 %v489
      %v662 = vpop.f32.mrf.mxu0
      %v663 = vadd.f32 0.0, %v662
      %v664 = vpop.f32.mrf.mxu0
      %665 = vmatprep.mubr.f32.mxu0 0.0
      %666 = vmatmul.mubr.f32.gmra.mxu0 %v492
      %v667 = vpop.f32.mrf.mxu0
      %v668 = vadd.f32 0.0, %v667
      %v669 = vpop.f32.mrf.mxu0
      %670 = vmatprep.mubr.f32.mxu0 0.0
      %671 = vmatmul.mubr.f32.gmra.mxu0 %v495
      %v672 = vpop.f32.mrf.mxu0
      %v673 = vadd.f32 0.0, %v672
      %v674 = vpop.f32.mrf.mxu0
      %675 = vmatprep.mubr.f32.mxu0 0.0
      %676 = vmatmul.mubr.f32.gmra.mxu0 %v498
      %v677 = vpop.f32.mrf.mxu0
      %v678 = vadd.f32 0.0, %v677
      %v679 = vpop.f32.mrf.mxu0
      %680 = vmatprep.mubr.f32.mxu0 0.0
      %681 = vmatmul.mubr.f32.gmra.mxu0 %v501
      %v682 = vpop.f32.mrf.mxu0
      %v683 = vadd.f32 0.0, %v682
      %v684 = vpop.f32.mrf.mxu0
      %685 = vmatprep.mubr.f32.mxu0 0.0
      %686 = vmatmul.mubr.f32.gmra.mxu0 %v504
      %v687 = vpop.f32.mrf.mxu0
      %v688 = vadd.f32 0.0, %v687
      %v689 = vpop.f32.mrf.mxu0
      %690 = vmatprep.mubr.f32.mxu0 0.0
      %691 = vmatmul.mubr.f32.gmra.mxu0 %v507
      %v692 = vpop.f32.mrf.mxu0
      %v693 = vadd.f32 0.0, %v692
      %v694 = vpop.f32.mrf.mxu0
      %695 = vmatprep.mubr.f32.mxu0 0.0
      %696 = vmatmul.mubr.f32.gmra.mxu0 %v510
      %v697 = vpop.f32.mrf.mxu0
      %v698 = vadd.f32 0.0, %v697
      %v699 = vpop.f32.mrf.mxu0
      %700 = vmatprep.mubr.f32.mxu0 0.0
      %701 = vmatmul.mubr.f32.gmra.mxu0 %v513
      %v702 = vpop.f32.mrf.mxu0
      %v703 = vadd.f32 0.0, %v702
      %v704 = vpop.f32.mrf.mxu0
      %705 = vmatprep.mubr.f32.mxu0 0.0
      %706 = vmatmul.mubr.f32.gmra.mxu0 %v516
      %v707 = vpop.f32.mrf.mxu0
      %v708 = vadd.f32 0.0, %v707
      %v709 = vpop.f32.mrf.mxu0
      %710 = vmatprep.mubr.f32.mxu0 0.0
      %711 = vmatmul.mubr.f32.gmra.mxu0 %v519
      %v712 = vpop.f32.mrf.mxu0
      %v713 = vadd.f32 0.0, %v712
      %v714 = vpop.f32.mrf.mxu0
      %715 = vdwg.mxu0
      %vm716 = vcmask 261120
      %v718 = vsel %vm716, %v389, 0
      %v721 = vsel %vm716, %v390, 0
      %v724 = vsel %vm716, %v391, 0
      %v727 = vsel %vm716, %v392, 0
      %v730 = vsel %vm716, %v393, 0
      %v733 = vsel %vm716, %v394, 0
      %v736 = vsel %vm716, %v395, 0
      %v739 = vsel %vm716, %v396, 0
      %v742 = vsel %vm716, %v397, 0
      %v745 = vsel %vm716, %v398, 0
      %v748 = vsel %vm716, %v399, 0
      %v751 = vsel %vm716, %v400, 0
      %v754 = vsel %vm716, %v401, 0
      %v757 = vsel %vm716, %v402, 0
      %v760 = vsel %vm716, %v403, 0
      %v763 = vsel %vm716, %v404, 0
      %v766 = vsel %vm716, %v405, 0
      %v769 = vsel %vm716, %v406, 0
      %v772 = vsel %vm716, %v407, 0
      %v775 = vsel %vm716, %v408, 0
      %v778 = vsel %vm716, %v409, 0
      %v781 = vsel %vm716, %v410, 0
      %v784 = vsel %vm716, %v411, 0
      %v787 = vsel %vm716, %v412, 0
      %v790 = vsel %vm716, %v413, 0
      %v793 = vsel %vm716, %v414, 0
      %795 = vmatprep.subr.mxu0 0.0
      %796 = vmatpush1.msra.mxu0 0.0
      %797 = vmatprep.subr.mxu0 0.0
      %798 = vmatpush1.msra.mxu0 0.0
      %799 = vmatprep.subr.mxu0 0.0
      %800 = vmatpush1.msra.mxu0 0.0
      %801 = vmatprep.subr.mxu0 0.0
      %802 = vmatpush1.msra.mxu0 0.0
      %803 = vmatprep.subr.mxu0 0.0
      %804 = vmatpush1.msra.mxu0 0.0
      %805 = vmatprep.subr.mxu0 0.0
      %806 = vmatpush1.msra.mxu0 0.0
      %807 = vmatprep.subr.mxu0 0.0
      %808 = vmatpush1.msra.mxu0 0.0
      %809 = vmatprep.subr.mxu0 0.0
      %810 = vmatpush1.msra.mxu0 0.0
      %811 = vmatprep.subr.mxu0 0.0
      %812 = vmatpush1.msra.mxu0 0.0
      %813 = vmatprep.subr.mxu0 0.0
      %814 = vmatpush1.msra.mxu0 0.0
      %815 = vmatprep.subr.mxu0 0.0
      %816 = vmatpush1.msra.mxu0 0.0
      %817 = vmatprep.subr.mxu0 0.0
      %818 = vmatpush1.msra.mxu0 0.0
      %819 = vmatprep.subr.mxu0 0.0
      %820 = vmatpush1.msra.mxu0 %v388
      %821 = vmatprep.subr.mxu0 0.0
      %822 = vmatpush1.msra.mxu0 %v387
      %823 = vmatprep.subr.mxu0 0.0
      %824 = vmatpush1.msra.mxu0 %v386
      %825 = vmatprep.subr.mxu0 0.0
      %826 = vmatpush1.msra.mxu0 %v385
      %827 = vmatprep.subr.mxu0 0.0
      %828 = vmatpush2.msra.mxu0 0.0
      %829 = vmatprep.subr.mxu0 0.0
      %830 = vmatpush2.msra.mxu0 0.0
      %831 = vmatprep.subr.mxu0 0.0
      %832 = vmatpush2.msra.mxu0 0.0
      %833 = vmatprep.subr.mxu0 0.0
      %834 = vmatpush2.msra.mxu0 0.0
      %835 = vmatprep.subr.mxu0 0.0
      %836 = vmatpush2.msra.mxu0 0.0
      %837 = vmatprep.subr.mxu0 0.0
      %838 = vmatpush2.msra.mxu0 0.0
      %839 = vmatprep.subr.mxu0 0.0
      %840 = vmatpush2.msra.mxu0 0.0
      %841 = vmatprep.subr.mxu0 0.0
      %842 = vmatpush2.msra.mxu0 0.0
      %843 = vmatprep.subr.mxu0 0.0
      %844 = vmatpush2.msra.mxu0 0.0
      %845 = vmatprep.subr.mxu0 0.0
      %846 = vmatpush2.msra.mxu0 0.0
      %847 = vmatprep.subr.mxu0 0.0
      %848 = vmatpush2.msra.mxu0 0.0
      %849 = vmatprep.subr.mxu0 0.0
      %850 = vmatpush2.msra.mxu0 0.0
      %851 = vmatprep.subr.mxu0 0.0
      %852 = vmatpush2.msra.mxu0 0.0
      %853 = vmatprep.subr.mxu0 0.0
      %854 = vmatpush2.msra.mxu0 0.0
      %855 = vmatprep.subr.mxu0 0.0
      %856 = vmatpush2.msra.mxu0 0.0
      %857 = vmatprep.subr.mxu0 0.0
      %858 = vmatpush2.msra.mxu0 0.0
      %859 = vmatprep.mubr.f32.mxu0 0.0
      %860 = vmatmul.mubr.f32.gmra.mxu0 %v718
      %v861 = vpop.f32.mrf.mxu0
      %v862 = vadd.f32 %v588, %v861
      %v863 = vpop.f32.mrf.mxu0
      %864 = vmatprep.mubr.f32.mxu0 0.0
      %865 = vmatmul.mubr.f32.gmra.mxu0 %v721
      %v866 = vpop.f32.mrf.mxu0
      %v867 = vadd.f32 %v593, %v866
      %v868 = vpop.f32.mrf.mxu0
      %869 = vmatprep.mubr.f32.mxu0 0.0
      %870 = vmatmul.mubr.f32.gmra.mxu0 %v724
      %v871 = vpop.f32.mrf.mxu0
      %v872 = vadd.f32 %v598, %v871
      %v873 = vpop.f32.mrf.mxu0
      %874 = vmatprep.mubr.f32.mxu0 0.0
      %875 = vmatmul.mubr.f32.gmra.mxu0 %v727
      %v876 = vpop.f32.mrf.mxu0
      %v877 = vadd.f32 %v603, %v876
      %v878 = vpop.f32.mrf.mxu0
      %879 = vmatprep.mubr.f32.mxu0 0.0
      %880 = vmatmul.mubr.f32.gmra.mxu0 %v730
      %v881 = vpop.f32.mrf.mxu0
      %v882 = vadd.f32 %v608, %v881
      %v883 = vpop.f32.mrf.mxu0
      %884 = vmatprep.mubr.f32.mxu0 0.0
      %885 = vmatmul.mubr.f32.gmra.mxu0 %v733
      %v886 = vpop.f32.mrf.mxu0
      %v887 = vadd.f32 %v613, %v886
      %v888 = vpop.f32.mrf.mxu0
      %889 = vmatprep.mubr.f32.mxu0 0.0
      %890 = vmatmul.mubr.f32.gmra.mxu0 %v736
      %v891 = vpop.f32.mrf.mxu0
      %v892 = vadd.f32 %v618, %v891
      %v893 = vpop.f32.mrf.mxu0
      %894 = vmatprep.mubr.f32.mxu0 0.0
      %895 = vmatmul.mubr.f32.gmra.mxu0 %v739
      %v896 = vpop.f32.mrf.mxu0
      %v897 = vadd.f32 %v623, %v896
      %v898 = vpop.f32.mrf.mxu0
      %899 = vmatprep.mubr.f32.mxu0 0.0
      %900 = vmatmul.mubr.f32.gmra.mxu0 %v742
      %v901 = vpop.f32.mrf.mxu0
      %v902 = vadd.f32 %v628, %v901
      %v903 = vpop.f32.mrf.mxu0
      %904 = vmatprep.mubr.f32.mxu0 0.0
      %905 = vmatmul.mubr.f32.gmra.mxu0 %v745
      %v906 = vpop.f32.mrf.mxu0
      %v907 = vadd.f32 %v633, %v906
      %v908 = vpop.f32.mrf.mxu0
      %909 = vmatprep.mubr.f32.mxu0 0.0
      %910 = vmatmul.mubr.f32.gmra.mxu0 %v748
      %v911 = vpop.f32.mrf.mxu0
      %v912 = vadd.f32 %v638, %v911
      %v913 = vpop.f32.mrf.mxu0
      %914 = vmatprep.mubr.f32.mxu0 0.0
      %915 = vmatmul.mubr.f32.gmra.mxu0 %v751
      %v916 = vpop.f32.mrf.mxu0
      %v917 = vadd.f32 %v643, %v916
      %v918 = vpop.f32.mrf.mxu0
      %919 = vmatprep.mubr.f32.mxu0 0.0
      %920 = vmatmul.mubr.f32.gmra.mxu0 %v754
      %v921 = vpop.f32.mrf.mxu0
      %v922 = vadd.f32 %v648, %v921
      %v923 = vpop.f32.mrf.mxu0
      %924 = vmatprep.mubr.f32.mxu0 0.0
      %925 = vmatmul.mubr.f32.gmra.mxu0 %v757
      %v926 = vpop.f32.mrf.mxu0
      %v927 = vadd.f32 %v653, %v926
      %v928 = vpop.f32.mrf.mxu0
      %929 = vmatprep.mubr.f32.mxu0 0.0
      %930 = vmatmul.mubr.f32.gmra.mxu0 %v760
      %v931 = vpop.f32.mrf.mxu0
      %v932 = vadd.f32 %v658, %v931
      %v933 = vpop.f32.mrf.mxu0
      %934 = vmatprep.mubr.f32.mxu0 0.0
      %935 = vmatmul.mubr.f32.gmra.mxu0 %v763
      %v936 = vpop.f32.mrf.mxu0
      %v937 = vadd.f32 %v663, %v936
      %v938 = vpop.f32.mrf.mxu0
      %939 = vmatprep.mubr.f32.mxu0 0.0
      %940 = vmatmul.mubr.f32.gmra.mxu0 %v766
      %v941 = vpop.f32.mrf.mxu0
      %v942 = vadd.f32 %v668, %v941
      %v943 = vpop.f32.mrf.mxu0
      %944 = vmatprep.mubr.f32.mxu0 0.0
      %945 = vmatmul.mubr.f32.gmra.mxu0 %v769
      %v946 = vpop.f32.mrf.mxu0
      %v947 = vadd.f32 %v673, %v946
      %v948 = vpop.f32.mrf.mxu0
      %949 = vmatprep.mubr.f32.mxu0 0.0
      %950 = vmatmul.mubr.f32.gmra.mxu0 %v772
      %v951 = vpop.f32.mrf.mxu0
      %v952 = vadd.f32 %v678, %v951
      %v953 = vpop.f32.mrf.mxu0
      %954 = vmatprep.mubr.f32.mxu0 0.0
      %955 = vmatmul.mubr.f32.gmra.mxu0 %v775
      %v956 = vpop.f32.mrf.mxu0
      %v957 = vadd.f32 %v683, %v956
      %v958 = vpop.f32.mrf.mxu0
      %959 = vmatprep.mubr.f32.mxu0 0.0
      %960 = vmatmul.mubr.f32.gmra.mxu0 %v778
      %v961 = vpop.f32.mrf.mxu0
      %v962 = vadd.f32 %v688, %v961
      %v963 = vpop.f32.mrf.mxu0
      %964 = vmatprep.mubr.f32.mxu0 0.0
      %965 = vmatmul.mubr.f32.gmra.mxu0 %v781
      %v966 = vpop.f32.mrf.mxu0
      %v967 = vadd.f32 %v693, %v966
      %v968 = vpop.f32.mrf.mxu0
      %969 = vmatprep.mubr.f32.mxu0 0.0
      %970 = vmatmul.mubr.f32.gmra.mxu0 %v784
      %v971 = vpop.f32.mrf.mxu0
      %v972 = vadd.f32 %v698, %v971
      %v973 = vpop.f32.mrf.mxu0
      %974 = vmatprep.mubr.f32.mxu0 0.0
      %975 = vmatmul.mubr.f32.gmra.mxu0 %v787
      %v976 = vpop.f32.mrf.mxu0
      %v977 = vadd.f32 %v703, %v976
      %v978 = vpop.f32.mrf.mxu0
      %979 = vmatprep.mubr.f32.mxu0 0.0
      %980 = vmatmul.mubr.f32.gmra.mxu0 %v790
      %v981 = vpop.f32.mrf.mxu0
      %v982 = vadd.f32 %v708, %v981
      %v983 = vpop.f32.mrf.mxu0
      %984 = vmatprep.mubr.f32.mxu0 0.0
      %985 = vmatmul.mubr.f32.gmra.mxu0 %v793
      %v986 = vpop.f32.mrf.mxu0
      %v987 = vadd.f32 %v713, %v986
      %v988 = vpop.f32.mrf.mxu0
      %989 = vdwg.mxu0
      %v990 = vld [vmem:[%s4] sm:$0x1]
      %v992 = vlaneseq
      %v993 = vshrl.u32 %v992, 7
      %v994 = vsub.s32 0, %v993
      %v995 = vrot.slane %v990, %v994
      %v997 = vadd.f32 %v862, %v995
      %v998 = vadd.f32 %v867, %v995
      %v999 = vadd.f32 %v872, %v995
      %v1000 = vadd.f32 %v877, %v995
      %v1001 = vadd.f32 %v882, %v995
      %v1002 = vadd.f32 %v887, %v995
      %v1003 = vadd.f32 %v892, %v995
      %v1004 = vadd.f32 %v897, %v995
      %v1005 = vadd.f32 %v902, %v995
      %v1006 = vadd.f32 %v907, %v995
      %v1007 = vadd.f32 %v912, %v995
      %v1008 = vadd.f32 %v917, %v995
      %v1009 = vadd.f32 %v922, %v995
      %v1010 = vadd.f32 %v927, %v995
      %v1011 = vadd.f32 %v932, %v995
      %v1012 = vadd.f32 %v937, %v995
      %v1013 = vadd.f32 %v942, %v995
      %v1014 = vadd.f32 %v947, %v995
      %v1015 = vadd.f32 %v952, %v995
      %v1016 = vadd.f32 %v957, %v995
      %v1017 = vadd.f32 %v962, %v995
      %v1018 = vadd.f32 %v967, %v995
      %v1019 = vadd.f32 %v972, %v995
      %v1020 = vadd.f32 %v977, %v995
      %v1021 = vadd.f32 %v982, %v995
      %v1022 = vadd.f32 %v987, %v995
      %v1023 = vmax.f32 %v997, 0.0
      %v1024 = vmax.f32 %v998, 0.0
      %v1025 = vmax.f32 %v999, 0.0
      %v1026 = vmax.f32 %v1000, 0.0
      %v1027 = vmax.f32 %v1001, 0.0
      %v1028 = vmax.f32 %v1002, 0.0
      %v1029 = vmax.f32 %v1003, 0.0
      %v1030 = vmax.f32 %v1004, 0.0
      %v1031 = vmax.f32 %v1005, 0.0
      %v1032 = vmax.f32 %v1006, 0.0
      %v1033 = vmax.f32 %v1007, 0.0
      %v1034 = vmax.f32 %v1008, 0.0
      %v1035 = vmax.f32 %v1009, 0.0
      %v1036 = vmax.f32 %v1010, 0.0
      %v1037 = vmax.f32 %v1011, 0.0
      %v1038 = vmax.f32 %v1012, 0.0
      %v1039 = vmax.f32 %v1013, 0.0
      %v1040 = vmax.f32 %v1014, 0.0
      %v1041 = vmax.f32 %v1015, 0.0
      %v1042 = vmax.f32 %v1016, 0.0
      %v1043 = vmax.f32 %v1017, 0.0
      %v1044 = vmax.f32 %v1018, 0.0
      %v1045 = vmax.f32 %v1019, 0.0
      %v1046 = vmax.f32 %v1020, 0.0
      %v1047 = vmax.f32 %v1021, 0.0
      %v1048 = vmax.f32 %v1022, 0.0
      %v1049 = vld [vmem:[%s5] sm:$0xff]
      %v1050 = vld [vmem:[%s5 + $0x8] sm:$0xff]
      %v1051 = vld [vmem:[%s5 + $0x10] sm:$0xff]
      %v1052 = vld [vmem:[%s5 + $0x18] sm:$0xff]
      %v1053 = vld [vmem:[%s5 + $0x20] sm:$0xff]
      %v1054 = vld [vmem:[%s5 + $0x28] sm:$0xff]
      %v1055 = vld [vmem:[%s5 + $0x30] sm:$0xff]
      %v1056 = vld [vmem:[%s5 + $0x38] sm:$0xff]
      %v1057 = vld [vmem:[%s5 + $0x40] sm:$0xff]
      %v1058 = vld [vmem:[%s5 + $0x48] sm:$0xff]
      %v1059 = vld [vmem:[%s5 + $0x50] sm:$0xff]
      %v1060 = vld [vmem:[%s5 + $0x58] sm:$0xff]
      %v1061 = vld [vmem:[%s5 + $0x60] sm:$0xff]
      %v1062 = vld [vmem:[%s5 + $0x68] sm:$0xff]
      %v1063 = vld [vmem:[%s5 + $0x70] sm:$0xff]
      %v1064 = vld [vmem:[%s5 + $0x78] sm:$0xff]
      %v1065 = vld [vmem:[%s5 + $0x80] sm:$0xff]
      %v1066 = vld [vmem:[%s5 + $0x88] sm:$0xff]
      %v1067 = vld [vmem:[%s5 + $0x90] sm:$0xff]
      %v1068 = vld [vmem:[%s5 + $0x98] sm:$0xff]
      %v1069 = vld [vmem:[%s5 + $0xa0] sm:$0xff]
      %v1070 = vld [vmem:[%s5 + $0xa8] sm:$0xff]
      %v1071 = vld [vmem:[%s5 + $0xb0] sm:$0xff]
      %v1072 = vld [vmem:[%s5 + $0xb8] sm:$0xff]
      %v1073 = vld [vmem:[%s5 + $0xc0] sm:$0xff]
      %v1074 = vld [vmem:[%s5 + $0xc8] sm:$0xff]
      %v1075 = vld [vmem:[%s5 + $0xd0] sm:$0xff]
      %v1076 = vld [vmem:[%s5 + $0xd8] sm:$0xff]
      %v1077 = vld [vmem:[%s5 + $0xe0] sm:$0xff]
      %v1078 = vld [vmem:[%s5 + $0xe8] sm:$0xff]
      %v1079 = vld [vmem:[%s5 + $0xf0] sm:$0xff]
      %v1080 = vld [vmem:[%s5 + $0xf8] sm:$0xff]
      %v1081 = vld [vmem:[%s5 + $0x100] sm:$0xff]
      %v1082 = vld [vmem:[%s5 + $0x108] sm:$0xff]
      %v1083 = vld [vmem:[%s5 + $0x110] sm:$0xff]
      %v1084 = vld [vmem:[%s5 + $0x118] sm:$0xff]
      %v1085 = vld [vmem:[%s5 + $0x120] sm:$0xff]
      %v1086 = vld [vmem:[%s5 + $0x128] sm:$0xff]
      %v1087 = vld [vmem:[%s5 + $0x130] sm:$0xff]
      %v1088 = vld [vmem:[%s5 + $0x138] sm:$0xff]
      %v1089 = vld [vmem:[%s5 + $0x140] sm:$0xff]
      %v1090 = vld [vmem:[%s5 + $0x148] sm:$0xff]
      %v1091 = vld [vmem:[%s5 + $0x150] sm:$0xff]
      %v1092 = vld [vmem:[%s5 + $0x158] sm:$0xff]
      %v1093 = vld [vmem:[%s5 + $0x160] sm:$0xff]
      %v1094 = vld [vmem:[%s5 + $0x168] sm:$0xff]
      %v1095 = vld [vmem:[%s5 + $0x170] sm:$0xff]
      %v1096 = vld [vmem:[%s5 + $0x178] sm:$0xff]
      %v1097 = vld [vmem:[%s5 + $0x180] sm:$0xff]
      %v1098 = vld [vmem:[%s5 + $0x188] sm:$0xff]
      %v1099 = vld [vmem:[%s5 + $0x190] sm:$0xff]
      %v1100 = vld [vmem:[%s5 + $0x198] sm:$0xff]
      %v1101 = vld [vmem:[%s5 + $0x1a0] sm:$0xff]
      %v1102 = vld [vmem:[%s5 + $0x1a8] sm:$0xff]
      %v1103 = vld [vmem:[%s5 + $0x1b0] sm:$0xff]
      %v1104 = vld [vmem:[%s5 + $0x1b8] sm:$0xff]
      %v1105 = vld [vmem:[%s5 + $0x1c0] sm:$0xff]
      %v1106 = vld [vmem:[%s5 + $0x1c8] sm:$0xff]
      %v1107 = vld [vmem:[%s5 + $0x1d0] sm:$0xff]
      %v1108 = vld [vmem:[%s5 + $0x1d8] sm:$0xff]
      %v1109 = vld [vmem:[%s5 + $0x1e0] sm:$0xff]
      %v1110 = vld [vmem:[%s5 + $0x1e8] sm:$0xff]
      %v1111 = vld [vmem:[%s5 + $0x1f0] sm:$0xff]
      %v1112 = vld [vmem:[%s5 + $0x1f8] sm:$0xff]
      %v1113 = vld [vmem:[%s5 + $0x200] sm:$0xff]
      %v1114 = vld [vmem:[%s5 + $0x208] sm:$0xff]
      %v1115 = vld [vmem:[%s5 + $0x210] sm:$0xff]
      %v1116 = vld [vmem:[%s5 + $0x218] sm:$0xff]
      %v1117 = vld [vmem:[%s5 + $0x220] sm:$0xff]
      %v1118 = vld [vmem:[%s5 + $0x228] sm:$0xff]
      %v1119 = vld [vmem:[%s5 + $0x230] sm:$0xff]
      %v1120 = vld [vmem:[%s5 + $0x238] sm:$0xff]
      %v1121 = vld [vmem:[%s5 + $0x240] sm:$0xff]
      %v1122 = vld [vmem:[%s5 + $0x248] sm:$0xff]
      %v1123 = vld [vmem:[%s5 + $0x250] sm:$0xff]
      %v1124 = vld [vmem:[%s5 + $0x258] sm:$0xff]
      %v1125 = vld [vmem:[%s5 + $0x260] sm:$0xff]
      %v1126 = vld [vmem:[%s5 + $0x268] sm:$0xff]
      %v1127 = vld [vmem:[%s5 + $0x270] sm:$0xff]
      %v1128 = vld [vmem:[%s5 + $0x278] sm:$0xff]
      %v1129 = vld [vmem:[%s5 + $0x280] sm:$0xff]
      %v1130 = vld [vmem:[%s5 + $0x288] sm:$0xff]
      %v1131 = vld [vmem:[%s5 + $0x290] sm:$0xff]
      %v1132 = vld [vmem:[%s5 + $0x298] sm:$0xff]
      %v1133 = vld [vmem:[%s5 + $0x2a0] sm:$0xff]
      %v1134 = vld [vmem:[%s5 + $0x2a8] sm:$0xff]
      %v1135 = vld [vmem:[%s5 + $0x2b0] sm:$0xff]
      %v1136 = vld [vmem:[%s5 + $0x2b8] sm:$0xff]
      %v1137 = vld [vmem:[%s5 + $0x2c0] sm:$0xff]
      %v1138 = vld [vmem:[%s5 + $0x2c8] sm:$0xff]
      %v1139 = vld [vmem:[%s5 + $0x2d0] sm:$0xff]
      %v1140 = vld [vmem:[%s5 + $0x2d8] sm:$0xff]
      %v1141 = vld [vmem:[%s5 + $0x2e0] sm:$0xff]
      %v1142 = vld [vmem:[%s5 + $0x2e8] sm:$0xff]
      %v1143 = vld [vmem:[%s5 + $0x2f0] sm:$0xff]
      %v1144 = vld [vmem:[%s5 + $0x2f8] sm:$0xff]
      %v1145 = vld [vmem:[%s5 + $0x300] sm:$0xff]
      %v1146 = vld [vmem:[%s5 + $0x308] sm:$0xff]
      %v1147 = vld [vmem:[%s5 + $0x310] sm:$0xff]
      %v1148 = vld [vmem:[%s5 + $0x318] sm:$0xff]
      %v1149 = vld [vmem:[%s5 + $0x320] sm:$0xff]
      %v1150 = vld [vmem:[%s5 + $0x328] sm:$0xff]
      %v1151 = vld [vmem:[%s5 + $0x330] sm:$0xff]
      %v1152 = vld [vmem:[%s5 + $0x338] sm:$0xff]
      %v1153 = vld [vmem:[%s5 + $0x340] sm:$0xff]
      %v1154 = vld [vmem:[%s5 + $0x348] sm:$0xff]
      %v1155 = vld [vmem:[%s5 + $0x350] sm:$0xff]
      %v1156 = vld [vmem:[%s5 + $0x358] sm:$0xff]
      %v1157 = vld [vmem:[%s5 + $0x360] sm:$0xff]
      %v1158 = vld [vmem:[%s5 + $0x368] sm:$0xff]
      %v1159 = vld [vmem:[%s5 + $0x370] sm:$0xff]
      %v1160 = vld [vmem:[%s5 + $0x378] sm:$0xff]
      %v1161 = vld [vmem:[%s5 + $0x380] sm:$0xff]
      %v1162 = vld [vmem:[%s5 + $0x388] sm:$0xff]
      %v1163 = vld [vmem:[%s5 + $0x390] sm:$0xff]
      %v1164 = vld [vmem:[%s5 + $0x398] sm:$0xff]
      %v1165 = vld [vmem:[%s5 + $0x3a0] sm:$0xff]
      %v1166 = vld [vmem:[%s5 + $0x3a8] sm:$0xff]
      %v1167 = vld [vmem:[%s5 + $0x3b0] sm:$0xff]
      %v1168 = vld [vmem:[%s5 + $0x3b8] sm:$0xff]
      %v1169 = vld [vmem:[%s5 + $0x3c0] sm:$0xff]
      %v1170 = vld [vmem:[%s5 + $0x3c8] sm:$0xff]
      %v1171 = vld [vmem:[%s5 + $0x3d0] sm:$0xff]
      %v1172 = vld [vmem:[%s5 + $0x3d8] sm:$0xff]
      %v1173 = vld [vmem:[%s5 + $0x3e0] sm:$0xff]
      %v1174 = vld [vmem:[%s5 + $0x3e8] sm:$0xff]
      %v1175 = vld [vmem:[%s5 + $0x3f0] sm:$0xff]
      %v1176 = vld [vmem:[%s5 + $0x3f8] sm:$0xff]
      %v1177 = vld [vmem:[%s6] sm:$0xff]
      %v1178 = vld [vmem:[%s6 + $0x8] sm:$0xff]
      %v1181 = vlaneseq
      %v1182 = vshrl.u32 %v1181, 7
      %v1183 = vsub.s32 0, %v1182
      %v1184 = vrot.slane %v1177, %v1183
      %v1185 = vlaneseq
      %v1186 = vshrl.u32 %v1185, 7
      %v1187 = vsub.s32 1, %v1186
      %v1188 = vrot.slane %v1177, %v1187
      %v1189 = vlaneseq
      %v1190 = vshrl.u32 %v1189, 7
      %v1191 = vsub.s32 2, %v1190
      %v1192 = vrot.slane %v1177, %v1191
      %v1193 = vlaneseq
      %v1194 = vshrl.u32 %v1193, 7
      %v1195 = vsub.s32 3, %v1194
      %v1196 = vrot.slane %v1177, %v1195
      %v1197 = vlaneseq
      %v1198 = vshrl.u32 %v1197, 7
      %v1199 = vsub.s32 4, %v1198
      %v1200 = vrot.slane %v1177, %v1199
      %v1201 = vlaneseq
      %v1202 = vshrl.u32 %v1201, 7
      %v1203 = vsub.s32 5, %v1202
      %v1204 = vrot.slane %v1177, %v1203
      %v1205 = vlaneseq
      %v1206 = vshrl.u32 %v1205, 7
      %v1207 = vsub.s32 6, %v1206
      %v1208 = vrot.slane %v1177, %v1207
      %v1209 = vlaneseq
      %v1210 = vshrl.u32 %v1209, 7
      %v1211 = vsub.s32 7, %v1210
      %v1212 = vrot.slane %v1177, %v1211
      %v1213 = vlaneseq
      %v1214 = vshrl.u32 %v1213, 7
      %v1215 = vsub.s32 0, %v1214
      %v1216 = vrot.slane %v1178, %v1215
      %v1217 = vlaneseq
      %v1218 = vshrl.u32 %v1217, 7
      %v1219 = vsub.s32 1, %v1218
      %v1220 = vrot.slane %v1178, %v1219
      %v1221 = vlaneseq
      %v1222 = vshrl.u32 %v1221, 7
      %v1223 = vsub.s32 2, %v1222
      %v1224 = vrot.slane %v1178, %v1223
      %v1225 = vlaneseq
      %v1226 = vshrl.u32 %v1225, 7
      %v1227 = vsub.s32 3, %v1226
      %v1228 = vrot.slane %v1178, %v1227
      %v1229 = vlaneseq
      %v1230 = vshrl.u32 %v1229, 7
      %v1231 = vsub.s32 4, %v1230
      %v1232 = vrot.slane %v1178, %v1231
      %v1233 = vlaneseq
      %v1234 = vshrl.u32 %v1233, 7
      %v1235 = vsub.s32 5, %v1234
      %v1236 = vrot.slane %v1178, %v1235
      %v1237 = vlaneseq
      %v1238 = vshrl.u32 %v1237, 7
      %v1239 = vsub.s32 6, %v1238
      %v1240 = vrot.slane %v1178, %v1239
      %v1241 = vlaneseq
      %v1242 = vshrl.u32 %v1241, 7
      %v1243 = vsub.s32 7, %v1242
      %v1244 = vrot.slane %v1178, %v1243
      %vm1261 = vcmask 523264
      %v1263 = vsel %vm1261, %v1023, 0
      %v1266 = vsel %vm1261, %v1024, 0
      %v1269 = vsel %vm1261, %v1025, 0
      %v1272 = vsel %vm1261, %v1026, 0
      %v1275 = vsel %vm1261, %v1027, 0
      %v1278 = vsel %vm1261, %v1028, 0
      %v1281 = vsel %vm1261, %v1029, 0
      %v1284 = vsel %vm1261, %v1030, 0
      %v1287 = vsel %vm1261, %v1031, 0
      %v1290 = vsel %vm1261, %v1032, 0
      %v1293 = vsel %vm1261, %v1033, 0
      %v1296 = vsel %vm1261, %v1034, 0
      %v1299 = vsel %vm1261, %v1035, 0
      %v1302 = vsel %vm1261, %v1036, 0
      %v1305 = vsel %vm1261, %v1037, 0
      %v1308 = vsel %vm1261, %v1038, 0
      %v1311 = vsel %vm1261, %v1039, 0
      %v1314 = vsel %vm1261, %v1040, 0
      %v1317 = vsel %vm1261, %v1041, 0
      %v1320 = vsel %vm1261, %v1042, 0
      %v1323 = vsel %vm1261, %v1043, 0
      %v1326 = vsel %vm1261, %v1044, 0
      %v1329 = vsel %vm1261, %v1045, 0
      %v1332 = vsel %vm1261, %v1046, 0
      %v1335 = vsel %vm1261, %v1047, 0
      %v1338 = vsel %vm1261, %v1048, 0
      %1340 = vmatprep.subr.mxu0 0.0
      %1341 = vmatpush1.msra.mxu0 0.0
      %1342 = vmatprep.subr.mxu0 0.0
      %1343 = vmatpush1.msra.mxu0 0.0
      %1344 = vmatprep.subr.mxu0 0.0
      %1345 = vmatpush1.msra.mxu0 0.0
      %1346 = vmatprep.subr.mxu0 0.0
      %1347 = vmatpush1.msra.mxu0 0.0
      %1348 = vmatprep.subr.mxu0 0.0
      %1349 = vmatpush1.msra.mxu0 0.0
      %1350 = vmatprep.subr.mxu0 0.0
      %1351 = vmatpush1.msra.mxu0 0.0
      %1352 = vmatprep.subr.mxu0 0.0
      %1353 = vmatpush1.msra.mxu0 0.0
      %1354 = vmatprep.subr.mxu0 0.0
      %1355 = vmatpush1.msra.mxu0 0.0
      %1356 = vmatprep.subr.mxu0 %v1162
      %1357 = vmatpush1.msra.mxu0 %v1161
      %1358 = vmatprep.subr.mxu0 %v1146
      %1359 = vmatpush1.msra.mxu0 %v1145
      %1360 = vmatprep.subr.mxu0 %v1130
      %1361 = vmatpush1.msra.mxu0 %v1129
      %1362 = vmatprep.subr.mxu0 %v1114
      %1363 = vmatpush1.msra.mxu0 %v1113
      %1364 = vmatprep.subr.mxu0 %v1098
      %1365 = vmatpush1.msra.mxu0 %v1097
      %1366 = vmatprep.subr.mxu0 %v1082
      %1367 = vmatpush1.msra.mxu0 %v1081
      %1368 = vmatprep.subr.mxu0 %v1066
      %1369 = vmatpush1.msra.mxu0 %v1065
      %1370 = vmatprep.subr.mxu0 %v1050
      %1371 = vmatpush1.msra.mxu0 %v1049
      %1372 = vmatprep.subr.mxu0 0.0
      %1373 = vmatpush2.msra.mxu0 0.0
      %1374 = vmatprep.subr.mxu0 0.0
      %1375 = vmatpush2.msra.mxu0 0.0
      %1376 = vmatprep.subr.mxu0 0.0
      %1377 = vmatpush2.msra.mxu0 0.0
      %1378 = vmatprep.subr.mxu0 0.0
      %1379 = vmatpush2.msra.mxu0 0.0
      %1380 = vmatprep.subr.mxu0 0.0
      %1381 = vmatpush2.msra.mxu0 0.0
      %1382 = vmatprep.subr.mxu0 0.0
      %1383 = vmatpush2.msra.mxu0 0.0
      %1384 = vmatprep.subr.mxu0 0.0
      %1385 = vmatpush2.msra.mxu0 0.0
      %1386 = vmatprep.subr.mxu0 0.0
      %1387 = vmatpush2.msra.mxu0 0.0
      %1388 = vmatprep.subr.mxu0 0.0
      %1389 = vmatpush2.msra.mxu0 0.0
      %1390 = vmatprep.subr.mxu0 0.0
      %1391 = vmatpush2.msra.mxu0 0.0
      %1392 = vmatprep.subr.mxu0 0.0
      %1393 = vmatpush2.msra.mxu0 0.0
      %1394 = vmatprep.subr.mxu0 0.0
      %1395 = vmatpush2.msra.mxu0 0.0
      %1396 = vmatprep.subr.mxu0 0.0
      %1397 = vmatpush2.msra.mxu0 0.0
      %1398 = vmatprep.subr.mxu0 0.0
      %1399 = vmatpush2.msra.mxu0 0.0
      %1400 = vmatprep.subr.mxu0 0.0
      %1401 = vmatpush2.msra.mxu0 0.0
      %1402 = vmatprep.subr.mxu0 0.0
      %1403 = vmatpush2.msra.mxu0 0.0
      %1404 = vmatprep.mubr.f32.mxu0 0.0
      %1405 = vmatmul.mubr.f32.gmra.mxu0 %v1263
      %v1406 = vpop.f32.mrf.mxu0
      %v1407 = vadd.f32 %v1184, %v1406
      %v1408 = vpop.f32.mrf.mxu0
      %v1409 = vadd.f32 %v1188, %v1408
      %1410 = vmatprep.mubr.f32.mxu0 0.0
      %1411 = vmatmul.mubr.f32.gmra.mxu0 %v1266
      %v1412 = vpop.f32.mrf.mxu0
      %v1413 = vadd.f32 %v1184, %v1412
      %v1414 = vpop.f32.mrf.mxu0
      %v1415 = vadd.f32 %v1188, %v1414
      %1416 = vmatprep.mubr.f32.mxu0 0.0
      %1417 = vmatmul.mubr.f32.gmra.mxu0 %v1269
      %v1418 = vpop.f32.mrf.mxu0
      %v1419 = vadd.f32 %v1184, %v1418
      %v1420 = vpop.f32.mrf.mxu0
      %v1421 = vadd.f32 %v1188, %v1420
      %1422 = vmatprep.mubr.f32.mxu0 0.0
      %1423 = vmatmul.mubr.f32.gmra.mxu0 %v1272
      %v1424 = vpop.f32.mrf.mxu0
      %v1425 = vadd.f32 %v1184, %v1424
      %v1426 = vpop.f32.mrf.mxu0
      %v1427 = vadd.f32 %v1188, %v1426
      %1428 = vmatprep.mubr.f32.mxu0 0.0
      %1429 = vmatmul.mubr.f32.gmra.mxu0 %v1275
      %v1430 = vpop.f32.mrf.mxu0
      %v1431 = vadd.f32 %v1184, %v1430
      %v1432 = vpop.f32.mrf.mxu0
      %v1433 = vadd.f32 %v1188, %v1432
      %1434 = vmatprep.mubr.f32.mxu0 0.0
      %1435 = vmatmul.mubr.f32.gmra.mxu0 %v1278
      %v1436 = vpop.f32.mrf.mxu0
      %v1437 = vadd.f32 %v1184, %v1436
      %v1438 = vpop.f32.mrf.mxu0
      %v1439 = vadd.f32 %v1188, %v1438
      %1440 = vmatprep.mubr.f32.mxu0 0.0
      %1441 = vmatmul.mubr.f32.gmra.mxu0 %v1281
      %v1442 = vpop.f32.mrf.mxu0
      %v1443 = vadd.f32 %v1184, %v1442
      %v1444 = vpop.f32.mrf.mxu0
      %v1445 = vadd.f32 %v1188, %v1444
      %1446 = vmatprep.mubr.f32.mxu0 0.0
      %1447 = vmatmul.mubr.f32.gmra.mxu0 %v1284
      %v1448 = vpop.f32.mrf.mxu0
      %v1449 = vadd.f32 %v1184, %v1448
      %v1450 = vpop.f32.mrf.mxu0
      %v1451 = vadd.f32 %v1188, %v1450
      %1452 = vmatprep.mubr.f32.mxu0 0.0
      %1453 = vmatmul.mubr.f32.gmra.mxu0 %v1287
      %v1454 = vpop.f32.mrf.mxu0
      %v1455 = vadd.f32 %v1184, %v1454
      %v1456 = vpop.f32.mrf.mxu0
      %v1457 = vadd.f32 %v1188, %v1456
      %1458 = vmatprep.mubr.f32.mxu0 0.0
      %1459 = vmatmul.mubr.f32.gmra.mxu0 %v1290
      %v1460 = vpop.f32.mrf.mxu0
      %v1461 = vadd.f32 %v1184, %v1460
      %v1462 = vpop.f32.mrf.mxu0
      %v1463 = vadd.f32 %v1188, %v1462
      %1464 = vmatprep.mubr.f32.mxu0 0.0
      %1465 = vmatmul.mubr.f32.gmra.mxu0 %v1293
      %v1466 = vpop.f32.mrf.mxu0
      %v1467 = vadd.f32 %v1184, %v1466
      %v1468 = vpop.f32.mrf.mxu0
      %v1469 = vadd.f32 %v1188, %v1468
      %1470 = vmatprep.mubr.f32.mxu0 0.0
      %1471 = vmatmul.mubr.f32.gmra.mxu0 %v1296
      %v1472 = vpop.f32.mrf.mxu0
      %v1473 = vadd.f32 %v1184, %v1472
      %v1474 = vpop.f32.mrf.mxu0
      %v1475 = vadd.f32 %v1188, %v1474
      %1476 = vmatprep.mubr.f32.mxu0 0.0
      %1477 = vmatmul.mubr.f32.gmra.mxu0 %v1299
      %v1478 = vpop.f32.mrf.mxu0
      %v1479 = vadd.f32 %v1184, %v1478
      %v1480 = vpop.f32.mrf.mxu0
      %v1481 = vadd.f32 %v1188, %v1480
      %1482 = vmatprep.mubr.f32.mxu0 0.0
      %1483 = vmatmul.mubr.f32.gmra.mxu0 %v1302
      %v1484 = vpop.f32.mrf.mxu0
      %v1485 = vadd.f32 %v1184, %v1484
      %v1486 = vpop.f32.mrf.mxu0
      %v1487 = vadd.f32 %v1188, %v1486
      %1488 = vmatprep.mubr.f32.mxu0 0.0
      %1489 = vmatmul.mubr.f32.gmra.mxu0 %v1305
      %v1490 = vpop.f32.mrf.mxu0
      %v1491 = vadd.f32 %v1184, %v1490
      %v1492 = vpop.f32.mrf.mxu0
      %v1493 = vadd.f32 %v1188, %v1492
      %1494 = vmatprep.mubr.f32.mxu0 0.0
      %1495 = vmatmul.mubr.f32.gmra.mxu0 %v1308
      %v1496 = vpop.f32.mrf.mxu0
      %v1497 = vadd.f32 %v1184, %v1496
      %v1498 = vpop.f32.mrf.mxu0
      %v1499 = vadd.f32 %v1188, %v1498
      %1500 = vmatprep.mubr.f32.mxu0 0.0
      %1501 = vmatmul.mubr.f32.gmra.mxu0 %v1311
      %v1502 = vpop.f32.mrf.mxu0
      %v1503 = vadd.f32 %v1184, %v1502
      %v1504 = vpop.f32.mrf.mxu0
      %v1505 = vadd.f32 %v1188, %v1504
      %1506 = vmatprep.mubr.f32.mxu0 0.0
      %1507 = vmatmul.mubr.f32.gmra.mxu0 %v1314
      %v1508 = vpop.f32.mrf.mxu0
      %v1509 = vadd.f32 %v1184, %v1508
      %v1510 = vpop.f32.mrf.mxu0
      %v1511 = vadd.f32 %v1188, %v1510
      %1512 = vmatprep.mubr.f32.mxu0 0.0
      %1513 = vmatmul.mubr.f32.gmra.mxu0 %v1317
      %v1514 = vpop.f32.mrf.mxu0
      %v1515 = vadd.f32 %v1184, %v1514
      %v1516 = vpop.f32.mrf.mxu0
      %v1517 = vadd.f32 %v1188, %v1516
      %1518 = vmatprep.mubr.f32.mxu0 0.0
      %1519 = vmatmul.mubr.f32.gmra.mxu0 %v1320
      %v1520 = vpop.f32.mrf.mxu0
      %v1521 = vadd.f32 %v1184, %v1520
      %v1522 = vpop.f32.mrf.mxu0
      %v1523 = vadd.f32 %v1188, %v1522
      %1524 = vmatprep.mubr.f32.mxu0 0.0
      %1525 = vmatmul.mubr.f32.gmra.mxu0 %v1323
      %v1526 = vpop.f32.mrf.mxu0
      %v1527 = vadd.f32 %v1184, %v1526
      %v1528 = vpop.f32.mrf.mxu0
      %v1529 = vadd.f32 %v1188, %v1528
      %1530 = vmatprep.mubr.f32.mxu0 0.0
      %1531 = vmatmul.mubr.f32.gmra.mxu0 %v1326
      %v1532 = vpop.f32.mrf.mxu0
      %v1533 = vadd.f32 %v1184, %v1532
      %v1534 = vpop.f32.mrf.mxu0
      %v1535 = vadd.f32 %v1188, %v1534
      %1536 = vmatprep.mubr.f32.mxu0 0.0
      %1537 = vmatmul.mubr.f32.gmra.mxu0 %v1329
      %v1538 = vpop.f32.mrf.mxu0
      %v1539 = vadd.f32 %v1184, %v1538
      %v1540 = vpop.f32.mrf.mxu0
      %v1541 = vadd.f32 %v1188, %v1540
      %1542 = vmatprep.mubr.f32.mxu0 0.0
      %1543 = vmatmul.mubr.f32.gmra.mxu0 %v1332
      %v1544 = vpop.f32.mrf.mxu0
      %v1545 = vadd.f32 %v1184, %v1544
      %v1546 = vpop.f32.mrf.mxu0
      %v1547 = vadd.f32 %v1188, %v1546
      %1548 = vmatprep.mubr.f32.mxu0 0.0
      %1549 = vmatmul.mubr.f32.gmra.mxu0 %v1335
      %v1550 = vpop.f32.mrf.mxu0
      %v1551 = vadd.f32 %v1184, %v1550
      %v1552 = vpop.f32.mrf.mxu0
      %v1553 = vadd.f32 %v1188, %v1552
      %1554 = vmatprep.mubr.f32.mxu0 0.0
      %1555 = vmatmul.mubr.f32.gmra.mxu0 %v1338
      %v1556 = vpop.f32.mrf.mxu0
      %v1557 = vadd.f32 %v1184, %v1556
      %v1558 = vpop.f32.mrf.mxu0
      %v1559 = vadd.f32 %v1188, %v1558
      %1560 = vdwg.mxu0
      %1561 = vmatprep.subr.mxu0 0.0
      %1562 = vmatpush1.msra.mxu0 0.0
      %1563 = vmatprep.subr.mxu0 0.0
      %1564 = vmatpush1.msra.mxu0 0.0
      %1565 = vmatprep.subr.mxu0 0.0
      %1566 = vmatpush1.msra.mxu0 0.0
      %1567 = vmatprep.subr.mxu0 0.0
      %1568 = vmatpush1.msra.mxu0 0.0
      %1569 = vmatprep.subr.mxu0 0.0
      %1570 = vmatpush1.msra.mxu0 0.0
      %1571 = vmatprep.subr.mxu0 0.0
      %1572 = vmatpush1.msra.mxu0 0.0
      %1573 = vmatprep.subr.mxu0 0.0
      %1574 = vmatpush1.msra.mxu0 0.0
      %1575 = vmatprep.subr.mxu0 0.0
      %1576 = vmatpush1.msra.mxu0 0.0
      %1577 = vmatprep.subr.mxu0 %v1164
      %1578 = vmatpush1.msra.mxu0 %v1163
      %1579 = vmatprep.subr.mxu0 %v1148
      %1580 = vmatpush1.msra.mxu0 %v1147
      %1581 = vmatprep.subr.mxu0 %v1132
      %1582 = vmatpush1.msra.mxu0 %v1131
      %1583 = vmatprep.subr.mxu0 %v1116
      %1584 = vmatpush1.msra.mxu0 %v1115
      %1585 = vmatprep.subr.mxu0 %v1100
      %1586 = vmatpush1.msra.mxu0 %v1099
      %1587 = vmatprep.subr.mxu0 %v1084
      %1588 = vmatpush1.msra.mxu0 %v1083
      %1589 = vmatprep.subr.mxu0 %v1068
      %1590 = vmatpush1.msra.mxu0 %v1067
      %1591 = vmatprep.subr.mxu0 %v1052
      %1592 = vmatpush1.msra.mxu0 %v1051
      %1593 = vmatprep.subr.mxu0 0.0
      %1594 = vmatpush2.msra.mxu0 0.0
      %1595 = vmatprep.subr.mxu0 0.0
      %1596 = vmatpush2.msra.mxu0 0.0
      %1597 = vmatprep.subr.mxu0 0.0
      %1598 = vmatpush2.msra.mxu0 0.0
      %1599 = vmatprep.subr.mxu0 0.0
      %1600 = vmatpush2.msra.mxu0 0.0
      %1601 = vmatprep.subr.mxu0 0.0
      %1602 = vmatpush2.msra.mxu0 0.0
      %1603 = vmatprep.subr.mxu0 0.0
      %1604 = vmatpush2.msra.mxu0 0.0
      %1605 = vmatprep.subr.mxu0 0.0
      %1606 = vmatpush2.msra.mxu0 0.0
      %1607 = vmatprep.subr.mxu0 0.0
      %1608 = vmatpush2.msra.mxu0 0.0
      %1609 = vmatprep.subr.mxu0 0.0
      %1610 = vmatpush2.msra.mxu0 0.0
      %1611 = vmatprep.subr.mxu0 0.0
      %1612 = vmatpush2.msra.mxu0 0.0
      %1613 = vmatprep.subr.mxu0 0.0
      %1614 = vmatpush2.msra.mxu0 0.0
      %1615 = vmatprep.subr.mxu0 0.0
      %1616 = vmatpush2.msra.mxu0 0.0
      %1617 = vmatprep.subr.mxu0 0.0
      %1618 = vmatpush2.msra.mxu0 0.0
      %1619 = vmatprep.subr.mxu0 0.0
      %1620 = vmatpush2.msra.mxu0 0.0
      %1621 = vmatprep.subr.mxu0 0.0
      %1622 = vmatpush2.msra.mxu0 0.0
      %1623 = vmatprep.subr.mxu0 0.0
      %1624 = vmatpush2.msra.mxu0 0.0
      %1625 = vmatprep.mubr.f32.mxu0 0.0
      %1626 = vmatmul.mubr.f32.gmra.mxu0 %v1263
      %v1627 = vpop.f32.mrf.mxu0
      %v1628 = vadd.f32 %v1192, %v1627
      %v1629 = vpop.f32.mrf.mxu0
      %v1630 = vadd.f32 %v1196, %v1629
      %1631 = vmatprep.mubr.f32.mxu0 0.0
      %1632 = vmatmul.mubr.f32.gmra.mxu0 %v1266
      %v1633 = vpop.f32.mrf.mxu0
      %v1634 = vadd.f32 %v1192, %v1633
      %v1635 = vpop.f32.mrf.mxu0
      %v1636 = vadd.f32 %v1196, %v1635
      %1637 = vmatprep.mubr.f32.mxu0 0.0
      %1638 = vmatmul.mubr.f32.gmra.mxu0 %v1269
      %v1639 = vpop.f32.mrf.mxu0
      %v1640 = vadd.f32 %v1192, %v1639
      %v1641 = vpop.f32.mrf.mxu0
      %v1642 = vadd.f32 %v1196, %v1641
      %1643 = vmatprep.mubr.f32.mxu0 0.0
      %1644 = vmatmul.mubr.f32.gmra.mxu0 %v1272
      %v1645 = vpop.f32.mrf.mxu0
      %v1646 = vadd.f32 %v1192, %v1645
      %v1647 = vpop.f32.mrf.mxu0
      %v1648 = vadd.f32 %v1196, %v1647
      %1649 = vmatprep.mubr.f32.mxu0 0.0
      %1650 = vmatmul.mubr.f32.gmra.mxu0 %v1275
      %v1651 = vpop.f32.mrf.mxu0
      %v1652 = vadd.f32 %v1192, %v1651
      %v1653 = vpop.f32.mrf.mxu0
      %v1654 = vadd.f32 %v1196, %v1653
      %1655 = vmatprep.mubr.f32.mxu0 0.0
      %1656 = vmatmul.mubr.f32.gmra.mxu0 %v1278
      %v1657 = vpop.f32.mrf.mxu0
      %v1658 = vadd.f32 %v1192, %v1657
      %v1659 = vpop.f32.mrf.mxu0
      %v1660 = vadd.f32 %v1196, %v1659
      %1661 = vmatprep.mubr.f32.mxu0 0.0
      %1662 = vmatmul.mubr.f32.gmra.mxu0 %v1281
      %v1663 = vpop.f32.mrf.mxu0
      %v1664 = vadd.f32 %v1192, %v1663
      %v1665 = vpop.f32.mrf.mxu0
      %v1666 = vadd.f32 %v1196, %v1665
      %1667 = vmatprep.mubr.f32.mxu0 0.0
      %1668 = vmatmul.mubr.f32.gmra.mxu0 %v1284
      %v1669 = vpop.f32.mrf.mxu0
      %v1670 = vadd.f32 %v1192, %v1669
      %v1671 = vpop.f32.mrf.mxu0
      %v1672 = vadd.f32 %v1196, %v1671
      %1673 = vmatprep.mubr.f32.mxu0 0.0
      %1674 = vmatmul.mubr.f32.gmra.mxu0 %v1287
      %v1675 = vpop.f32.mrf.mxu0
      %v1676 = vadd.f32 %v1192, %v1675
      %v1677 = vpop.f32.mrf.mxu0
      %v1678 = vadd.f32 %v1196, %v1677
      %1679 = vmatprep.mubr.f32.mxu0 0.0
      %1680 = vmatmul.mubr.f32.gmra.mxu0 %v1290
      %v1681 = vpop.f32.mrf.mxu0
      %v1682 = vadd.f32 %v1192, %v1681
      %v1683 = vpop.f32.mrf.mxu0
      %v1684 = vadd.f32 %v1196, %v1683
      %1685 = vmatprep.mubr.f32.mxu0 0.0
      %1686 = vmatmul.mubr.f32.gmra.mxu0 %v1293
      %v1687 = vpop.f32.mrf.mxu0
      %v1688 = vadd.f32 %v1192, %v1687
      %v1689 = vpop.f32.mrf.mxu0
      %v1690 = vadd.f32 %v1196, %v1689
      %1691 = vmatprep.mubr.f32.mxu0 0.0
      %1692 = vmatmul.mubr.f32.gmra.mxu0 %v1296
      %v1693 = vpop.f32.mrf.mxu0
      %v1694 = vadd.f32 %v1192, %v1693
      %v1695 = vpop.f32.mrf.mxu0
      %v1696 = vadd.f32 %v1196, %v1695
      %1697 = vmatprep.mubr.f32.mxu0 0.0
      %1698 = vmatmul.mubr.f32.gmra.mxu0 %v1299
      %v1699 = vpop.f32.mrf.mxu0
      %v1700 = vadd.f32 %v1192, %v1699
      %v1701 = vpop.f32.mrf.mxu0
      %v1702 = vadd.f32 %v1196, %v1701
      %1703 = vmatprep.mubr.f32.mxu0 0.0
      %1704 = vmatmul.mubr.f32.gmra.mxu0 %v1302
      %v1705 = vpop.f32.mrf.mxu0
      %v1706 = vadd.f32 %v1192, %v1705
      %v1707 = vpop.f32.mrf.mxu0
      %v1708 = vadd.f32 %v1196, %v1707
      %1709 = vmatprep.mubr.f32.mxu0 0.0
      %1710 = vmatmul.mubr.f32.gmra.mxu0 %v1305
      %v1711 = vpop.f32.mrf.mxu0
      %v1712 = vadd.f32 %v1192, %v1711
      %v1713 = vpop.f32.mrf.mxu0
      %v1714 = vadd.f32 %v1196, %v1713
      %1715 = vmatprep.mubr.f32.mxu0 0.0
      %1716 = vmatmul.mubr.f32.gmra.mxu0 %v1308
      %v1717 = vpop.f32.mrf.mxu0
      %v1718 = vadd.f32 %v1192, %v1717
      %v1719 = vpop.f32.mrf.mxu0
      %v1720 = vadd.f32 %v1196, %v1719
      %1721 = vmatprep.mubr.f32.mxu0 0.0
      %1722 = vmatmul.mubr.f32.gmra.mxu0 %v1311
      %v1723 = vpop.f32.mrf.mxu0
      %v1724 = vadd.f32 %v1192, %v1723
      %v1725 = vpop.f32.mrf.mxu0
      %v1726 = vadd.f32 %v1196, %v1725
      %1727 = vmatprep.mubr.f32.mxu0 0.0
      %1728 = vmatmul.mubr.f32.gmra.mxu0 %v1314
      %v1729 = vpop.f32.mrf.mxu0
      %v1730 = vadd.f32 %v1192, %v1729
      %v1731 = vpop.f32.mrf.mxu0
      %v1732 = vadd.f32 %v1196, %v1731
      %1733 = vmatprep.mubr.f32.mxu0 0.0
      %1734 = vmatmul.mubr.f32.gmra.mxu0 %v1317
      %v1735 = vpop.f32.mrf.mxu0
      %v1736 = vadd.f32 %v1192, %v1735
      %v1737 = vpop.f32.mrf.mxu0
      %v1738 = vadd.f32 %v1196, %v1737
      %1739 = vmatprep.mubr.f32.mxu0 0.0
      %1740 = vmatmul.mubr.f32.gmra.mxu0 %v1320
      %v1741 = vpop.f32.mrf.mxu0
      %v1742 = vadd.f32 %v1192, %v1741
      %v1743 = vpop.f32.mrf.mxu0
      %v1744 = vadd.f32 %v1196, %v1743
      %1745 = vmatprep.mubr.f32.mxu0 0.0
      %1746 = vmatmul.mubr.f32.gmra.mxu0 %v1323
      %v1747 = vpop.f32.mrf.mxu0
      %v1748 = vadd.f32 %v1192, %v1747
      %v1749 = vpop.f32.mrf.mxu0
      %v1750 = vadd.f32 %v1196, %v1749
      %1751 = vmatprep.mubr.f32.mxu0 0.0
      %1752 = vmatmul.mubr.f32.gmra.mxu0 %v1326
      %v1753 = vpop.f32.mrf.mxu0
      %v1754 = vadd.f32 %v1192, %v1753
      %v1755 = vpop.f32.mrf.mxu0
      %v1756 = vadd.f32 %v1196, %v1755
      %1757 = vmatprep.mubr.f32.mxu0 0.0
      %1758 = vmatmul.mubr.f32.gmra.mxu0 %v1329
      %v1759 = vpop.f32.mrf.mxu0
      %v1760 = vadd.f32 %v1192, %v1759
      %v1761 = vpop.f32.mrf.mxu0
      %v1762 = vadd.f32 %v1196, %v1761
      %1763 = vmatprep.mubr.f32.mxu0 0.0
      %1764 = vmatmul.mubr.f32.gmra.mxu0 %v1332
      %v1765 = vpop.f32.mrf.mxu0
      %v1766 = vadd.f32 %v1192, %v1765
      %v1767 = vpop.f32.mrf.mxu0
      %v1768 = vadd.f32 %v1196, %v1767
      %1769 = vmatprep.mubr.f32.mxu0 0.0
      %1770 = vmatmul.mubr.f32.gmra.mxu0 %v1335
      %v1771 = vpop.f32.mrf.mxu0
      %v1772 = vadd.f32 %v1192, %v1771
      %v1773 = vpop.f32.mrf.mxu0
      %v1774 = vadd.f32 %v1196, %v1773
      %1775 = vmatprep.mubr.f32.mxu0 0.0
      %1776 = vmatmul.mubr.f32.gmra.mxu0 %v1338
      %v1777 = vpop.f32.mrf.mxu0
      %v1778 = vadd.f32 %v1192, %v1777
      %v1779 = vpop.f32.mrf.mxu0
      %v1780 = vadd.f32 %v1196, %v1779
      %1781 = vdwg.mxu0
      %1782 = vmatprep.subr.mxu0 0.0
      %1783 = vmatpush1.msra.mxu0 0.0
      %1784 = vmatprep.subr.mxu0 0.0
      %1785 = vmatpush1.msra.mxu0 0.0
      %1786 = vmatprep.subr.mxu0 0.0
      %1787 = vmatpush1.msra.mxu0 0.0
      %1788 = vmatprep.subr.mxu0 0.0
      %1789 = vmatpush1.msra.mxu0 0.0
      %1790 = vmatprep.subr.mxu0 0.0
      %1791 = vmatpush1.msra.mxu0 0.0
      %1792 = vmatprep.subr.mxu0 0.0
      %1793 = vmatpush1.msra.mxu0 0.0
      %1794 = vmatprep.subr.mxu0 0.0
      %1795 = vmatpush1.msra.mxu0 0.0
      %1796 = vmatprep.subr.mxu0 0.0
      %1797 = vmatpush1.msra.mxu0 0.0
      %1798 = vmatprep.subr.mxu0 %v1166
      %1799 = vmatpush1.msra.mxu0 %v1165
      %1800 = vmatprep.subr.mxu0 %v1150
      %1801 = vmatpush1.msra.mxu0 %v1149
      %1802 = vmatprep.subr.mxu0 %v1134
      %1803 = vmatpush1.msra.mxu0 %v1133
      %1804 = vmatprep.subr.mxu0 %v1118
      %1805 = vmatpush1.msra.mxu0 %v1117
      %1806 = vmatprep.subr.mxu0 %v1102
      %1807 = vmatpush1.msra.mxu0 %v1101
      %1808 = vmatprep.subr.mxu0 %v1086
      %1809 = vmatpush1.msra.mxu0 %v1085
      %1810 = vmatprep.subr.mxu0 %v1070
      %1811 = vmatpush1.msra.mxu0 %v1069
      %1812 = vmatprep.subr.mxu0 %v1054
      %1813 = vmatpush1.msra.mxu0 %v1053
      %1814 = vmatprep.subr.mxu0 0.0
      %1815 = vmatpush2.msra.mxu0 0.0
      %1816 = vmatprep.subr.mxu0 0.0
      %1817 = vmatpush2.msra.mxu0 0.0
      %1818 = vmatprep.subr.mxu0 0.0
      %1819 = vmatpush2.msra.mxu0 0.0
      %1820 = vmatprep.subr.mxu0 0.0
      %1821 = vmatpush2.msra.mxu0 0.0
      %1822 = vmatprep.subr.mxu0 0.0
      %1823 = vmatpush2.msra.mxu0 0.0
      %1824 = vmatprep.subr.mxu0 0.0
      %1825 = vmatpush2.msra.mxu0 0.0
      %1826 = vmatprep.subr.mxu0 0.0
      %1827 = vmatpush2.msra.mxu0 0.0
      %1828 = vmatprep.subr.mxu0 0.0
      %1829 = vmatpush2.msra.mxu0 0.0
      %1830 = vmatprep.subr.mxu0 0.0
      %1831 = vmatpush2.msra.mxu0 0.0
      %1832 = vmatprep.subr.mxu0 0.0
      %1833 = vmatpush2.msra.mxu0 0.0
      %1834 = vmatprep.subr.mxu0 0.0
      %1835 = vmatpush2.msra.mxu0 0.0
      %1836 = vmatprep.subr.mxu0 0.0
      %1837 = vmatpush2.msra.mxu0 0.0
      %1838 = vmatprep.subr.mxu0 0.0
      %1839 = vmatpush2.msra.mxu0 0.0
      %1840 = vmatprep.subr.mxu0 0.0
      %1841 = vmatpush2.msra.mxu0 0.0
      %1842 = vmatprep.subr.mxu0 0.0
      %1843 = vmatpush2.msra.mxu0 0.0
      %1844 = vmatprep.subr.mxu0 0.0
      %1845 = vmatpush2.msra.mxu0 0.0
      %1846 = vmatprep.mubr.f32.mxu0 0.0
      %1847 = vmatmul.mubr.f32.gmra.mxu0 %v1263
      %v1848 = vpop.f32.mrf.mxu0
      %v1849 = vadd.f32 %v1200, %v1848
      %v1850 = vpop.f32.mrf.mxu0
      %v1851 = vadd.f32 %v1204, %v1850
      %1852 = vmatprep.mubr.f32.mxu0 0.0
      %1853 = vmatmul.mubr.f32.gmra.mxu0 %v1266
      %v1854 = vpop.f32.mrf.mxu0
      %v1855 = vadd.f32 %v1200, %v1854
      %v1856 = vpop.f32.mrf.mxu0
      %v1857 = vadd.f32 %v1204, %v1856
      %1858 = vmatprep.mubr.f32.mxu0 0.0
      %1859 = vmatmul.mubr.f32.gmra.mxu0 %v1269
      %v1860 = vpop.f32.mrf.mxu0
      %v1861 = vadd.f32 %v1200, %v1860
      %v1862 = vpop.f32.mrf.mxu0
      %v1863 = vadd.f32 %v1204, %v1862
      %1864 = vmatprep.mubr.f32.mxu0 0.0
      %1865 = vmatmul.mubr.f32.gmra.mxu0 %v1272
      %v1866 = vpop.f32.mrf.mxu0
      %v1867 = vadd.f32 %v1200, %v1866
      %v1868 = vpop.f32.mrf.mxu0
      %v1869 = vadd.f32 %v1204, %v1868
      %1870 = vmatprep.mubr.f32.mxu0 0.0
      %1871 = vmatmul.mubr.f32.gmra.mxu0 %v1275
      %v1872 = vpop.f32.mrf.mxu0
      %v1873 = vadd.f32 %v1200, %v1872
      %v1874 = vpop.f32.mrf.mxu0
      %v1875 = vadd.f32 %v1204, %v1874
      %1876 = vmatprep.mubr.f32.mxu0 0.0
      %1877 = vmatmul.mubr.f32.gmra.mxu0 %v1278
      %v1878 = vpop.f32.mrf.mxu0
      %v1879 = vadd.f32 %v1200, %v1878
      %v1880 = vpop.f32.mrf.mxu0
      %v1881 = vadd.f32 %v1204, %v1880
      %1882 = vmatprep.mubr.f32.mxu0 0.0
      %1883 = vmatmul.mubr.f32.gmra.mxu0 %v1281
      %v1884 = vpop.f32.mrf.mxu0
      %v1885 = vadd.f32 %v1200, %v1884
      %v1886 = vpop.f32.mrf.mxu0
      %v1887 = vadd.f32 %v1204, %v1886
      %1888 = vmatprep.mubr.f32.mxu0 0.0
      %1889 = vmatmul.mubr.f32.gmra.mxu0 %v1284
      %v1890 = vpop.f32.mrf.mxu0
      %v1891 = vadd.f32 %v1200, %v1890
      %v1892 = vpop.f32.mrf.mxu0
      %v1893 = vadd.f32 %v1204, %v1892
      %1894 = vmatprep.mubr.f32.mxu0 0.0
      %1895 = vmatmul.mubr.f32.gmra.mxu0 %v1287
      %v1896 = vpop.f32.mrf.mxu0
      %v1897 = vadd.f32 %v1200, %v1896
      %v1898 = vpop.f32.mrf.mxu0
      %v1899 = vadd.f32 %v1204, %v1898
      %1900 = vmatprep.mubr.f32.mxu0 0.0
      %1901 = vmatmul.mubr.f32.gmra.mxu0 %v1290
      %v1902 = vpop.f32.mrf.mxu0
      %v1903 = vadd.f32 %v1200, %v1902
      %v1904 = vpop.f32.mrf.mxu0
      %v1905 = vadd.f32 %v1204, %v1904
      %1906 = vmatprep.mubr.f32.mxu0 0.0
      %1907 = vmatmul.mubr.f32.gmra.mxu0 %v1293
      %v1908 = vpop.f32.mrf.mxu0
      %v1909 = vadd.f32 %v1200, %v1908
      %v1910 = vpop.f32.mrf.mxu0
      %v1911 = vadd.f32 %v1204, %v1910
      %1912 = vmatprep.mubr.f32.mxu0 0.0
      %1913 = vmatmul.mubr.f32.gmra.mxu0 %v1296
      %v1914 = vpop.f32.mrf.mxu0
      %v1915 = vadd.f32 %v1200, %v1914
      %v1916 = vpop.f32.mrf.mxu0
      %v1917 = vadd.f32 %v1204, %v1916
      %1918 = vmatprep.mubr.f32.mxu0 0.0
      %1919 = vmatmul.mubr.f32.gmra.mxu0 %v1299
      %v1920 = vpop.f32.mrf.mxu0
      %v1921 = vadd.f32 %v1200, %v1920
      %v1922 = vpop.f32.mrf.mxu0
      %v1923 = vadd.f32 %v1204, %v1922
      %1924 = vmatprep.mubr.f32.mxu0 0.0
      %1925 = vmatmul.mubr.f32.gmra.mxu0 %v1302
      %v1926 = vpop.f32.mrf.mxu0
      %v1927 = vadd.f32 %v1200, %v1926
      %v1928 = vpop.f32.mrf.mxu0
      %v1929 = vadd.f32 %v1204, %v1928
      %1930 = vmatprep.mubr.f32.mxu0 0.0
      %1931 = vmatmul.mubr.f32.gmra.mxu0 %v1305
      %v1932 = vpop.f32.mrf.mxu0
      %v1933 = vadd.f32 %v1200, %v1932
      %v1934 = vpop.f32.mrf.mxu0
      %v1935 = vadd.f32 %v1204, %v1934
      %1936 = vmatprep.mubr.f32.mxu0 0.0
      %1937 = vmatmul.mubr.f32.gmra.mxu0 %v1308
      %v1938 = vpop.f32.mrf.mxu0
      %v1939 = vadd.f32 %v1200, %v1938
      %v1940 = vpop.f32.mrf.mxu0
      %v1941 = vadd.f32 %v1204, %v1940
      %1942 = vmatprep.mubr.f32.mxu0 0.0
      %1943 = vmatmul.mubr.f32.gmra.mxu0 %v1311
      %v1944 = vpop.f32.mrf.mxu0
      %v1945 = vadd.f32 %v1200, %v1944
      %v1946 = vpop.f32.mrf.mxu0
      %v1947 = vadd.f32 %v1204, %v1946
      %1948 = vmatprep.mubr.f32.mxu0 0.0
      %1949 = vmatmul.mubr.f32.gmra.mxu0 %v1314
      %v1950 = vpop.f32.mrf.mxu0
      %v1951 = vadd.f32 %v1200, %v1950
      %v1952 = vpop.f32.mrf.mxu0
      %v1953 = vadd.f32 %v1204, %v1952
      %1954 = vmatprep.mubr.f32.mxu0 0.0
      %1955 = vmatmul.mubr.f32.gmra.mxu0 %v1317
      %v1956 = vpop.f32.mrf.mxu0
      %v1957 = vadd.f32 %v1200, %v1956
      %v1958 = vpop.f32.mrf.mxu0
      %v1959 = vadd.f32 %v1204, %v1958
      %1960 = vmatprep.mubr.f32.mxu0 0.0
      %1961 = vmatmul.mubr.f32.gmra.mxu0 %v1320
      %v1962 = vpop.f32.mrf.mxu0
      %v1963 = vadd.f32 %v1200, %v1962
      %v1964 = vpop.f32.mrf.mxu0
      %v1965 = vadd.f32 %v1204, %v1964
      %1966 = vmatprep.mubr.f32.mxu0 0.0
      %1967 = vmatmul.mubr.f32.gmra.mxu0 %v1323
      %v1968 = vpop.f32.mrf.mxu0
      %v1969 = vadd.f32 %v1200, %v1968
      %v1970 = vpop.f32.mrf.mxu0
      %v1971 = vadd.f32 %v1204, %v1970
      %1972 = vmatprep.mubr.f32.mxu0 0.0
      %1973 = vmatmul.mubr.f32.gmra.mxu0 %v1326
      %v1974 = vpop.f32.mrf.mxu0
      %v1975 = vadd.f32 %v1200, %v1974
      %v1976 = vpop.f32.mrf.mxu0
      %v1977 = vadd.f32 %v1204, %v1976
      %1978 = vmatprep.mubr.f32.mxu0 0.0
      %1979 = vmatmul.mubr.f32.gmra.mxu0 %v1329
      %v1980 = vpop.f32.mrf.mxu0
      %v1981 = vadd.f32 %v1200, %v1980
      %v1982 = vpop.f32.mrf.mxu0
      %v1983 = vadd.f32 %v1204, %v1982
      %1984 = vmatprep.mubr.f32.mxu0 0.0
      %1985 = vmatmul.mubr.f32.gmra.mxu0 %v1332
      %v1986 = vpop.f32.mrf.mxu0
      %v1987 = vadd.f32 %v1200, %v1986
      %v1988 = vpop.f32.mrf.mxu0
      %v1989 = vadd.f32 %v1204, %v1988
      %1990 = vmatprep.mubr.f32.mxu0 0.0
      %1991 = vmatmul.mubr.f32.gmra.mxu0 %v1335
      %v1992 = vpop.f32.mrf.mxu0
      %v1993 = vadd.f32 %v1200, %v1992
      %v1994 = vpop.f32.mrf.mxu0
      %v1995 = vadd.f32 %v1204, %v1994
      %1996 = vmatprep.mubr.f32.mxu0 0.0
      %1997 = vmatmul.mubr.f32.gmra.mxu0 %v1338
      %v1998 = vpop.f32.mrf.mxu0
      %v1999 = vadd.f32 %v1200, %v1998
      %v2000 = vpop.f32.mrf.mxu0
      %v2001 = vadd.f32 %v1204, %v2000
      %2002 = vdwg.mxu0
      %2003 = vmatprep.subr.mxu0 0.0
      %2004 = vmatpush1.msra.mxu0 0.0
      %2005 = vmatprep.subr.mxu0 0.0
      %2006 = vmatpush1.msra.mxu0 0.0
      %2007 = vmatprep.subr.mxu0 0.0
      %2008 = vmatpush1.msra.mxu0 0.0
      %2009 = vmatprep.subr.mxu0 0.0
      %2010 = vmatpush1.msra.mxu0 0.0
      %2011 = vmatprep.subr.mxu0 0.0
      %2012 = vmatpush1.msra.mxu0 0.0
      %2013 = vmatprep.subr.mxu0 0.0
      %2014 = vmatpush1.msra.mxu0 0.0
      %2015 = vmatprep.subr.mxu0 0.0
      %2016 = vmatpush1.msra.mxu0 0.0
      %2017 = vmatprep.subr.mxu0 0.0
      %2018 = vmatpush1.msra.mxu0 0.0
      %2019 = vmatprep.subr.mxu0 %v1168
      %2020 = vmatpush1.msra.mxu0 %v1167
      %2021 = vmatprep.subr.mxu0 %v1152
      %2022 = vmatpush1.msra.mxu0 %v1151
      %2023 = vmatprep.subr.mxu0 %v1136
      %2024 = vmatpush1.msra.mxu0 %v1135
      %2025 = vmatprep.subr.mxu0 %v1120
      %2026 = vmatpush1.msra.mxu0 %v1119
      %2027 = vmatprep.subr.mxu0 %v1104
      %2028 = vmatpush1.msra.mxu0 %v1103
      %2029 = vmatprep.subr.mxu0 %v1088
      %2030 = vmatpush1.msra.mxu0 %v1087
      %2031 = vmatprep.subr.mxu0 %v1072
      %2032 = vmatpush1.msra.mxu0 %v1071
      %2033 = vmatprep.subr.mxu0 %v1056
      %2034 = vmatpush1.msra.mxu0 %v1055
      %2035 = vmatprep.subr.mxu0 0.0
      %2036 = vmatpush2.msra.mxu0 0.0
      %2037 = vmatprep.subr.mxu0 0.0
      %2038 = vmatpush2.msra.mxu0 0.0
      %2039 = vmatprep.subr.mxu0 0.0
      %2040 = vmatpush2.msra.mxu0 0.0
      %2041 = vmatprep.subr.mxu0 0.0
      %2042 = vmatpush2.msra.mxu0 0.0
      %2043 = vmatprep.subr.mxu0 0.0
      %2044 = vmatpush2.msra.mxu0 0.0
      %2045 = vmatprep.subr.mxu0 0.0
      %2046 = vmatpush2.msra.mxu0 0.0
      %2047 = vmatprep.subr.mxu0 0.0
      %2048 = vmatpush2.msra.mxu0 0.0
      %2049 = vmatprep.subr.mxu0 0.0
      %2050 = vmatpush2.msra.mxu0 0.0
      %2051 = vmatprep.subr.mxu0 0.0
      %2052 = vmatpush2.msra.mxu0 0.0
      %2053 = vmatprep.subr.mxu0 0.0
      %2054 = vmatpush2.msra.mxu0 0.0
      %2055 = vmatprep.subr.mxu0 0.0
      %2056 = vmatpush2.msra.mxu0 0.0
      %2057 = vmatprep.subr.mxu0 0.0
      %2058 = vmatpush2.msra.mxu0 0.0
      %2059 = vmatprep.subr.mxu0 0.0
      %2060 = vmatpush2.msra.mxu0 0.0
      %2061 = vmatprep.subr.mxu0 0.0
      %2062 = vmatpush2.msra.mxu0 0.0
      %2063 = vmatprep.subr.mxu0 0.0
      %2064 = vmatpush2.msra.mxu0 0.0
      %2065 = vmatprep.subr.mxu0 0.0
      %2066 = vmatpush2.msra.mxu0 0.0
      %2067 = vmatprep.mubr.f32.mxu0 0.0
      %2068 = vmatmul.mubr.f32.gmra.mxu0 %v1263
      %v2069 = vpop.f32.mrf.mxu0
      %v2070 = vadd.f32 %v1208, %v2069
      %v2071 = vpop.f32.mrf.mxu0
      %v2072 = vadd.f32 %v1212, %v2071
      %2073 = vmatprep.mubr.f32.mxu0 0.0
      %2074 = vmatmul.mubr.f32.gmra.mxu0 %v1266
      %v2075 = vpop.f32.mrf.mxu0
      %v2076 = vadd.f32 %v1208, %v2075
      %v2077 = vpop.f32.mrf.mxu0
      %v2078 = vadd.f32 %v1212, %v2077
      %2079 = vmatprep.mubr.f32.mxu0 0.0
      %2080 = vmatmul.mubr.f32.gmra.mxu0 %v1269
      %v2081 = vpop.f32.mrf.mxu0
      %v2082 = vadd.f32 %v1208, %v2081
      %v2083 = vpop.f32.mrf.mxu0
      %v2084 = vadd.f32 %v1212, %v2083
      %2085 = vmatprep.mubr.f32.mxu0 0.0
      %2086 = vmatmul.mubr.f32.gmra.mxu0 %v1272
      %v2087 = vpop.f32.mrf.mxu0
      %v2088 = vadd.f32 %v1208, %v2087
      %v2089 = vpop.f32.mrf.mxu0
      %v2090 = vadd.f32 %v1212, %v2089
      %2091 = vmatprep.mubr.f32.mxu0 0.0
      %2092 = vmatmul.mubr.f32.gmra.mxu0 %v1275
      %v2093 = vpop.f32.mrf.mxu0
      %v2094 = vadd.f32 %v1208, %v2093
      %v2095 = vpop.f32.mrf.mxu0
      %v2096 = vadd.f32 %v1212, %v2095
      %2097 = vmatprep.mubr.f32.mxu0 0.0
      %2098 = vmatmul.mubr.f32.gmra.mxu0 %v1278
      %v2099 = vpop.f32.mrf.mxu0
      %v2100 = vadd.f32 %v1208, %v2099
      %v2101 = vpop.f32.mrf.mxu0
      %v2102 = vadd.f32 %v1212, %v2101
      %2103 = vmatprep.mubr.f32.mxu0 0.0
      %2104 = vmatmul.mubr.f32.gmra.mxu0 %v1281
      %v2105 = vpop.f32.mrf.mxu0
      %v2106 = vadd.f32 %v1208, %v2105
      %v2107 = vpop.f32.mrf.mxu0
      %v2108 = vadd.f32 %v1212, %v2107
      %2109 = vmatprep.mubr.f32.mxu0 0.0
      %2110 = vmatmul.mubr.f32.gmra.mxu0 %v1284
      %v2111 = vpop.f32.mrf.mxu0
      %v2112 = vadd.f32 %v1208, %v2111
      %v2113 = vpop.f32.mrf.mxu0
      %v2114 = vadd.f32 %v1212, %v2113
      %2115 = vmatprep.mubr.f32.mxu0 0.0
      %2116 = vmatmul.mubr.f32.gmra.mxu0 %v1287
      %v2117 = vpop.f32.mrf.mxu0
      %v2118 = vadd.f32 %v1208, %v2117
      %v2119 = vpop.f32.mrf.mxu0
      %v2120 = vadd.f32 %v1212, %v2119
      %2121 = vmatprep.mubr.f32.mxu0 0.0
      %2122 = vmatmul.mubr.f32.gmra.mxu0 %v1290
      %v2123 = vpop.f32.mrf.mxu0
      %v2124 = vadd.f32 %v1208, %v2123
      %v2125 = vpop.f32.mrf.mxu0
      %v2126 = vadd.f32 %v1212, %v2125
      %2127 = vmatprep.mubr.f32.mxu0 0.0
      %2128 = vmatmul.mubr.f32.gmra.mxu0 %v1293
      %v2129 = vpop.f32.mrf.mxu0
      %v2130 = vadd.f32 %v1208, %v2129
      %v2131 = vpop.f32.mrf.mxu0
      %v2132 = vadd.f32 %v1212, %v2131
      %2133 = vmatprep.mubr.f32.mxu0 0.0
      %2134 = vmatmul.mubr.f32.gmra.mxu0 %v1296
      %v2135 = vpop.f32.mrf.mxu0
      %v2136 = vadd.f32 %v1208, %v2135
      %v2137 = vpop.f32.mrf.mxu0
      %v2138 = vadd.f32 %v1212, %v2137
      %2139 = vmatprep.mubr.f32.mxu0 0.0
      %2140 = vmatmul.mubr.f32.gmra.mxu0 %v1299
      %v2141 = vpop.f32.mrf.mxu0
      %v2142 = vadd.f32 %v1208, %v2141
      %v2143 = vpop.f32.mrf.mxu0
      %v2144 = vadd.f32 %v1212, %v2143
      %2145 = vmatprep.mubr.f32.mxu0 0.0
      %2146 = vmatmul.mubr.f32.gmra.mxu0 %v1302
      %v2147 = vpop.f32.mrf.mxu0
      %v2148 = vadd.f32 %v1208, %v2147
      %v2149 = vpop.f32.mrf.mxu0
      %v2150 = vadd.f32 %v1212, %v2149
      %2151 = vmatprep.mubr.f32.mxu0 0.0
      %2152 = vmatmul.mubr.f32.gmra.mxu0 %v1305
      %v2153 = vpop.f32.mrf.mxu0
      %v2154 = vadd.f32 %v1208, %v2153
      %v2155 = vpop.f32.mrf.mxu0
      %v2156 = vadd.f32 %v1212, %v2155
      %2157 = vmatprep.mubr.f32.mxu0 0.0
      %2158 = vmatmul.mubr.f32.gmra.mxu0 %v1308
      %v2159 = vpop.f32.mrf.mxu0
      %v2160 = vadd.f32 %v1208, %v2159
      %v2161 = vpop.f32.mrf.mxu0
      %v2162 = vadd.f32 %v1212, %v2161
      %2163 = vmatprep.mubr.f32.mxu0 0.0
      %2164 = vmatmul.mubr.f32.gmra.mxu0 %v1311
      %v2165 = vpop.f32.mrf.mxu0
      %v2166 = vadd.f32 %v1208, %v2165
      %v2167 = vpop.f32.mrf.mxu0
      %v2168 = vadd.f32 %v1212, %v2167
      %2169 = vmatprep.mubr.f32.mxu0 0.0
      %2170 = vmatmul.mubr.f32.gmra.mxu0 %v1314
      %v2171 = vpop.f32.mrf.mxu0
      %v2172 = vadd.f32 %v1208, %v2171
      %v2173 = vpop.f32.mrf.mxu0
      %v2174 = vadd.f32 %v1212, %v2173
      %2175 = vmatprep.mubr.f32.mxu0 0.0
      %2176 = vmatmul.mubr.f32.gmra.mxu0 %v1317
      %v2177 = vpop.f32.mrf.mxu0
      %v2178 = vadd.f32 %v1208, %v2177
      %v2179 = vpop.f32.mrf.mxu0
      %v2180 = vadd.f32 %v1212, %v2179
      %2181 = vmatprep.mubr.f32.mxu0 0.0
      %2182 = vmatmul.mubr.f32.gmra.mxu0 %v1320
      %v2183 = vpop.f32.mrf.mxu0
      %v2184 = vadd.f32 %v1208, %v2183
      %v2185 = vpop.f32.mrf.mxu0
      %v2186 = vadd.f32 %v1212, %v2185
      %2187 = vmatprep.mubr.f32.mxu0 0.0
      %2188 = vmatmul.mubr.f32.gmra.mxu0 %v1323
      %v2189 = vpop.f32.mrf.mxu0
      %v2190 = vadd.f32 %v1208, %v2189
      %v2191 = vpop.f32.mrf.mxu0
      %v2192 = vadd.f32 %v1212, %v2191
      %2193 = vmatprep.mubr.f32.mxu0 0.0
      %2194 = vmatmul.mubr.f32.gmra.mxu0 %v1326
      %v2195 = vpop.f32.mrf.mxu0
      %v2196 = vadd.f32 %v1208, %v2195
      %v2197 = vpop.f32.mrf.mxu0
      %v2198 = vadd.f32 %v1212, %v2197
      %2199 = vmatprep.mubr.f32.mxu0 0.0
      %2200 = vmatmul.mubr.f32.gmra.mxu0 %v1329
      %v2201 = vpop.f32.mrf.mxu0
      %v2202 = vadd.f32 %v1208, %v2201
      %v2203 = vpop.f32.mrf.mxu0
      %v2204 = vadd.f32 %v1212, %v2203
      %2205 = vmatprep.mubr.f32.mxu0 0.0
      %2206 = vmatmul.mubr.f32.gmra.mxu0 %v1332
      %v2207 = vpop.f32.mrf.mxu0
      %v2208 = vadd.f32 %v1208, %v2207
      %v2209 = vpop.f32.mrf.mxu0
      %v2210 = vadd.f32 %v1212, %v2209
      %2211 = vmatprep.mubr.f32.mxu0 0.0
      %2212 = vmatmul.mubr.f32.gmra.mxu0 %v1335
      %v2213 = vpop.f32.mrf.mxu0
      %v2214 = vadd.f32 %v1208, %v2213
      %v2215 = vpop.f32.mrf.mxu0
      %v2216 = vadd.f32 %v1212, %v2215
      %2217 = vmatprep.mubr.f32.mxu0 0.0
      %2218 = vmatmul.mubr.f32.gmra.mxu0 %v1338
      %v2219 = vpop.f32.mrf.mxu0
      %v2220 = vadd.f32 %v1208, %v2219
      %v2221 = vpop.f32.mrf.mxu0
      %v2222 = vadd.f32 %v1212, %v2221
      %2223 = vdwg.mxu0
      %2224 = vmatprep.subr.mxu0 0.0
      %2225 = vmatpush1.msra.mxu0 0.0
      %2226 = vmatprep.subr.mxu0 0.0
      %2227 = vmatpush1.msra.mxu0 0.0
      %2228 = vmatprep.subr.mxu0 0.0
      %2229 = vmatpush1.msra.mxu0 0.0
      %2230 = vmatprep.subr.mxu0 0.0
      %2231 = vmatpush1.msra.mxu0 0.0
      %2232 = vmatprep.subr.mxu0 0.0
      %2233 = vmatpush1.msra.mxu0 0.0
      %2234 = vmatprep.subr.mxu0 0.0
      %2235 = vmatpush1.msra.mxu0 0.0
      %2236 = vmatprep.subr.mxu0 0.0
      %2237 = vmatpush1.msra.mxu0 0.0
      %2238 = vmatprep.subr.mxu0 0.0
      %2239 = vmatpush1.msra.mxu0 0.0
      %2240 = vmatprep.subr.mxu0 %v1170
      %2241 = vmatpush1.msra.mxu0 %v1169
      %2242 = vmatprep.subr.mxu0 %v1154
      %2243 = vmatpush1.msra.mxu0 %v1153
      %2244 = vmatprep.subr.mxu0 %v1138
      %2245 = vmatpush1.msra.mxu0 %v1137
      %2246 = vmatprep.subr.mxu0 %v1122
      %2247 = vmatpush1.msra.mxu0 %v1121
      %2248 = vmatprep.subr.mxu0 %v1106
      %2249 = vmatpush1.msra.mxu0 %v1105
      %2250 = vmatprep.subr.mxu0 %v1090
      %2251 = vmatpush1.msra.mxu0 %v1089
      %2252 = vmatprep.subr.mxu0 %v1074
      %2253 = vmatpush1.msra.mxu0 %v1073
      %2254 = vmatprep.subr.mxu0 %v1058
      %2255 = vmatpush1.msra.mxu0 %v1057
      %2256 = vmatprep.subr.mxu0 0.0
      %2257 = vmatpush2.msra.mxu0 0.0
      %2258 = vmatprep.subr.mxu0 0.0
      %2259 = vmatpush2.msra.mxu0 0.0
      %2260 = vmatprep.subr.mxu0 0.0
      %2261 = vmatpush2.msra.mxu0 0.0
      %2262 = vmatprep.subr.mxu0 0.0
      %2263 = vmatpush2.msra.mxu0 0.0
      %2264 = vmatprep.subr.mxu0 0.0
      %2265 = vmatpush2.msra.mxu0 0.0
      %2266 = vmatprep.subr.mxu0 0.0
      %2267 = vmatpush2.msra.mxu0 0.0
      %2268 = vmatprep.subr.mxu0 0.0
      %2269 = vmatpush2.msra.mxu0 0.0
      %2270 = vmatprep.subr.mxu0 0.0
      %2271 = vmatpush2.msra.mxu0 0.0
      %2272 = vmatprep.subr.mxu0 0.0
      %2273 = vmatpush2.msra.mxu0 0.0
      %2274 = vmatprep.subr.mxu0 0.0
      %2275 = vmatpush2.msra.mxu0 0.0
      %2276 = vmatprep.subr.mxu0 0.0
      %2277 = vmatpush2.msra.mxu0 0.0
      %2278 = vmatprep.subr.mxu0 0.0
      %2279 = vmatpush2.msra.mxu0 0.0
      %2280 = vmatprep.subr.mxu0 0.0
      %2281 = vmatpush2.msra.mxu0 0.0
      %2282 = vmatprep.subr.mxu0 0.0
      %2283 = vmatpush2.msra.mxu0 0.0
      %2284 = vmatprep.subr.mxu0 0.0
      %2285 = vmatpush2.msra.mxu0 0.0
      %2286 = vmatprep.subr.mxu0 0.0
      %2287 = vmatpush2.msra.mxu0 0.0
      %2288 = vmatprep.mubr.f32.mxu0 0.0
      %2289 = vmatmul.mubr.f32.gmra.mxu0 %v1263
      %v2290 = vpop.f32.mrf.mxu0
      %v2291 = vadd.f32 %v1216, %v2290
      %v2292 = vpop.f32.mrf.mxu0
      %v2293 = vadd.f32 %v1220, %v2292
      %2294 = vmatprep.mubr.f32.mxu0 0.0
      %2295 = vmatmul.mubr.f32.gmra.mxu0 %v1266
      %v2296 = vpop.f32.mrf.mxu0
      %v2297 = vadd.f32 %v1216, %v2296
      %v2298 = vpop.f32.mrf.mxu0
      %v2299 = vadd.f32 %v1220, %v2298
      %2300 = vmatprep.mubr.f32.mxu0 0.0
      %2301 = vmatmul.mubr.f32.gmra.mxu0 %v1269
      %v2302 = vpop.f32.mrf.mxu0
      %v2303 = vadd.f32 %v1216, %v2302
      %v2304 = vpop.f32.mrf.mxu0
      %v2305 = vadd.f32 %v1220, %v2304
      %2306 = vmatprep.mubr.f32.mxu0 0.0
      %2307 = vmatmul.mubr.f32.gmra.mxu0 %v1272
      %v2308 = vpop.f32.mrf.mxu0
      %v2309 = vadd.f32 %v1216, %v2308
      %v2310 = vpop.f32.mrf.mxu0
      %v2311 = vadd.f32 %v1220, %v2310
      %2312 = vmatprep.mubr.f32.mxu0 0.0
      %2313 = vmatmul.mubr.f32.gmra.mxu0 %v1275
      %v2314 = vpop.f32.mrf.mxu0
      %v2315 = vadd.f32 %v1216, %v2314
      %v2316 = vpop.f32.mrf.mxu0
      %v2317 = vadd.f32 %v1220, %v2316
      %2318 = vmatprep.mubr.f32.mxu0 0.0
      %2319 = vmatmul.mubr.f32.gmra.mxu0 %v1278
      %v2320 = vpop.f32.mrf.mxu0
      %v2321 = vadd.f32 %v1216, %v2320
      %v2322 = vpop.f32.mrf.mxu0
      %v2323 = vadd.f32 %v1220, %v2322
      %2324 = vmatprep.mubr.f32.mxu0 0.0
      %2325 = vmatmul.mubr.f32.gmra.mxu0 %v1281
      %v2326 = vpop.f32.mrf.mxu0
      %v2327 = vadd.f32 %v1216, %v2326
      %v2328 = vpop.f32.mrf.mxu0
      %v2329 = vadd.f32 %v1220, %v2328
      %2330 = vmatprep.mubr.f32.mxu0 0.0
      %2331 = vmatmul.mubr.f32.gmra.mxu0 %v1284
      %v2332 = vpop.f32.mrf.mxu0
      %v2333 = vadd.f32 %v1216, %v2332
      %v2334 = vpop.f32.mrf.mxu0
      %v2335 = vadd.f32 %v1220, %v2334
      %2336 = vmatprep.mubr.f32.mxu0 0.0
      %2337 = vmatmul.mubr.f32.gmra.mxu0 %v1287
      %v2338 = vpop.f32.mrf.mxu0
      %v2339 = vadd.f32 %v1216, %v2338
      %v2340 = vpop.f32.mrf.mxu0
      %v2341 = vadd.f32 %v1220, %v2340
      %2342 = vmatprep.mubr.f32.mxu0 0.0
      %2343 = vmatmul.mubr.f32.gmra.mxu0 %v1290
      %v2344 = vpop.f32.mrf.mxu0
      %v2345 = vadd.f32 %v1216, %v2344
      %v2346 = vpop.f32.mrf.mxu0
      %v2347 = vadd.f32 %v1220, %v2346
      %2348 = vmatprep.mubr.f32.mxu0 0.0
      %2349 = vmatmul.mubr.f32.gmra.mxu0 %v1293
      %v2350 = vpop.f32.mrf.mxu0
      %v2351 = vadd.f32 %v1216, %v2350
      %v2352 = vpop.f32.mrf.mxu0
      %v2353 = vadd.f32 %v1220, %v2352
      %2354 = vmatprep.mubr.f32.mxu0 0.0
      %2355 = vmatmul.mubr.f32.gmra.mxu0 %v1296
      %v2356 = vpop.f32.mrf.mxu0
      %v2357 = vadd.f32 %v1216, %v2356
      %v2358 = vpop.f32.mrf.mxu0
      %v2359 = vadd.f32 %v1220, %v2358
      %2360 = vmatprep.mubr.f32.mxu0 0.0
      %2361 = vmatmul.mubr.f32.gmra.mxu0 %v1299
      %v2362 = vpop.f32.mrf.mxu0
      %v2363 = vadd.f32 %v1216, %v2362
      %v2364 = vpop.f32.mrf.mxu0
      %v2365 = vadd.f32 %v1220, %v2364
      %2366 = vmatprep.mubr.f32.mxu0 0.0
      %2367 = vmatmul.mubr.f32.gmra.mxu0 %v1302
      %v2368 = vpop.f32.mrf.mxu0
      %v2369 = vadd.f32 %v1216, %v2368
      %v2370 = vpop.f32.mrf.mxu0
      %v2371 = vadd.f32 %v1220, %v2370
      %2372 = vmatprep.mubr.f32.mxu0 0.0
      %2373 = vmatmul.mubr.f32.gmra.mxu0 %v1305
      %v2374 = vpop.f32.mrf.mxu0
      %v2375 = vadd.f32 %v1216, %v2374
      %v2376 = vpop.f32.mrf.mxu0
      %v2377 = vadd.f32 %v1220, %v2376
      %2378 = vmatprep.mubr.f32.mxu0 0.0
      %2379 = vmatmul.mubr.f32.gmra.mxu0 %v1308
      %v2380 = vpop.f32.mrf.mxu0
      %v2381 = vadd.f32 %v1216, %v2380
      %v2382 = vpop.f32.mrf.mxu0
      %v2383 = vadd.f32 %v1220, %v2382
      %2384 = vmatprep.mubr.f32.mxu0 0.0
      %2385 = vmatmul.mubr.f32.gmra.mxu0 %v1311
      %v2386 = vpop.f32.mrf.mxu0
      %v2387 = vadd.f32 %v1216, %v2386
      %v2388 = vpop.f32.mrf.mxu0
      %v2389 = vadd.f32 %v1220, %v2388
      %2390 = vmatprep.mubr.f32.mxu0 0.0
      %2391 = vmatmul.mubr.f32.gmra.mxu0 %v1314
      %v2392 = vpop.f32.mrf.mxu0
      %v2393 = vadd.f32 %v1216, %v2392
      %v2394 = vpop.f32.mrf.mxu0
      %v2395 = vadd.f32 %v1220, %v2394
      %2396 = vmatprep.mubr.f32.mxu0 0.0
      %2397 = vmatmul.mubr.f32.gmra.mxu0 %v1317
      %v2398 = vpop.f32.mrf.mxu0
      %v2399 = vadd.f32 %v1216, %v2398
      %v2400 = vpop.f32.mrf.mxu0
      %v2401 = vadd.f32 %v1220, %v2400
      %2402 = vmatprep.mubr.f32.mxu0 0.0
      %2403 = vmatmul.mubr.f32.gmra.mxu0 %v1320
      %v2404 = vpop.f32.mrf.mxu0
      %v2405 = vadd.f32 %v1216, %v2404
      %v2406 = vpop.f32.mrf.mxu0
      %v2407 = vadd.f32 %v1220, %v2406
      %2408 = vmatprep.mubr.f32.mxu0 0.0
      %2409 = vmatmul.mubr.f32.gmra.mxu0 %v1323
      %v2410 = vpop.f32.mrf.mxu0
      %v2411 = vadd.f32 %v1216, %v2410
      %v2412 = vpop.f32.mrf.mxu0
      %v2413 = vadd.f32 %v1220, %v2412
      %2414 = vmatprep.mubr.f32.mxu0 0.0
      %2415 = vmatmul.mubr.f32.gmra.mxu0 %v1326
      %v2416 = vpop.f32.mrf.mxu0
      %v2417 = vadd.f32 %v1216, %v2416
      %v2418 = vpop.f32.mrf.mxu0
      %v2419 = vadd.f32 %v1220, %v2418
      %2420 = vmatprep.mubr.f32.mxu0 0.0
      %2421 = vmatmul.mubr.f32.gmra.mxu0 %v1329
      %v2422 = vpop.f32.mrf.mxu0
      %v2423 = vadd.f32 %v1216, %v2422
      %v2424 = vpop.f32.mrf.mxu0
      %v2425 = vadd.f32 %v1220, %v2424
      %2426 = vmatprep.mubr.f32.mxu0 0.0
      %2427 = vmatmul.mubr.f32.gmra.mxu0 %v1332
      %v2428 = vpop.f32.mrf.mxu0
      %v2429 = vadd.f32 %v1216, %v2428
      %v2430 = vpop.f32.mrf.mxu0
      %v2431 = vadd.f32 %v1220, %v2430
      %2432 = vmatprep.mubr.f32.mxu0 0.0
      %2433 = vmatmul.mubr.f32.gmra.mxu0 %v1335
      %v2434 = vpop.f32.mrf.mxu0
      %v2435 = vadd.f32 %v1216, %v2434
      %v2436 = vpop.f32.mrf.mxu0
      %v2437 = vadd.f32 %v1220, %v2436
      %2438 = vmatprep.mubr.f32.mxu0 0.0
      %2439 = vmatmul.mubr.f32.gmra.mxu0 %v1338
      %v2440 = vpop.f32.mrf.mxu0
      %v2441 = vadd.f32 %v1216, %v2440
      %v2442 = vpop.f32.mrf.mxu0
      %v2443 = vadd.f32 %v1220, %v2442
      %2444 = vdwg.mxu0
      %2445 = vmatprep.subr.mxu0 0.0
      %2446 = vmatpush1.msra.mxu0 0.0
      %2447 = vmatprep.subr.mxu0 0.0
      %2448 = vmatpush1.msra.mxu0 0.0
      %2449 = vmatprep.subr.mxu0 0.0
      %2450 = vmatpush1.msra.mxu0 0.0
      %2451 = vmatprep.subr.mxu0 0.0
      %2452 = vmatpush1.msra.mxu0 0.0
      %2453 = vmatprep.subr.mxu0 0.0
      %2454 = vmatpush1.msra.mxu0 0.0
      %2455 = vmatprep.subr.mxu0 0.0
      %2456 = vmatpush1.msra.mxu0 0.0
      %2457 = vmatprep.subr.mxu0 0.0
      %2458 = vmatpush1.msra.mxu0 0.0
      %2459 = vmatprep.subr.mxu0 0.0
      %2460 = vmatpush1.msra.mxu0 0.0
      %2461 = vmatprep.subr.mxu0 %v1172
      %2462 = vmatpush1.msra.mxu0 %v1171
      %2463 = vmatprep.subr.mxu0 %v1156
      %2464 = vmatpush1.msra.mxu0 %v1155
      %2465 = vmatprep.subr.mxu0 %v1140
      %2466 = vmatpush1.msra.mxu0 %v1139
      %2467 = vmatprep.subr.mxu0 %v1124
      %2468 = vmatpush1.msra.mxu0 %v1123
      %2469 = vmatprep.subr.mxu0 %v1108
      %2470 = vmatpush1.msra.mxu0 %v1107
      %2471 = vmatprep.subr.mxu0 %v1092
      %2472 = vmatpush1.msra.mxu0 %v1091
      %2473 = vmatprep.subr.mxu0 %v1076
      %2474 = vmatpush1.msra.mxu0 %v1075
      %2475 = vmatprep.subr.mxu0 %v1060
      %2476 = vmatpush1.msra.mxu0 %v1059
      %2477 = vmatprep.subr.mxu0 0.0
      %2478 = vmatpush2.msra.mxu0 0.0
      %2479 = vmatprep.subr.mxu0 0.0
      %2480 = vmatpush2.msra.mxu0 0.0
      %2481 = vmatprep.subr.mxu0 0.0
      %2482 = vmatpush2.msra.mxu0 0.0
      %2483 = vmatprep.subr.mxu0 0.0
      %2484 = vmatpush2.msra.mxu0 0.0
      %2485 = vmatprep.subr.mxu0 0.0
      %2486 = vmatpush2.msra.mxu0 0.0
      %2487 = vmatprep.subr.mxu0 0.0
      %2488 = vmatpush2.msra.mxu0 0.0
      %2489 = vmatprep.subr.mxu0 0.0
      %2490 = vmatpush2.msra.mxu0 0.0
      %2491 = vmatprep.subr.mxu0 0.0
      %2492 = vmatpush2.msra.mxu0 0.0
      %2493 = vmatprep.subr.mxu0 0.0
      %2494 = vmatpush2.msra.mxu0 0.0
      %2495 = vmatprep.subr.mxu0 0.0
      %2496 = vmatpush2.msra.mxu0 0.0
      %2497 = vmatprep.subr.mxu0 0.0
      %2498 = vmatpush2.msra.mxu0 0.0
      %2499 = vmatprep.subr.mxu0 0.0
      %2500 = vmatpush2.msra.mxu0 0.0
      %2501 = vmatprep.subr.mxu0 0.0
      %2502 = vmatpush2.msra.mxu0 0.0
      %2503 = vmatprep.subr.mxu0 0.0
      %2504 = vmatpush2.msra.mxu0 0.0
      %2505 = vmatprep.subr.mxu0 0.0
      %2506 = vmatpush2.msra.mxu0 0.0
      %2507 = vmatprep.subr.mxu0 0.0
      %2508 = vmatpush2.msra.mxu0 0.0
      %2509 = vmatprep.mubr.f32.mxu0 0.0
      %2510 = vmatmul.mubr.f32.gmra.mxu0 %v1263
      %v2511 = vpop.f32.mrf.mxu0
      %v2512 = vadd.f32 %v1224, %v2511
      %v2513 = vpop.f32.mrf.mxu0
      %v2514 = vadd.f32 %v1228, %v2513
      %2515 = vmatprep.mubr.f32.mxu0 0.0
      %2516 = vmatmul.mubr.f32.gmra.mxu0 %v1266
      %v2517 = vpop.f32.mrf.mxu0
      %v2518 = vadd.f32 %v1224, %v2517
      %v2519 = vpop.f32.mrf.mxu0
      %v2520 = vadd.f32 %v1228, %v2519
      %2521 = vmatprep.mubr.f32.mxu0 0.0
      %2522 = vmatmul.mubr.f32.gmra.mxu0 %v1269
      %v2523 = vpop.f32.mrf.mxu0
      %v2524 = vadd.f32 %v1224, %v2523
      %v2525 = vpop.f32.mrf.mxu0
      %v2526 = vadd.f32 %v1228, %v2525
      %2527 = vmatprep.mubr.f32.mxu0 0.0
      %2528 = vmatmul.mubr.f32.gmra.mxu0 %v1272
      %v2529 = vpop.f32.mrf.mxu0
      %v2530 = vadd.f32 %v1224, %v2529
      %v2531 = vpop.f32.mrf.mxu0
      %v2532 = vadd.f32 %v1228, %v2531
      %2533 = vmatprep.mubr.f32.mxu0 0.0
      %2534 = vmatmul.mubr.f32.gmra.mxu0 %v1275
      %v2535 = vpop.f32.mrf.mxu0
      %v2536 = vadd.f32 %v1224, %v2535
      %v2537 = vpop.f32.mrf.mxu0
      %v2538 = vadd.f32 %v1228, %v2537
      %2539 = vmatprep.mubr.f32.mxu0 0.0
      %2540 = vmatmul.mubr.f32.gmra.mxu0 %v1278
      %v2541 = vpop.f32.mrf.mxu0
      %v2542 = vadd.f32 %v1224, %v2541
      %v2543 = vpop.f32.mrf.mxu0
      %v2544 = vadd.f32 %v1228, %v2543
      %2545 = vmatprep.mubr.f32.mxu0 0.0
      %2546 = vmatmul.mubr.f32.gmra.mxu0 %v1281
      %v2547 = vpop.f32.mrf.mxu0
      %v2548 = vadd.f32 %v1224, %v2547
      %v2549 = vpop.f32.mrf.mxu0
      %v2550 = vadd.f32 %v1228, %v2549
      %2551 = vmatprep.mubr.f32.mxu0 0.0
      %2552 = vmatmul.mubr.f32.gmra.mxu0 %v1284
      %v2553 = vpop.f32.mrf.mxu0
      %v2554 = vadd.f32 %v1224, %v2553
      %v2555 = vpop.f32.mrf.mxu0
      %v2556 = vadd.f32 %v1228, %v2555
      %2557 = vmatprep.mubr.f32.mxu0 0.0
      %2558 = vmatmul.mubr.f32.gmra.mxu0 %v1287
      %v2559 = vpop.f32.mrf.mxu0
      %v2560 = vadd.f32 %v1224, %v2559
      %v2561 = vpop.f32.mrf.mxu0
      %v2562 = vadd.f32 %v1228, %v2561
      %2563 = vmatprep.mubr.f32.mxu0 0.0
      %2564 = vmatmul.mubr.f32.gmra.mxu0 %v1290
      %v2565 = vpop.f32.mrf.mxu0
      %v2566 = vadd.f32 %v1224, %v2565
      %v2567 = vpop.f32.mrf.mxu0
      %v2568 = vadd.f32 %v1228, %v2567
      %2569 = vmatprep.mubr.f32.mxu0 0.0
      %2570 = vmatmul.mubr.f32.gmra.mxu0 %v1293
      %v2571 = vpop.f32.mrf.mxu0
      %v2572 = vadd.f32 %v1224, %v2571
      %v2573 = vpop.f32.mrf.mxu0
      %v2574 = vadd.f32 %v1228, %v2573
      %2575 = vmatprep.mubr.f32.mxu0 0.0
      %2576 = vmatmul.mubr.f32.gmra.mxu0 %v1296
      %v2577 = vpop.f32.mrf.mxu0
      %v2578 = vadd.f32 %v1224, %v2577
      %v2579 = vpop.f32.mrf.mxu0
      %v2580 = vadd.f32 %v1228, %v2579
      %2581 = vmatprep.mubr.f32.mxu0 0.0
      %2582 = vmatmul.mubr.f32.gmra.mxu0 %v1299
      %v2583 = vpop.f32.mrf.mxu0
      %v2584 = vadd.f32 %v1224, %v2583
      %v2585 = vpop.f32.mrf.mxu0
      %v2586 = vadd.f32 %v1228, %v2585
      %2587 = vmatprep.mubr.f32.mxu0 0.0
      %2588 = vmatmul.mubr.f32.gmra.mxu0 %v1302
      %v2589 = vpop.f32.mrf.mxu0
      %v2590 = vadd.f32 %v1224, %v2589
      %v2591 = vpop.f32.mrf.mxu0
      %v2592 = vadd.f32 %v1228, %v2591
      %2593 = vmatprep.mubr.f32.mxu0 0.0
      %2594 = vmatmul.mubr.f32.gmra.mxu0 %v1305
      %v2595 = vpop.f32.mrf.mxu0
      %v2596 = vadd.f32 %v1224, %v2595
      %v2597 = vpop.f32.mrf.mxu0
      %v2598 = vadd.f32 %v1228, %v2597
      %2599 = vmatprep.mubr.f32.mxu0 0.0
      %2600 = vmatmul.mubr.f32.gmra.mxu0 %v1308
      %v2601 = vpop.f32.mrf.mxu0
      %v2602 = vadd.f32 %v1224, %v2601
      %v2603 = vpop.f32.mrf.mxu0
      %v2604 = vadd.f32 %v1228, %v2603
      %2605 = vmatprep.mubr.f32.mxu0 0.0
      %2606 = vmatmul.mubr.f32.gmra.mxu0 %v1311
      %v2607 = vpop.f32.mrf.mxu0
      %v2608 = vadd.f32 %v1224, %v2607
      %v2609 = vpop.f32.mrf.mxu0
      %v2610 = vadd.f32 %v1228, %v2609
      %2611 = vmatprep.mubr.f32.mxu0 0.0
      %2612 = vmatmul.mubr.f32.gmra.mxu0 %v1314
      %v2613 = vpop.f32.mrf.mxu0
      %v2614 = vadd.f32 %v1224, %v2613
      %v2615 = vpop.f32.mrf.mxu0
      %v2616 = vadd.f32 %v1228, %v2615
      %2617 = vmatprep.mubr.f32.mxu0 0.0
      %2618 = vmatmul.mubr.f32.gmra.mxu0 %v1317
      %v2619 = vpop.f32.mrf.mxu0
      %v2620 = vadd.f32 %v1224, %v2619
      %v2621 = vpop.f32.mrf.mxu0
      %v2622 = vadd.f32 %v1228, %v2621
      %2623 = vmatprep.mubr.f32.mxu0 0.0
      %2624 = vmatmul.mubr.f32.gmra.mxu0 %v1320
      %v2625 = vpop.f32.mrf.mxu0
      %v2626 = vadd.f32 %v1224, %v2625
      %v2627 = vpop.f32.mrf.mxu0
      %v2628 = vadd.f32 %v1228, %v2627
      %2629 = vmatprep.mubr.f32.mxu0 0.0
      %2630 = vmatmul.mubr.f32.gmra.mxu0 %v1323
      %v2631 = vpop.f32.mrf.mxu0
      %v2632 = vadd.f32 %v1224, %v2631
      %v2633 = vpop.f32.mrf.mxu0
      %v2634 = vadd.f32 %v1228, %v2633
      %2635 = vmatprep.mubr.f32.mxu0 0.0
      %2636 = vmatmul.mubr.f32.gmra.mxu0 %v1326
      %v2637 = vpop.f32.mrf.mxu0
      %v2638 = vadd.f32 %v1224, %v2637
      %v2639 = vpop.f32.mrf.mxu0
      %v2640 = vadd.f32 %v1228, %v2639
      %2641 = vmatprep.mubr.f32.mxu0 0.0
      %2642 = vmatmul.mubr.f32.gmra.mxu0 %v1329
      %v2643 = vpop.f32.mrf.mxu0
      %v2644 = vadd.f32 %v1224, %v2643
      %v2645 = vpop.f32.mrf.mxu0
      %v2646 = vadd.f32 %v1228, %v2645
      %2647 = vmatprep.mubr.f32.mxu0 0.0
      %2648 = vmatmul.mubr.f32.gmra.mxu0 %v1332
      %v2649 = vpop.f32.mrf.mxu0
      %v2650 = vadd.f32 %v1224, %v2649
      %v2651 = vpop.f32.mrf.mxu0
      %v2652 = vadd.f32 %v1228, %v2651
      %2653 = vmatprep.mubr.f32.mxu0 0.0
      %2654 = vmatmul.mubr.f32.gmra.mxu0 %v1335
      %v2655 = vpop.f32.mrf.mxu0
      %v2656 = vadd.f32 %v1224, %v2655
      %v2657 = vpop.f32.mrf.mxu0
      %v2658 = vadd.f32 %v1228, %v2657
      %2659 = vmatprep.mubr.f32.mxu0 0.0
      %2660 = vmatmul.mubr.f32.gmra.mxu0 %v1338
      %v2661 = vpop.f32.mrf.mxu0
      %v2662 = vadd.f32 %v1224, %v2661
      %v2663 = vpop.f32.mrf.mxu0
      %v2664 = vadd.f32 %v1228, %v2663
      %2665 = vdwg.mxu0
      %2666 = vmatprep.subr.mxu0 0.0
      %2667 = vmatpush1.msra.mxu0 0.0
      %2668 = vmatprep.subr.mxu0 0.0
      %2669 = vmatpush1.msra.mxu0 0.0
      %2670 = vmatprep.subr.mxu0 0.0
      %2671 = vmatpush1.msra.mxu0 0.0
      %2672 = vmatprep.subr.mxu0 0.0
      %2673 = vmatpush1.msra.mxu0 0.0
      %2674 = vmatprep.subr.mxu0 0.0
      %2675 = vmatpush1.msra.mxu0 0.0
      %2676 = vmatprep.subr.mxu0 0.0
      %2677 = vmatpush1.msra.mxu0 0.0
      %2678 = vmatprep.subr.mxu0 0.0
      %2679 = vmatpush1.msra.mxu0 0.0
      %2680 = vmatprep.subr.mxu0 0.0
      %2681 = vmatpush1.msra.mxu0 0.0
      %2682 = vmatprep.subr.mxu0 %v1174
      %2683 = vmatpush1.msra.mxu0 %v1173
      %2684 = vmatprep.subr.mxu0 %v1158
      %2685 = vmatpush1.msra.mxu0 %v1157
      %2686 = vmatprep.subr.mxu0 %v1142
      %2687 = vmatpush1.msra.mxu0 %v1141
      %2688 = vmatprep.subr.mxu0 %v1126
      %2689 = vmatpush1.msra.mxu0 %v1125
      %2690 = vmatprep.subr.mxu0 %v1110
      %2691 = vmatpush1.msra.mxu0 %v1109
      %2692 = vmatprep.subr.mxu0 %v1094
      %2693 = vmatpush1.msra.mxu0 %v1093
      %2694 = vmatprep.subr.mxu0 %v1078
      %2695 = vmatpush1.msra.mxu0 %v1077
      %2696 = vmatprep.subr.mxu0 %v1062
      %2697 = vmatpush1.msra.mxu0 %v1061
      %2698 = vmatprep.subr.mxu0 0.0
      %2699 = vmatpush2.msra.mxu0 0.0
      %2700 = vmatprep.subr.mxu0 0.0
      %2701 = vmatpush2.msra.mxu0 0.0
      %2702 = vmatprep.subr.mxu0 0.0
      %2703 = vmatpush2.msra.mxu0 0.0
      %2704 = vmatprep.subr.mxu0 0.0
      %2705 = vmatpush2.msra.mxu0 0.0
      %2706 = vmatprep.subr.mxu0 0.0
      %2707 = vmatpush2.msra.mxu0 0.0
      %2708 = vmatprep.subr.mxu0 0.0
      %2709 = vmatpush2.msra.mxu0 0.0
      %2710 = vmatprep.subr.mxu0 0.0
      %2711 = vmatpush2.msra.mxu0 0.0
      %2712 = vmatprep.subr.mxu0 0.0
      %2713 = vmatpush2.msra.mxu0 0.0
      %2714 = vmatprep.subr.mxu0 0.0
      %2715 = vmatpush2.msra.mxu0 0.0
      %2716 = vmatprep.subr.mxu0 0.0
      %2717 = vmatpush2.msra.mxu0 0.0
      %2718 = vmatprep.subr.mxu0 0.0
      %2719 = vmatpush2.msra.mxu0 0.0
      %2720 = vmatprep.subr.mxu0 0.0
      %2721 = vmatpush2.msra.mxu0 0.0
      %2722 = vmatprep.subr.mxu0 0.0
      %2723 = vmatpush2.msra.mxu0 0.0
      %2724 = vmatprep.subr.mxu0 0.0
      %2725 = vmatpush2.msra.mxu0 0.0
      %2726 = vmatprep.subr.mxu0 0.0
      %2727 = vmatpush2.msra.mxu0 0.0
      %2728 = vmatprep.subr.mxu0 0.0
      %2729 = vmatpush2.msra.mxu0 0.0
      %2730 = vmatprep.mubr.f32.mxu0 0.0
      %2731 = vmatmul.mubr.f32.gmra.mxu0 %v1263
      %v2732 = vpop.f32.mrf.mxu0
      %v2733 = vadd.f32 %v1232, %v2732
      %v2734 = vpop.f32.mrf.mxu0
      %v2735 = vadd.f32 %v1236, %v2734
      %2736 = vmatprep.mubr.f32.mxu0 0.0
      %2737 = vmatmul.mubr.f32.gmra.mxu0 %v1266
      %v2738 = vpop.f32.mrf.mxu0
      %v2739 = vadd.f32 %v1232, %v2738
      %v2740 = vpop.f32.mrf.mxu0
      %v2741 = vadd.f32 %v1236, %v2740
      %2742 = vmatprep.mubr.f32.mxu0 0.0
      %2743 = vmatmul.mubr.f32.gmra.mxu0 %v1269
      %v2744 = vpop.f32.mrf.mxu0
      %v2745 = vadd.f32 %v1232, %v2744
      %v2746 = vpop.f32.mrf.mxu0
      %v2747 = vadd.f32 %v1236, %v2746
      %2748 = vmatprep.mubr.f32.mxu0 0.0
      %2749 = vmatmul.mubr.f32.gmra.mxu0 %v1272
      %v2750 = vpop.f32.mrf.mxu0
      %v2751 = vadd.f32 %v1232, %v2750
      %v2752 = vpop.f32.mrf.mxu0
      %v2753 = vadd.f32 %v1236, %v2752
      %2754 = vmatprep.mubr.f32.mxu0 0.0
      %2755 = vmatmul.mubr.f32.gmra.mxu0 %v1275
      %v2756 = vpop.f32.mrf.mxu0
      %v2757 = vadd.f32 %v1232, %v2756
      %v2758 = vpop.f32.mrf.mxu0
      %v2759 = vadd.f32 %v1236, %v2758
      %2760 = vmatprep.mubr.f32.mxu0 0.0
      %2761 = vmatmul.mubr.f32.gmra.mxu0 %v1278
      %v2762 = vpop.f32.mrf.mxu0
      %v2763 = vadd.f32 %v1232, %v2762
      %v2764 = vpop.f32.mrf.mxu0
      %v2765 = vadd.f32 %v1236, %v2764
      %2766 = vmatprep.mubr.f32.mxu0 0.0
      %2767 = vmatmul.mubr.f32.gmra.mxu0 %v1281
      %v2768 = vpop.f32.mrf.mxu0
      %v2769 = vadd.f32 %v1232, %v2768
      %v2770 = vpop.f32.mrf.mxu0
      %v2771 = vadd.f32 %v1236, %v2770
      %2772 = vmatprep.mubr.f32.mxu0 0.0
      %2773 = vmatmul.mubr.f32.gmra.mxu0 %v1284
      %v2774 = vpop.f32.mrf.mxu0
      %v2775 = vadd.f32 %v1232, %v2774
      %v2776 = vpop.f32.mrf.mxu0
      %v2777 = vadd.f32 %v1236, %v2776
      %2778 = vmatprep.mubr.f32.mxu0 0.0
      %2779 = vmatmul.mubr.f32.gmra.mxu0 %v1287
      %v2780 = vpop.f32.mrf.mxu0
      %v2781 = vadd.f32 %v1232, %v2780
      %v2782 = vpop.f32.mrf.mxu0
      %v2783 = vadd.f32 %v1236, %v2782
      %2784 = vmatprep.mubr.f32.mxu0 0.0
      %2785 = vmatmul.mubr.f32.gmra.mxu0 %v1290
      %v2786 = vpop.f32.mrf.mxu0
      %v2787 = vadd.f32 %v1232, %v2786
      %v2788 = vpop.f32.mrf.mxu0
      %v2789 = vadd.f32 %v1236, %v2788
      %2790 = vmatprep.mubr.f32.mxu0 0.0
      %2791 = vmatmul.mubr.f32.gmra.mxu0 %v1293
      %v2792 = vpop.f32.mrf.mxu0
      %v2793 = vadd.f32 %v1232, %v2792
      %v2794 = vpop.f32.mrf.mxu0
      %v2795 = vadd.f32 %v1236, %v2794
      %2796 = vmatprep.mubr.f32.mxu0 0.0
      %2797 = vmatmul.mubr.f32.gmra.mxu0 %v1296
      %v2798 = vpop.f32.mrf.mxu0
      %v2799 = vadd.f32 %v1232, %v2798
      %v2800 = vpop.f32.mrf.mxu0
      %v2801 = vadd.f32 %v1236, %v2800
      %2802 = vmatprep.mubr.f32.mxu0 0.0
      %2803 = vmatmul.mubr.f32.gmra.mxu0 %v1299
      %v2804 = vpop.f32.mrf.mxu0
      %v2805 = vadd.f32 %v1232, %v2804
      %v2806 = vpop.f32.mrf.mxu0
      %v2807 = vadd.f32 %v1236, %v2806
      %2808 = vmatprep.mubr.f32.mxu0 0.0
      %2809 = vmatmul.mubr.f32.gmra.mxu0 %v1302
      %v2810 = vpop.f32.mrf.mxu0
      %v2811 = vadd.f32 %v1232, %v2810
      %v2812 = vpop.f32.mrf.mxu0
      %v2813 = vadd.f32 %v1236, %v2812
      %2814 = vmatprep.mubr.f32.mxu0 0.0
      %2815 = vmatmul.mubr.f32.gmra.mxu0 %v1305
      %v2816 = vpop.f32.mrf.mxu0
      %v2817 = vadd.f32 %v1232, %v2816
      %v2818 = vpop.f32.mrf.mxu0
      %v2819 = vadd.f32 %v1236, %v2818
      %2820 = vmatprep.mubr.f32.mxu0 0.0
      %2821 = vmatmul.mubr.f32.gmra.mxu0 %v1308
      %v2822 = vpop.f32.mrf.mxu0
      %v2823 = vadd.f32 %v1232, %v2822
      %v2824 = vpop.f32.mrf.mxu0
      %v2825 = vadd.f32 %v1236, %v2824
      %2826 = vmatprep.mubr.f32.mxu0 0.0
      %2827 = vmatmul.mubr.f32.gmra.mxu0 %v1311
      %v2828 = vpop.f32.mrf.mxu0
      %v2829 = vadd.f32 %v1232, %v2828
      %v2830 = vpop.f32.mrf.mxu0
      %v2831 = vadd.f32 %v1236, %v2830
      %2832 = vmatprep.mubr.f32.mxu0 0.0
      %2833 = vmatmul.mubr.f32.gmra.mxu0 %v1314
      %v2834 = vpop.f32.mrf.mxu0
      %v2835 = vadd.f32 %v1232, %v2834
      %v2836 = vpop.f32.mrf.mxu0
      %v2837 = vadd.f32 %v1236, %v2836
      %2838 = vmatprep.mubr.f32.mxu0 0.0
      %2839 = vmatmul.mubr.f32.gmra.mxu0 %v1317
      %v2840 = vpop.f32.mrf.mxu0
      %v2841 = vadd.f32 %v1232, %v2840
      %v2842 = vpop.f32.mrf.mxu0
      %v2843 = vadd.f32 %v1236, %v2842
      %2844 = vmatprep.mubr.f32.mxu0 0.0
      %2845 = vmatmul.mubr.f32.gmra.mxu0 %v1320
      %v2846 = vpop.f32.mrf.mxu0
      %v2847 = vadd.f32 %v1232, %v2846
      %v2848 = vpop.f32.mrf.mxu0
      %v2849 = vadd.f32 %v1236, %v2848
      %2850 = vmatprep.mubr.f32.mxu0 0.0
      %2851 = vmatmul.mubr.f32.gmra.mxu0 %v1323
      %v2852 = vpop.f32.mrf.mxu0
      %v2853 = vadd.f32 %v1232, %v2852
      %v2854 = vpop.f32.mrf.mxu0
      %v2855 = vadd.f32 %v1236, %v2854
      %2856 = vmatprep.mubr.f32.mxu0 0.0
      %2857 = vmatmul.mubr.f32.gmra.mxu0 %v1326
      %v2858 = vpop.f32.mrf.mxu0
      %v2859 = vadd.f32 %v1232, %v2858
      %v2860 = vpop.f32.mrf.mxu0
      %v2861 = vadd.f32 %v1236, %v2860
      %2862 = vmatprep.mubr.f32.mxu0 0.0
      %2863 = vmatmul.mubr.f32.gmra.mxu0 %v1329
      %v2864 = vpop.f32.mrf.mxu0
      %v2865 = vadd.f32 %v1232, %v2864
      %v2866 = vpop.f32.mrf.mxu0
      %v2867 = vadd.f32 %v1236, %v2866
      %2868 = vmatprep.mubr.f32.mxu0 0.0
      %2869 = vmatmul.mubr.f32.gmra.mxu0 %v1332
      %v2870 = vpop.f32.mrf.mxu0
      %v2871 = vadd.f32 %v1232, %v2870
      %v2872 = vpop.f32.mrf.mxu0
      %v2873 = vadd.f32 %v1236, %v2872
      %2874 = vmatprep.mubr.f32.mxu0 0.0
      %2875 = vmatmul.mubr.f32.gmra.mxu0 %v1335
      %v2876 = vpop.f32.mrf.mxu0
      %v2877 = vadd.f32 %v1232, %v2876
      %v2878 = vpop.f32.mrf.mxu0
      %v2879 = vadd.f32 %v1236, %v2878
      %2880 = vmatprep.mubr.f32.mxu0 0.0
      %2881 = vmatmul.mubr.f32.gmra.mxu0 %v1338
      %v2882 = vpop.f32.mrf.mxu0
      %v2883 = vadd.f32 %v1232, %v2882
      %v2884 = vpop.f32.mrf.mxu0
      %v2885 = vadd.f32 %v1236, %v2884
      %2886 = vdwg.mxu0
      %2887 = vmatprep.subr.mxu0 0.0
      %2888 = vmatpush1.msra.mxu0 0.0
      %2889 = vmatprep.subr.mxu0 0.0
      %2890 = vmatpush1.msra.mxu0 0.0
      %2891 = vmatprep.subr.mxu0 0.0
      %2892 = vmatpush1.msra.mxu0 0.0
      %2893 = vmatprep.subr.mxu0 0.0
      %2894 = vmatpush1.msra.mxu0 0.0
      %2895 = vmatprep.subr.mxu0 0.0
      %2896 = vmatpush1.msra.mxu0 0.0
      %2897 = vmatprep.subr.mxu0 0.0
      %2898 = vmatpush1.msra.mxu0 0.0
      %2899 = vmatprep.subr.mxu0 0.0
      %2900 = vmatpush1.msra.mxu0 0.0
      %2901 = vmatprep.subr.mxu0 0.0
      %2902 = vmatpush1.msra.mxu0 0.0
      %2903 = vmatprep.subr.mxu0 %v1176
      %2904 = vmatpush1.msra.mxu0 %v1175
      %2905 = vmatprep.subr.mxu0 %v1160
      %2906 = vmatpush1.msra.mxu0 %v1159
      %2907 = vmatprep.subr.mxu0 %v1144
      %2908 = vmatpush1.msra.mxu0 %v1143
      %2909 = vmatprep.subr.mxu0 %v1128
      %2910 = vmatpush1.msra.mxu0 %v1127
      %2911 = vmatprep.subr.mxu0 %v1112
      %2912 = vmatpush1.msra.mxu0 %v1111
      %2913 = vmatprep.subr.mxu0 %v1096
      %2914 = vmatpush1.msra.mxu0 %v1095
      %2915 = vmatprep.subr.mxu0 %v1080
      %2916 = vmatpush1.msra.mxu0 %v1079
      %2917 = vmatprep.subr.mxu0 %v1064
      %2918 = vmatpush1.msra.mxu0 %v1063
      %2919 = vmatprep.subr.mxu0 0.0
      %2920 = vmatpush2.msra.mxu0 0.0
      %2921 = vmatprep.subr.mxu0 0.0
      %2922 = vmatpush2.msra.mxu0 0.0
      %2923 = vmatprep.subr.mxu0 0.0
      %2924 = vmatpush2.msra.mxu0 0.0
      %2925 = vmatprep.subr.mxu0 0.0
      %2926 = vmatpush2.msra.mxu0 0.0
      %2927 = vmatprep.subr.mxu0 0.0
      %2928 = vmatpush2.msra.mxu0 0.0
      %2929 = vmatprep.subr.mxu0 0.0
      %2930 = vmatpush2.msra.mxu0 0.0
      %2931 = vmatprep.subr.mxu0 0.0
      %2932 = vmatpush2.msra.mxu0 0.0
      %2933 = vmatprep.subr.mxu0 0.0
      %2934 = vmatpush2.msra.mxu0 0.0
      %2935 = vmatprep.subr.mxu0 0.0
      %2936 = vmatpush2.msra.mxu0 0.0
      %2937 = vmatprep.subr.mxu0 0.0
      %2938 = vmatpush2.msra.mxu0 0.0
      %2939 = vmatprep.subr.mxu0 0.0
      %2940 = vmatpush2.msra.mxu0 0.0
      %2941 = vmatprep.subr.mxu0 0.0
      %2942 = vmatpush2.msra.mxu0 0.0
      %2943 = vmatprep.subr.mxu0 0.0
      %2944 = vmatpush2.msra.mxu0 0.0
      %2945 = vmatprep.subr.mxu0 0.0
      %2946 = vmatpush2.msra.mxu0 0.0
      %2947 = vmatprep.subr.mxu0 0.0
      %2948 = vmatpush2.msra.mxu0 0.0
      %2949 = vmatprep.subr.mxu0 0.0
      %2950 = vmatpush2.msra.mxu0 0.0
      %2951 = vmatprep.mubr.f32.mxu0 0.0
      %2952 = vmatmul.mubr.f32.gmra.mxu0 %v1263
      %v2953 = vpop.f32.mrf.mxu0
      %v2954 = vadd.f32 %v1240, %v2953
      %v2955 = vpop.f32.mrf.mxu0
      %v2956 = vadd.f32 %v1244, %v2955
      %2957 = vmatprep.mubr.f32.mxu0 0.0
      %2958 = vmatmul.mubr.f32.gmra.mxu0 %v1266
      %v2959 = vpop.f32.mrf.mxu0
      %v2960 = vadd.f32 %v1240, %v2959
      %v2961 = vpop.f32.mrf.mxu0
      %v2962 = vadd.f32 %v1244, %v2961
      %2963 = vmatprep.mubr.f32.mxu0 0.0
      %2964 = vmatmul.mubr.f32.gmra.mxu0 %v1269
      %v2965 = vpop.f32.mrf.mxu0
      %v2966 = vadd.f32 %v1240, %v2965
      %v2967 = vpop.f32.mrf.mxu0
      %v2968 = vadd.f32 %v1244, %v2967
      %2969 = vmatprep.mubr.f32.mxu0 0.0
      %2970 = vmatmul.mubr.f32.gmra.mxu0 %v1272
      %v2971 = vpop.f32.mrf.mxu0
      %v2972 = vadd.f32 %v1240, %v2971
      %v2973 = vpop.f32.mrf.mxu0
      %v2974 = vadd.f32 %v1244, %v2973
      %2975 = vmatprep.mubr.f32.mxu0 0.0
      %2976 = vmatmul.mubr.f32.gmra.mxu0 %v1275
      %v2977 = vpop.f32.mrf.mxu0
      %v2978 = vadd.f32 %v1240, %v2977
      %v2979 = vpop.f32.mrf.mxu0
      %v2980 = vadd.f32 %v1244, %v2979
      %2981 = vmatprep.mubr.f32.mxu0 0.0
      %2982 = vmatmul.mubr.f32.gmra.mxu0 %v1278
      %v2983 = vpop.f32.mrf.mxu0
      %v2984 = vadd.f32 %v1240, %v2983
      %v2985 = vpop.f32.mrf.mxu0
      %v2986 = vadd.f32 %v1244, %v2985
      %2987 = vmatprep.mubr.f32.mxu0 0.0
      %2988 = vmatmul.mubr.f32.gmra.mxu0 %v1281
      %v2989 = vpop.f32.mrf.mxu0
      %v2990 = vadd.f32 %v1240, %v2989
      %v2991 = vpop.f32.mrf.mxu0
      %v2992 = vadd.f32 %v1244, %v2991
      %2993 = vmatprep.mubr.f32.mxu0 0.0
      %2994 = vmatmul.mubr.f32.gmra.mxu0 %v1284
      %v2995 = vpop.f32.mrf.mxu0
      %v2996 = vadd.f32 %v1240, %v2995
      %v2997 = vpop.f32.mrf.mxu0
      %v2998 = vadd.f32 %v1244, %v2997
      %2999 = vmatprep.mubr.f32.mxu0 0.0
      %3000 = vmatmul.mubr.f32.gmra.mxu0 %v1287
      %v3001 = vpop.f32.mrf.mxu0
      %v3002 = vadd.f32 %v1240, %v3001
      %v3003 = vpop.f32.mrf.mxu0
      %v3004 = vadd.f32 %v1244, %v3003
      %3005 = vmatprep.mubr.f32.mxu0 0.0
      %3006 = vmatmul.mubr.f32.gmra.mxu0 %v1290
      %v3007 = vpop.f32.mrf.mxu0
      %v3008 = vadd.f32 %v1240, %v3007
      %v3009 = vpop.f32.mrf.mxu0
      %v3010 = vadd.f32 %v1244, %v3009
      %3011 = vmatprep.mubr.f32.mxu0 0.0
      %3012 = vmatmul.mubr.f32.gmra.mxu0 %v1293
      %v3013 = vpop.f32.mrf.mxu0
      %v3014 = vadd.f32 %v1240, %v3013
      %v3015 = vpop.f32.mrf.mxu0
      %v3016 = vadd.f32 %v1244, %v3015
      %3017 = vmatprep.mubr.f32.mxu0 0.0
      %3018 = vmatmul.mubr.f32.gmra.mxu0 %v1296
      %v3019 = vpop.f32.mrf.mxu0
      %v3020 = vadd.f32 %v1240, %v3019
      %v3021 = vpop.f32.mrf.mxu0
      %v3022 = vadd.f32 %v1244, %v3021
      %3023 = vmatprep.mubr.f32.mxu0 0.0
      %3024 = vmatmul.mubr.f32.gmra.mxu0 %v1299
      %v3025 = vpop.f32.mrf.mxu0
      %v3026 = vadd.f32 %v1240, %v3025
      %v3027 = vpop.f32.mrf.mxu0
      %v3028 = vadd.f32 %v1244, %v3027
      %3029 = vmatprep.mubr.f32.mxu0 0.0
      %3030 = vmatmul.mubr.f32.gmra.mxu0 %v1302
      %v3031 = vpop.f32.mrf.mxu0
      %v3032 = vadd.f32 %v1240, %v3031
      %v3033 = vpop.f32.mrf.mxu0
      %v3034 = vadd.f32 %v1244, %v3033
      %3035 = vmatprep.mubr.f32.mxu0 0.0
      %3036 = vmatmul.mubr.f32.gmra.mxu0 %v1305
      %v3037 = vpop.f32.mrf.mxu0
      %v3038 = vadd.f32 %v1240, %v3037
      %v3039 = vpop.f32.mrf.mxu0
      %v3040 = vadd.f32 %v1244, %v3039
      %3041 = vmatprep.mubr.f32.mxu0 0.0
      %3042 = vmatmul.mubr.f32.gmra.mxu0 %v1308
      %v3043 = vpop.f32.mrf.mxu0
      %v3044 = vadd.f32 %v1240, %v3043
      %v3045 = vpop.f32.mrf.mxu0
      %v3046 = vadd.f32 %v1244, %v3045
      %3047 = vmatprep.mubr.f32.mxu0 0.0
      %3048 = vmatmul.mubr.f32.gmra.mxu0 %v1311
      %v3049 = vpop.f32.mrf.mxu0
      %v3050 = vadd.f32 %v1240, %v3049
      %v3051 = vpop.f32.mrf.mxu0
      %v3052 = vadd.f32 %v1244, %v3051
      %3053 = vmatprep.mubr.f32.mxu0 0.0
      %3054 = vmatmul.mubr.f32.gmra.mxu0 %v1314
      %v3055 = vpop.f32.mrf.mxu0
      %v3056 = vadd.f32 %v1240, %v3055
      %v3057 = vpop.f32.mrf.mxu0
      %v3058 = vadd.f32 %v1244, %v3057
      %3059 = vmatprep.mubr.f32.mxu0 0.0
      %3060 = vmatmul.mubr.f32.gmra.mxu0 %v1317
      %v3061 = vpop.f32.mrf.mxu0
      %v3062 = vadd.f32 %v1240, %v3061
      %v3063 = vpop.f32.mrf.mxu0
      %v3064 = vadd.f32 %v1244, %v3063
      %3065 = vmatprep.mubr.f32.mxu0 0.0
      %3066 = vmatmul.mubr.f32.gmra.mxu0 %v1320
      %v3067 = vpop.f32.mrf.mxu0
      %v3068 = vadd.f32 %v1240, %v3067
      %v3069 = vpop.f32.mrf.mxu0
      %v3070 = vadd.f32 %v1244, %v3069
      %3071 = vmatprep.mubr.f32.mxu0 0.0
      %3072 = vmatmul.mubr.f32.gmra.mxu0 %v1323
      %v3073 = vpop.f32.mrf.mxu0
      %v3074 = vadd.f32 %v1240, %v3073
      %v3075 = vpop.f32.mrf.mxu0
      %v3076 = vadd.f32 %v1244, %v3075
      %3077 = vmatprep.mubr.f32.mxu0 0.0
      %3078 = vmatmul.mubr.f32.gmra.mxu0 %v1326
      %v3079 = vpop.f32.mrf.mxu0
      %v3080 = vadd.f32 %v1240, %v3079
      %v3081 = vpop.f32.mrf.mxu0
      %v3082 = vadd.f32 %v1244, %v3081
      %3083 = vmatprep.mubr.f32.mxu0 0.0
      %3084 = vmatmul.mubr.f32.gmra.mxu0 %v1329
      %v3085 = vpop.f32.mrf.mxu0
      %v3086 = vadd.f32 %v1240, %v3085
      %v3087 = vpop.f32.mrf.mxu0
      %v3088 = vadd.f32 %v1244, %v3087
      %3089 = vmatprep.mubr.f32.mxu0 0.0
      %3090 = vmatmul.mubr.f32.gmra.mxu0 %v1332
      %v3091 = vpop.f32.mrf.mxu0
      %v3092 = vadd.f32 %v1240, %v3091
      %v3093 = vpop.f32.mrf.mxu0
      %v3094 = vadd.f32 %v1244, %v3093
      %3095 = vmatprep.mubr.f32.mxu0 0.0
      %3096 = vmatmul.mubr.f32.gmra.mxu0 %v1335
      %v3097 = vpop.f32.mrf.mxu0
      %v3098 = vadd.f32 %v1240, %v3097
      %v3099 = vpop.f32.mrf.mxu0
      %v3100 = vadd.f32 %v1244, %v3099
      %3101 = vmatprep.mubr.f32.mxu0 0.0
      %3102 = vmatmul.mubr.f32.gmra.mxu0 %v1338
      %v3103 = vpop.f32.mrf.mxu0
      %v3104 = vadd.f32 %v1240, %v3103
      %v3105 = vpop.f32.mrf.mxu0
      %v3106 = vadd.f32 %v1244, %v3105
      %3107 = vdwg.mxu0
      %v3108 = vmul.f32 %v1407, %v2291
      %v3109 = vmul.f32 %v1409, %v2293
      %v3110 = vmul.f32 %v1628, %v2512
      %v3111 = vmul.f32 %v1630, %v2514
      %v3112 = vmul.f32 %v1849, %v2733
      %v3113 = vmul.f32 %v1851, %v2735
      %v3114 = vmul.f32 %v2070, %v2954
      %v3115 = vmul.f32 %v2072, %v2956
      %v3116 = vmul.f32 %v1413, %v2297
      %v3117 = vmul.f32 %v1415, %v2299
      %v3118 = vmul.f32 %v1634, %v2518
      %v3119 = vmul.f32 %v1636, %v2520
      %v3120 = vmul.f32 %v1855, %v2739
      %v3121 = vmul.f32 %v1857, %v2741
      %v3122 = vmul.f32 %v2076, %v2960
      %v3123 = vmul.f32 %v2078, %v2962
      %v3124 = vmul.f32 %v1419, %v2303
      %v3125 = vmul.f32 %v1421, %v2305
      %v3126 = vmul.f32 %v1640, %v2524
      %v3127 = vmul.f32 %v1642, %v2526
      %v3128 = vmul.f32 %v1861, %v2745
      %v3129 = vmul.f32 %v1863, %v2747
      %v3130 = vmul.f32 %v2082, %v2966
      %v3131 = vmul.f32 %v2084, %v2968
      %v3132 = vmul.f32 %v1425, %v2309
      %v3133 = vmul.f32 %v1427, %v2311
      %v3134 = vmul.f32 %v1646, %v2530
      %v3135 = vmul.f32 %v1648, %v2532
      %v3136 = vmul.f32 %v1867, %v2751
      %v3137 = vmul.f32 %v1869, %v2753
      %v3138 = vmul.f32 %v2088, %v2972
      %v3139 = vmul.f32 %v2090, %v2974
      %v3140 = vmul.f32 %v1431, %v2315
      %v3141 = vmul.f32 %v1433, %v2317
      %v3142 = vmul.f32 %v1652, %v2536
      %v3143 = vmul.f32 %v1654, %v2538
      %v3144 = vmul.f32 %v1873, %v2757
      %v3145 = vmul.f32 %v1875, %v2759
      %v3146 = vmul.f32 %v2094, %v2978
      %v3147 = vmul.f32 %v2096, %v2980
      %v3148 = vmul.f32 %v1437, %v2321
      %v3149 = vmul.f32 %v1439, %v2323
      %v3150 = vmul.f32 %v1658, %v2542
      %v3151 = vmul.f32 %v1660, %v2544
      %v3152 = vmul.f32 %v1879, %v2763
      %v3153 = vmul.f32 %v1881, %v2765
      %v3154 = vmul.f32 %v2100, %v2984
      %v3155 = vmul.f32 %v2102, %v2986
      %v3156 = vmul.f32 %v1443, %v2327
      %v3157 = vmul.f32 %v1445, %v2329
      %v3158 = vmul.f32 %v1664, %v2548
      %v3159 = vmul.f32 %v1666, %v2550
      %v3160 = vmul.f32 %v1885, %v2769
      %v3161 = vmul.f32 %v1887, %v2771
      %v3162 = vmul.f32 %v2106, %v2990
      %v3163 = vmul.f32 %v2108, %v2992
      %v3164 = vmul.f32 %v1449, %v2333
      %v3165 = vmul.f32 %v1451, %v2335
      %v3166 = vmul.f32 %v1670, %v2554
      %v3167 = vmul.f32 %v1672, %v2556
      %v3168 = vmul.f32 %v1891, %v2775
      %v3169 = vmul.f32 %v1893, %v2777
      %v3170 = vmul.f32 %v2112, %v2996
      %v3171 = vmul.f32 %v2114, %v2998
      %v3172 = vmul.f32 %v1455, %v2339
      %v3173 = vmul.f32 %v1457, %v2341
      %v3174 = vmul.f32 %v1676, %v2560
      %v3175 = vmul.f32 %v1678, %v2562
      %v3176 = vmul.f32 %v1897, %v2781
      %v3177 = vmul.f32 %v1899, %v2783
      %v3178 = vmul.f32 %v2118, %v3002
      %v3179 = vmul.f32 %v2120, %v3004
      %v3180 = vmul.f32 %v1461, %v2345
      %v3181 = vmul.f32 %v1463, %v2347
      %v3182 = vmul.f32 %v1682, %v2566
      %v3183 = vmul.f32 %v1684, %v2568
      %v3184 = vmul.f32 %v1903, %v2787
      %v3185 = vmul.f32 %v1905, %v2789
      %v3186 = vmul.f32 %v2124, %v3008
      %v3187 = vmul.f32 %v2126, %v3010
      %v3188 = vmul.f32 %v1467, %v2351
      %v3189 = vmul.f32 %v1469, %v2353
      %v3190 = vmul.f32 %v1688, %v2572
      %v3191 = vmul.f32 %v1690, %v2574
      %v3192 = vmul.f32 %v1909, %v2793
      %v3193 = vmul.f32 %v1911, %v2795
      %v3194 = vmul.f32 %v2130, %v3014
      %v3195 = vmul.f32 %v2132, %v3016
      %v3196 = vmul.f32 %v1473, %v2357
      %v3197 = vmul.f32 %v1475, %v2359
      %v3198 = vmul.f32 %v1694, %v2578
      %v3199 = vmul.f32 %v1696, %v2580
      %v3200 = vmul.f32 %v1915, %v2799
      %v3201 = vmul.f32 %v1917, %v2801
      %v3202 = vmul.f32 %v2136, %v3020
      %v3203 = vmul.f32 %v2138, %v3022
      %v3204 = vmul.f32 %v1479, %v2363
      %v3205 = vmul.f32 %v1481, %v2365
      %v3206 = vmul.f32 %v1700, %v2584
      %v3207 = vmul.f32 %v1702, %v2586
      %v3208 = vmul.f32 %v1921, %v2805
      %v3209 = vmul.f32 %v1923, %v2807
      %v3210 = vmul.f32 %v2142, %v3026
      %v3211 = vmul.f32 %v2144, %v3028
      %v3212 = vmul.f32 %v1485, %v2369
      %v3213 = vmul.f32 %v1487, %v2371
      %v3214 = vmul.f32 %v1706, %v2590
      %v3215 = vmul.f32 %v1708, %v2592
      %v3216 = vmul.f32 %v1927, %v2811
      %v3217 = vmul.f32 %v1929, %v2813
      %v3218 = vmul.f32 %v2148, %v3032
      %v3219 = vmul.f32 %v2150, %v3034
      %v3220 = vmul.f32 %v1491, %v2375
      %v3221 = vmul.f32 %v1493, %v2377
      %v3222 = vmul.f32 %v1712, %v2596
      %v3223 = vmul.f32 %v1714, %v2598
      %v3224 = vmul.f32 %v1933, %v2817
      %v3225 = vmul.f32 %v1935, %v2819
      %v3226 = vmul.f32 %v2154, %v3038
      %v3227 = vmul.f32 %v2156, %v3040
      %v3228 = vmul.f32 %v1497, %v2381
      %v3229 = vmul.f32 %v1499, %v2383
      %v3230 = vmul.f32 %v1718, %v2602
      %v3231 = vmul.f32 %v1720, %v2604
      %v3232 = vmul.f32 %v1939, %v2823
      %v3233 = vmul.f32 %v1941, %v2825
      %v3234 = vmul.f32 %v2160, %v3044
      %v3235 = vmul.f32 %v2162, %v3046
      %v3236 = vmul.f32 %v1503, %v2387
      %v3237 = vmul.f32 %v1505, %v2389
      %v3238 = vmul.f32 %v1724, %v2608
      %v3239 = vmul.f32 %v1726, %v2610
      %v3240 = vmul.f32 %v1945, %v2829
      %v3241 = vmul.f32 %v1947, %v2831
      %v3242 = vmul.f32 %v2166, %v3050
      %v3243 = vmul.f32 %v2168, %v3052
      %v3244 = vmul.f32 %v1509, %v2393
      %v3245 = vmul.f32 %v1511, %v2395
      %v3246 = vmul.f32 %v1730, %v2614
      %v3247 = vmul.f32 %v1732, %v2616
      %v3248 = vmul.f32 %v1951, %v2835
      %v3249 = vmul.f32 %v1953, %v2837
      %v3250 = vmul.f32 %v2172, %v3056
      %v3251 = vmul.f32 %v2174, %v3058
      %v3252 = vmul.f32 %v1515, %v2399
      %v3253 = vmul.f32 %v1517, %v2401
      %v3254 = vmul.f32 %v1736, %v2620
      %v3255 = vmul.f32 %v1738, %v2622
      %v3256 = vmul.f32 %v1957, %v2841
      %v3257 = vmul.f32 %v1959, %v2843
      %v3258 = vmul.f32 %v2178, %v3062
      %v3259 = vmul.f32 %v2180, %v3064
      %v3260 = vmul.f32 %v1521, %v2405
      %v3261 = vmul.f32 %v1523, %v2407
      %v3262 = vmul.f32 %v1742, %v2626
      %v3263 = vmul.f32 %v1744, %v2628
      %v3264 = vmul.f32 %v1963, %v2847
      %v3265 = vmul.f32 %v1965, %v2849
      %v3266 = vmul.f32 %v2184, %v3068
      %v3267 = vmul.f32 %v2186, %v3070
      %v3268 = vmul.f32 %v1527, %v2411
      %v3269 = vmul.f32 %v1529, %v2413
      %v3270 = vmul.f32 %v1748, %v2632
      %v3271 = vmul.f32 %v1750, %v2634
      %v3272 = vmul.f32 %v1969, %v2853
      %v3273 = vmul.f32 %v1971, %v2855
      %v3274 = vmul.f32 %v2190, %v3074
      %v3275 = vmul.f32 %v2192, %v3076
      %v3276 = vmul.f32 %v1533, %v2417
      %v3277 = vmul.f32 %v1535, %v2419
      %v3278 = vmul.f32 %v1754, %v2638
      %v3279 = vmul.f32 %v1756, %v2640
      %v3280 = vmul.f32 %v1975, %v2859
      %v3281 = vmul.f32 %v1977, %v2861
      %v3282 = vmul.f32 %v2196, %v3080
      %v3283 = vmul.f32 %v2198, %v3082
      %v3284 = vmul.f32 %v1539, %v2423
      %v3285 = vmul.f32 %v1541, %v2425
      %v3286 = vmul.f32 %v1760, %v2644
      %v3287 = vmul.f32 %v1762, %v2646
      %v3288 = vmul.f32 %v1981, %v2865
      %v3289 = vmul.f32 %v1983, %v2867
      %v3290 = vmul.f32 %v2202, %v3086
      %v3291 = vmul.f32 %v2204, %v3088
      %v3292 = vmul.f32 %v1545, %v2429
      %v3293 = vmul.f32 %v1547, %v2431
      %v3294 = vmul.f32 %v1766, %v2650
      %v3295 = vmul.f32 %v1768, %v2652
      %v3296 = vmul.f32 %v1987, %v2871
      %v3297 = vmul.f32 %v1989, %v2873
      %v3298 = vmul.f32 %v2208, %v3092
      %v3299 = vmul.f32 %v2210, %v3094
      %v3300 = vmul.f32 %v1551, %v2435
      %v3301 = vmul.f32 %v1553, %v2437
      %v3302 = vmul.f32 %v1772, %v2656
      %v3303 = vmul.f32 %v1774, %v2658
      %v3304 = vmul.f32 %v1993, %v2877
      %v3305 = vmul.f32 %v1995, %v2879
      %v3306 = vmul.f32 %v2214, %v3098
      %v3307 = vmul.f32 %v2216, %v3100
      %v3308 = vmul.f32 %v1557, %v2441
      %v3309 = vmul.f32 %v1559, %v2443
      %v3310 = vmul.f32 %v1778, %v2662
      %v3311 = vmul.f32 %v1780, %v2664
      %v3312 = vmul.f32 %v1999, %v2883
      %v3313 = vmul.f32 %v2001, %v2885
      %v3314 = vmul.f32 %v2220, %v3104
      %v3315 = vmul.f32 %v2222, %v3106
      %v3316 = vld [vmem:[%s7] sm:$0xff]
      %v3317 = vld [vmem:[%s7 + $0x8] sm:$0xff]
      %v3318 = vld [vmem:[%s7 + $0x10] sm:$0xff]
      %v3319 = vld [vmem:[%s7 + $0x18] sm:$0xff]
      %v3320 = vld [vmem:[%s7 + $0x20] sm:$0xff]
      %v3321 = vld [vmem:[%s7 + $0x28] sm:$0xff]
      %v3322 = vld [vmem:[%s7 + $0x30] sm:$0xff]
      %v3323 = vld [vmem:[%s7 + $0x38] sm:$0xff]
      %v3324 = vld [vmem:[%s7 + $0x40] sm:$0xff]
      %v3325 = vld [vmem:[%s7 + $0x48] sm:$0xff]
      %v3326 = vld [vmem:[%s7 + $0x50] sm:$0xff]
      %v3327 = vld [vmem:[%s7 + $0x58] sm:$0xff]
      %v3328 = vld [vmem:[%s7 + $0x60] sm:$0xff]
      %v3329 = vld [vmem:[%s7 + $0x68] sm:$0xff]
      %v3330 = vld [vmem:[%s7 + $0x70] sm:$0xff]
      %v3331 = vld [vmem:[%s7 + $0x78] sm:$0xff]
      %v3332 = vld [vmem:[%s7 + $0x80] sm:$0xff]
      %v3333 = vld [vmem:[%s7 + $0x88] sm:$0xff]
      %v3334 = vld [vmem:[%s7 + $0x90] sm:$0xff]
      %v3335 = vld [vmem:[%s7 + $0x98] sm:$0xff]
      %v3336 = vld [vmem:[%s7 + $0xa0] sm:$0xff]
      %v3337 = vld [vmem:[%s7 + $0xa8] sm:$0xff]
      %v3338 = vld [vmem:[%s7 + $0xb0] sm:$0xff]
      %v3339 = vld [vmem:[%s7 + $0xb8] sm:$0xff]
      %v3340 = vld [vmem:[%s7 + $0xc0] sm:$0xff]
      %v3341 = vld [vmem:[%s7 + $0xc8] sm:$0xff]
      %v3342 = vld [vmem:[%s7 + $0xd0] sm:$0xff]
      %v3343 = vld [vmem:[%s7 + $0xd8] sm:$0xff]
      %v3344 = vld [vmem:[%s7 + $0xe0] sm:$0xff]
      %v3345 = vld [vmem:[%s7 + $0xe8] sm:$0xff]
      %v3346 = vld [vmem:[%s7 + $0xf0] sm:$0xff]
      %v3347 = vld [vmem:[%s7 + $0xf8] sm:$0xff]
      %v3348 = vld [vmem:[%s7 + $0x100] sm:$0xff]
      %v3349 = vld [vmem:[%s7 + $0x108] sm:$0xff]
      %v3350 = vld [vmem:[%s7 + $0x110] sm:$0xff]
      %v3351 = vld [vmem:[%s7 + $0x118] sm:$0xff]
      %v3352 = vld [vmem:[%s7 + $0x120] sm:$0xff]
      %v3353 = vld [vmem:[%s7 + $0x128] sm:$0xff]
      %v3354 = vld [vmem:[%s7 + $0x130] sm:$0xff]
      %v3355 = vld [vmem:[%s7 + $0x138] sm:$0xff]
      %v3356 = vld [vmem:[%s7 + $0x140] sm:$0xff]
      %v3357 = vld [vmem:[%s7 + $0x148] sm:$0xff]
      %v3358 = vld [vmem:[%s7 + $0x150] sm:$0xff]
      %v3359 = vld [vmem:[%s7 + $0x158] sm:$0xff]
      %v3360 = vld [vmem:[%s7 + $0x160] sm:$0xff]
      %v3361 = vld [vmem:[%s7 + $0x168] sm:$0xff]
      %v3362 = vld [vmem:[%s7 + $0x170] sm:$0xff]
      %v3363 = vld [vmem:[%s7 + $0x178] sm:$0xff]
      %v3364 = vld [vmem:[%s7 + $0x180] sm:$0xff]
      %v3365 = vld [vmem:[%s7 + $0x188] sm:$0xff]
      %v3366 = vld [vmem:[%s7 + $0x190] sm:$0xff]
      %v3367 = vld [vmem:[%s7 + $0x198] sm:$0xff]
      %v3368 = vld [vmem:[%s7 + $0x1a0] sm:$0xff]
      %v3369 = vld [vmem:[%s7 + $0x1a8] sm:$0xff]
      %v3370 = vld [vmem:[%s7 + $0x1b0] sm:$0xff]
      %v3371 = vld [vmem:[%s7 + $0x1b8] sm:$0xff]
      %v3372 = vld [vmem:[%s7 + $0x1c0] sm:$0xff]
      %v3373 = vld [vmem:[%s7 + $0x1c8] sm:$0xff]
      %v3374 = vld [vmem:[%s7 + $0x1d0] sm:$0xff]
      %v3375 = vld [vmem:[%s7 + $0x1d8] sm:$0xff]
      %v3376 = vld [vmem:[%s7 + $0x1e0] sm:$0xff]
      %v3377 = vld [vmem:[%s7 + $0x1e8] sm:$0xff]
      %v3378 = vld [vmem:[%s7 + $0x1f0] sm:$0xff]
      %v3379 = vld [vmem:[%s7 + $0x1f8] sm:$0xff]
      %v3380 = vld [vmem:[%s7 + $0x200] sm:$0xff]
      %v3381 = vld [vmem:[%s7 + $0x208] sm:$0xff]
      %v3382 = vld [vmem:[%s7 + $0x210] sm:$0xff]
      %v3383 = vld [vmem:[%s7 + $0x218] sm:$0xff]
      %v3384 = vld [vmem:[%s7 + $0x220] sm:$0xff]
      %v3385 = vld [vmem:[%s7 + $0x228] sm:$0xff]
      %v3386 = vld [vmem:[%s7 + $0x230] sm:$0xff]
      %v3387 = vld [vmem:[%s7 + $0x238] sm:$0xff]
      %v3388 = vld [vmem:[%s7 + $0x240] sm:$0xff]
      %v3389 = vld [vmem:[%s7 + $0x248] sm:$0xff]
      %v3390 = vld [vmem:[%s7 + $0x250] sm:$0xff]
      %v3391 = vld [vmem:[%s7 + $0x258] sm:$0xff]
      %v3392 = vld [vmem:[%s7 + $0x260] sm:$0xff]
      %v3393 = vld [vmem:[%s7 + $0x268] sm:$0xff]
      %v3394 = vld [vmem:[%s7 + $0x270] sm:$0xff]
      %v3395 = vld [vmem:[%s7 + $0x278] sm:$0xff]
      %v3396 = vld [vmem:[%s7 + $0x280] sm:$0xff]
      %v3397 = vld [vmem:[%s7 + $0x288] sm:$0xff]
      %v3398 = vld [vmem:[%s7 + $0x290] sm:$0xff]
      %v3399 = vld [vmem:[%s7 + $0x298] sm:$0xff]
      %v3400 = vld [vmem:[%s7 + $0x2a0] sm:$0xff]
      %v3401 = vld [vmem:[%s7 + $0x2a8] sm:$0xff]
      %v3402 = vld [vmem:[%s7 + $0x2b0] sm:$0xff]
      %v3403 = vld [vmem:[%s7 + $0x2b8] sm:$0xff]
      %v3404 = vld [vmem:[%s7 + $0x2c0] sm:$0xff]
      %v3405 = vld [vmem:[%s7 + $0x2c8] sm:$0xff]
      %v3406 = vld [vmem:[%s7 + $0x2d0] sm:$0xff]
      %v3407 = vld [vmem:[%s7 + $0x2d8] sm:$0xff]
      %v3408 = vld [vmem:[%s7 + $0x2e0] sm:$0xff]
      %v3409 = vld [vmem:[%s7 + $0x2e8] sm:$0xff]
      %v3410 = vld [vmem:[%s7 + $0x2f0] sm:$0xff]
      %v3411 = vld [vmem:[%s7 + $0x2f8] sm:$0xff]
      %v3412 = vld [vmem:[%s7 + $0x300] sm:$0xff]
      %v3413 = vld [vmem:[%s7 + $0x308] sm:$0xff]
      %v3414 = vld [vmem:[%s7 + $0x310] sm:$0xff]
      %v3415 = vld [vmem:[%s7 + $0x318] sm:$0xff]
      %v3416 = vld [vmem:[%s7 + $0x320] sm:$0xff]
      %v3417 = vld [vmem:[%s7 + $0x328] sm:$0xff]
      %v3418 = vld [vmem:[%s7 + $0x330] sm:$0xff]
      %v3419 = vld [vmem:[%s7 + $0x338] sm:$0xff]
      %v3420 = vld [vmem:[%s7 + $0x340] sm:$0xff]
      %v3421 = vld [vmem:[%s7 + $0x348] sm:$0xff]
      %v3422 = vld [vmem:[%s7 + $0x350] sm:$0xff]
      %v3423 = vld [vmem:[%s7 + $0x358] sm:$0xff]
      %v3424 = vld [vmem:[%s7 + $0x360] sm:$0xff]
      %v3425 = vld [vmem:[%s7 + $0x368] sm:$0xff]
      %v3426 = vld [vmem:[%s7 + $0x370] sm:$0xff]
      %v3427 = vld [vmem:[%s7 + $0x378] sm:$0xff]
      %v3428 = vld [vmem:[%s7 + $0x380] sm:$0xff]
      %v3429 = vld [vmem:[%s7 + $0x388] sm:$0xff]
      %v3430 = vld [vmem:[%s7 + $0x390] sm:$0xff]
      %v3431 = vld [vmem:[%s7 + $0x398] sm:$0xff]
      %v3432 = vld [vmem:[%s7 + $0x3a0] sm:$0xff]
      %v3433 = vld [vmem:[%s7 + $0x3a8] sm:$0xff]
      %v3434 = vld [vmem:[%s7 + $0x3b0] sm:$0xff]
      %v3435 = vld [vmem:[%s7 + $0x3b8] sm:$0xff]
      %v3436 = vld [vmem:[%s7 + $0x3c0] sm:$0xff]
      %v3437 = vld [vmem:[%s7 + $0x3c8] sm:$0xff]
      %v3438 = vld [vmem:[%s7 + $0x3d0] sm:$0xff]
      %v3439 = vld [vmem:[%s7 + $0x3d8] sm:$0xff]
      %v3440 = vld [vmem:[%s7 + $0x3e0] sm:$0xff]
      %v3441 = vld [vmem:[%s7 + $0x3e8] sm:$0xff]
      %v3442 = vld [vmem:[%s7 + $0x3f0] sm:$0xff]
      %v3443 = vld [vmem:[%s7 + $0x3f8] sm:$0xff]
      %3444 = vmatprep.subr.mxu0 0.0
      %3445 = vmatpush1.msra.mxu0 %v3331
      %3446 = vmatprep.subr.mxu0 0.0
      %3447 = vmatpush1.msra.mxu0 %v3330
      %3448 = vmatprep.subr.mxu0 0.0
      %3449 = vmatpush1.msra.mxu0 %v3329
      %3450 = vmatprep.subr.mxu0 0.0
      %3451 = vmatpush1.msra.mxu0 %v3328
      %3452 = vmatprep.subr.mxu0 0.0
      %3453 = vmatpush1.msra.mxu0 %v3327
      %3454 = vmatprep.subr.mxu0 0.0
      %3455 = vmatpush1.msra.mxu0 %v3326
      %3456 = vmatprep.subr.mxu0 0.0
      %3457 = vmatpush1.msra.mxu0 %v3325
      %3458 = vmatprep.subr.mxu0 0.0
      %3459 = vmatpush1.msra.mxu0 %v3324
      %3460 = vmatprep.subr.mxu0 0.0
      %3461 = vmatpush1.msra.mxu0 %v3323
      %3462 = vmatprep.subr.mxu0 0.0
      %3463 = vmatpush1.msra.mxu0 %v3322
      %3464 = vmatprep.subr.mxu0 0.0
      %3465 = vmatpush1.msra.mxu0 %v3321
      %3466 = vmatprep.subr.mxu0 0.0
      %3467 = vmatpush1.msra.mxu0 %v3320
      %3468 = vmatprep.subr.mxu0 0.0
      %3469 = vmatpush1.msra.mxu0 %v3319
      %3470 = vmatprep.subr.mxu0 0.0
      %3471 = vmatpush1.msra.mxu0 %v3318
      %3472 = vmatprep.subr.mxu0 0.0
      %3473 = vmatpush1.msra.mxu0 %v3317
      %3474 = vmatprep.subr.mxu0 0.0
      %3475 = vmatpush1.msra.mxu0 %v3316
      %3476 = vmatprep.subr.mxu0 0.0
      %3477 = vmatpush2.msra.mxu0 %v3347
      %3478 = vmatprep.subr.mxu0 0.0
      %3479 = vmatpush2.msra.mxu0 %v3346
      %3480 = vmatprep.subr.mxu0 0.0
      %3481 = vmatpush2.msra.mxu0 %v3345
      %3482 = vmatprep.subr.mxu0 0.0
      %3483 = vmatpush2.msra.mxu0 %v3344
      %3484 = vmatprep.subr.mxu0 0.0
      %3485 = vmatpush2.msra.mxu0 %v3343
      %3486 = vmatprep.subr.mxu0 0.0
      %3487 = vmatpush2.msra.mxu0 %v3342
      %3488 = vmatprep.subr.mxu0 0.0
      %3489 = vmatpush2.msra.mxu0 %v3341
      %3490 = vmatprep.subr.mxu0 0.0
      %3491 = vmatpush2.msra.mxu0 %v3340
      %3492 = vmatprep.subr.mxu0 0.0
      %3493 = vmatpush2.msra.mxu0 %v3339
      %3494 = vmatprep.subr.mxu0 0.0
      %3495 = vmatpush2.msra.mxu0 %v3338
      %3496 = vmatprep.subr.mxu0 0.0
      %3497 = vmatpush2.msra.mxu0 %v3337
      %3498 = vmatprep.subr.mxu0 0.0
      %3499 = vmatpush2.msra.mxu0 %v3336
      %3500 = vmatprep.subr.mxu0 0.0
      %3501 = vmatpush2.msra.mxu0 %v3335
      %3502 = vmatprep.subr.mxu0 0.0
      %3503 = vmatpush2.msra.mxu0 %v3334
      %3504 = vmatprep.subr.mxu0 0.0
      %3505 = vmatpush2.msra.mxu0 %v3333
      %3506 = vmatprep.subr.mxu0 0.0
      %3507 = vmatpush2.msra.mxu0 %v3332
      %3508 = vmatprep.mubr.f32.mxu0 %v3109
      %3509 = vmatmul.mubr.f32.gmra.mxu0 %v3108
      %v3510 = vpop.f32.mrf.mxu0
      %v3511 = vadd.f32 0.0, %v3510
      %v3512 = vpop.f32.mrf.mxu0
      %3513 = vmatprep.mubr.f32.mxu0 %v3117
      %3514 = vmatmul.mubr.f32.gmra.mxu0 %v3116
      %v3515 = vpop.f32.mrf.mxu0
      %v3516 = vadd.f32 0.0, %v3515
      %v3517 = vpop.f32.mrf.mxu0
      %3518 = vmatprep.mubr.f32.mxu0 %v3125
      %3519 = vmatmul.mubr.f32.gmra.mxu0 %v3124
      %v3520 = vpop.f32.mrf.mxu0
      %v3521 = vadd.f32 0.0, %v3520
      %v3522 = vpop.f32.mrf.mxu0
      %3523 = vmatprep.mubr.f32.mxu0 %v3133
      %3524 = vmatmul.mubr.f32.gmra.mxu0 %v3132
      %v3525 = vpop.f32.mrf.mxu0
      %v3526 = vadd.f32 0.0, %v3525
      %v3527 = vpop.f32.mrf.mxu0
      %3528 = vmatprep.mubr.f32.mxu0 %v3141
      %3529 = vmatmul.mubr.f32.gmra.mxu0 %v3140
      %v3530 = vpop.f32.mrf.mxu0
      %v3531 = vadd.f32 0.0, %v3530
      %v3532 = vpop.f32.mrf.mxu0
      %3533 = vmatprep.mubr.f32.mxu0 %v3149
      %3534 = vmatmul.mubr.f32.gmra.mxu0 %v3148
      %v3535 = vpop.f32.mrf.mxu0
      %v3536 = vadd.f32 0.0, %v3535
      %v3537 = vpop.f32.mrf.mxu0
      %3538 = vmatprep.mubr.f32.mxu0 %v3157
      %3539 = vmatmul.mubr.f32.gmra.mxu0 %v3156
      %v3540 = vpop.f32.mrf.mxu0
      %v3541 = vadd.f32 0.0, %v3540
      %v3542 = vpop.f32.mrf.mxu0
      %3543 = vmatprep.mubr.f32.mxu0 %v3165
      %3544 = vmatmul.mubr.f32.gmra.mxu0 %v3164
      %v3545 = vpop.f32.mrf.mxu0
      %v3546 = vadd.f32 0.0, %v3545
      %v3547 = vpop.f32.mrf.mxu0
      %3548 = vmatprep.mubr.f32.mxu0 %v3173
      %3549 = vmatmul.mubr.f32.gmra.mxu0 %v3172
      %v3550 = vpop.f32.mrf.mxu0
      %v3551 = vadd.f32 0.0, %v3550
      %v3552 = vpop.f32.mrf.mxu0
      %3553 = vmatprep.mubr.f32.mxu0 %v3181
      %3554 = vmatmul.mubr.f32.gmra.mxu0 %v3180
      %v3555 = vpop.f32.mrf.mxu0
      %v3556 = vadd.f32 0.0, %v3555
      %v3557 = vpop.f32.mrf.mxu0
      %3558 = vmatprep.mubr.f32.mxu0 %v3189
      %3559 = vmatmul.mubr.f32.gmra.mxu0 %v3188
      %v3560 = vpop.f32.mrf.mxu0
      %v3561 = vadd.f32 0.0, %v3560
      %v3562 = vpop.f32.mrf.mxu0
      %3563 = vmatprep.mubr.f32.mxu0 %v3197
      %3564 = vmatmul.mubr.f32.gmra.mxu0 %v3196
      %v3565 = vpop.f32.mrf.mxu0
      %v3566 = vadd.f32 0.0, %v3565
      %v3567 = vpop.f32.mrf.mxu0
      %3568 = vmatprep.mubr.f32.mxu0 %v3205
      %3569 = vmatmul.mubr.f32.gmra.mxu0 %v3204
      %v3570 = vpop.f32.mrf.mxu0
      %v3571 = vadd.f32 0.0, %v3570
      %v3572 = vpop.f32.mrf.mxu0
      %3573 = vmatprep.mubr.f32.mxu0 %v3213
      %3574 = vmatmul.mubr.f32.gmra.mxu0 %v3212
      %v3575 = vpop.f32.mrf.mxu0
      %v3576 = vadd.f32 0.0, %v3575
      %v3577 = vpop.f32.mrf.mxu0
      %3578 = vmatprep.mubr.f32.mxu0 %v3221
      %3579 = vmatmul.mubr.f32.gmra.mxu0 %v3220
      %v3580 = vpop.f32.mrf.mxu0
      %v3581 = vadd.f32 0.0, %v3580
      %v3582 = vpop.f32.mrf.mxu0
      %3583 = vmatprep.mubr.f32.mxu0 %v3229
      %3584 = vmatmul.mubr.f32.gmra.mxu0 %v3228
      %v3585 = vpop.f32.mrf.mxu0
      %v3586 = vadd.f32 0.0, %v3585
      %v3587 = vpop.f32.mrf.mxu0
      %3588 = vmatprep.mubr.f32.mxu0 %v3237
      %3589 = vmatmul.mubr.f32.gmra.mxu0 %v3236
      %v3590 = vpop.f32.mrf.mxu0
      %v3591 = vadd.f32 0.0, %v3590
      %v3592 = vpop.f32.mrf.mxu0
      %3593 = vmatprep.mubr.f32.mxu0 %v3245
      %3594 = vmatmul.mubr.f32.gmra.mxu0 %v3244
      %v3595 = vpop.f32.mrf.mxu0
      %v3596 = vadd.f32 0.0, %v3595
      %v3597 = vpop.f32.mrf.mxu0
      %3598 = vmatprep.mubr.f32.mxu0 %v3253
      %3599 = vmatmul.mubr.f32.gmra.mxu0 %v3252
      %v3600 = vpop.f32.mrf.mxu0
      %v3601 = vadd.f32 0.0, %v3600
      %v3602 = vpop.f32.mrf.mxu0
      %3603 = vmatprep.mubr.f32.mxu0 %v3261
      %3604 = vmatmul.mubr.f32.gmra.mxu0 %v3260
      %v3605 = vpop.f32.mrf.mxu0
      %v3606 = vadd.f32 0.0, %v3605
      %v3607 = vpop.f32.mrf.mxu0
      %3608 = vmatprep.mubr.f32.mxu0 %v3269
      %3609 = vmatmul.mubr.f32.gmra.mxu0 %v3268
      %v3610 = vpop.f32.mrf.mxu0
      %v3611 = vadd.f32 0.0, %v3610
      %v3612 = vpop.f32.mrf.mxu0
      %3613 = vmatprep.mubr.f32.mxu0 %v3277
      %3614 = vmatmul.mubr.f32.gmra.mxu0 %v3276
      %v3615 = vpop.f32.mrf.mxu0
      %v3616 = vadd.f32 0.0, %v3615
      %v3617 = vpop.f32.mrf.mxu0
      %3618 = vmatprep.mubr.f32.mxu0 %v3285
      %3619 = vmatmul.mubr.f32.gmra.mxu0 %v3284
      %v3620 = vpop.f32.mrf.mxu0
      %v3621 = vadd.f32 0.0, %v3620
      %v3622 = vpop.f32.mrf.mxu0
      %3623 = vmatprep.mubr.f32.mxu0 %v3293
      %3624 = vmatmul.mubr.f32.gmra.mxu0 %v3292
      %v3625 = vpop.f32.mrf.mxu0
      %v3626 = vadd.f32 0.0, %v3625
      %v3627 = vpop.f32.mrf.mxu0
      %3628 = vmatprep.mubr.f32.mxu0 %v3301
      %3629 = vmatmul.mubr.f32.gmra.mxu0 %v3300
      %v3630 = vpop.f32.mrf.mxu0
      %v3631 = vadd.f32 0.0, %v3630
      %v3632 = vpop.f32.mrf.mxu0
      %3633 = vmatprep.mubr.f32.mxu0 %v3309
      %3634 = vmatmul.mubr.f32.gmra.mxu0 %v3308
      %v3635 = vpop.f32.mrf.mxu0
      %v3636 = vadd.f32 0.0, %v3635
      %v3637 = vpop.f32.mrf.mxu0
      %3638 = vdwg.mxu0
      %3639 = vmatprep.subr.mxu0 0.0
      %3640 = vmatpush1.msra.mxu0 %v3363
      %3641 = vmatprep.subr.mxu0 0.0
      %3642 = vmatpush1.msra.mxu0 %v3362
      %3643 = vmatprep.subr.mxu0 0.0
      %3644 = vmatpush1.msra.mxu0 %v3361
      %3645 = vmatprep.subr.mxu0 0.0
      %3646 = vmatpush1.msra.mxu0 %v3360
      %3647 = vmatprep.subr.mxu0 0.0
      %3648 = vmatpush1.msra.mxu0 %v3359
      %3649 = vmatprep.subr.mxu0 0.0
      %3650 = vmatpush1.msra.mxu0 %v3358
      %3651 = vmatprep.subr.mxu0 0.0
      %3652 = vmatpush1.msra.mxu0 %v3357
      %3653 = vmatprep.subr.mxu0 0.0
      %3654 = vmatpush1.msra.mxu0 %v3356
      %3655 = vmatprep.subr.mxu0 0.0
      %3656 = vmatpush1.msra.mxu0 %v3355
      %3657 = vmatprep.subr.mxu0 0.0
      %3658 = vmatpush1.msra.mxu0 %v3354
      %3659 = vmatprep.subr.mxu0 0.0
      %3660 = vmatpush1.msra.mxu0 %v3353
      %3661 = vmatprep.subr.mxu0 0.0
      %3662 = vmatpush1.msra.mxu0 %v3352
      %3663 = vmatprep.subr.mxu0 0.0
      %3664 = vmatpush1.msra.mxu0 %v3351
      %3665 = vmatprep.subr.mxu0 0.0
      %3666 = vmatpush1.msra.mxu0 %v3350
      %3667 = vmatprep.subr.mxu0 0.0
      %3668 = vmatpush1.msra.mxu0 %v3349
      %3669 = vmatprep.subr.mxu0 0.0
      %3670 = vmatpush1.msra.mxu0 %v3348
      %3671 = vmatprep.subr.mxu0 0.0
      %3672 = vmatpush2.msra.mxu0 %v3379
      %3673 = vmatprep.subr.mxu0 0.0
      %3674 = vmatpush2.msra.mxu0 %v3378
      %3675 = vmatprep.subr.mxu0 0.0
      %3676 = vmatpush2.msra.mxu0 %v3377
      %3677 = vmatprep.subr.mxu0 0.0
      %3678 = vmatpush2.msra.mxu0 %v3376
      %3679 = vmatprep.subr.mxu0 0.0
      %3680 = vmatpush2.msra.mxu0 %v3375
      %3681 = vmatprep.subr.mxu0 0.0
      %3682 = vmatpush2.msra.mxu0 %v3374
      %3683 = vmatprep.subr.mxu0 0.0
      %3684 = vmatpush2.msra.mxu0 %v3373
      %3685 = vmatprep.subr.mxu0 0.0
      %3686 = vmatpush2.msra.mxu0 %v3372
      %3687 = vmatprep.subr.mxu0 0.0
      %3688 = vmatpush2.msra.mxu0 %v3371
      %3689 = vmatprep.subr.mxu0 0.0
      %3690 = vmatpush2.msra.mxu0 %v3370
      %3691 = vmatprep.subr.mxu0 0.0
      %3692 = vmatpush2.msra.mxu0 %v3369
      %3693 = vmatprep.subr.mxu0 0.0
      %3694 = vmatpush2.msra.mxu0 %v3368
      %3695 = vmatprep.subr.mxu0 0.0
      %3696 = vmatpush2.msra.mxu0 %v3367
      %3697 = vmatprep.subr.mxu0 0.0
      %3698 = vmatpush2.msra.mxu0 %v3366
      %3699 = vmatprep.subr.mxu0 0.0
      %3700 = vmatpush2.msra.mxu0 %v3365
      %3701 = vmatprep.subr.mxu0 0.0
      %3702 = vmatpush2.msra.mxu0 %v3364
      %3703 = vmatprep.mubr.f32.mxu0 %v3111
      %3704 = vmatmul.mubr.f32.gmra.mxu0 %v3110
      %v3705 = vpop.f32.mrf.mxu0
      %v3706 = vadd.f32 %v3511, %v3705
      %v3707 = vpop.f32.mrf.mxu0
      %3708 = vmatprep.mubr.f32.mxu0 %v3119
      %3709 = vmatmul.mubr.f32.gmra.mxu0 %v3118
      %v3710 = vpop.f32.mrf.mxu0
      %v3711 = vadd.f32 %v3516, %v3710
      %v3712 = vpop.f32.mrf.mxu0
      %3713 = vmatprep.mubr.f32.mxu0 %v3127
      %3714 = vmatmul.mubr.f32.gmra.mxu0 %v3126
      %v3715 = vpop.f32.mrf.mxu0
      %v3716 = vadd.f32 %v3521, %v3715
      %v3717 = vpop.f32.mrf.mxu0
      %3718 = vmatprep.mubr.f32.mxu0 %v3135
      %3719 = vmatmul.mubr.f32.gmra.mxu0 %v3134
      %v3720 = vpop.f32.mrf.mxu0
      %v3721 = vadd.f32 %v3526, %v3720
      %v3722 = vpop.f32.mrf.mxu0
      %3723 = vmatprep.mubr.f32.mxu0 %v3143
      %3724 = vmatmul.mubr.f32.gmra.mxu0 %v3142
      %v3725 = vpop.f32.mrf.mxu0
      %v3726 = vadd.f32 %v3531, %v3725
      %v3727 = vpop.f32.mrf.mxu0
      %3728 = vmatprep.mubr.f32.mxu0 %v3151
      %3729 = vmatmul.mubr.f32.gmra.mxu0 %v3150
      %v3730 = vpop.f32.mrf.mxu0
      %v3731 = vadd.f32 %v3536, %v3730
      %v3732 = vpop.f32.mrf.mxu0
      %3733 = vmatprep.mubr.f32.mxu0 %v3159
      %3734 = vmatmul.mubr.f32.gmra.mxu0 %v3158
      %v3735 = vpop.f32.mrf.mxu0
      %v3736 = vadd.f32 %v3541, %v3735
      %v3737 = vpop.f32.mrf.mxu0
      %3738 = vmatprep.mubr.f32.mxu0 %v3167
      %3739 = vmatmul.mubr.f32.gmra.mxu0 %v3166
      %v3740 = vpop.f32.mrf.mxu0
      %v3741 = vadd.f32 %v3546, %v3740
      %v3742 = vpop.f32.mrf.mxu0
      %3743 = vmatprep.mubr.f32.mxu0 %v3175
      %3744 = vmatmul.mubr.f32.gmra.mxu0 %v3174
      %v3745 = vpop.f32.mrf.mxu0
      %v3746 = vadd.f32 %v3551, %v3745
      %v3747 = vpop.f32.mrf.mxu0
      %3748 = vmatprep.mubr.f32.mxu0 %v3183
      %3749 = vmatmul.mubr.f32.gmra.mxu0 %v3182
      %v3750 = vpop.f32.mrf.mxu0
      %v3751 = vadd.f32 %v3556, %v3750
      %v3752 = vpop.f32.mrf.mxu0
      %3753 = vmatprep.mubr.f32.mxu0 %v3191
      %3754 = vmatmul.mubr.f32.gmra.mxu0 %v3190
      %v3755 = vpop.f32.mrf.mxu0
      %v3756 = vadd.f32 %v3561, %v3755
      %v3757 = vpop.f32.mrf.mxu0
      %3758 = vmatprep.mubr.f32.mxu0 %v3199
      %3759 = vmatmul.mubr.f32.gmra.mxu0 %v3198
      %v3760 = vpop.f32.mrf.mxu0
      %v3761 = vadd.f32 %v3566, %v3760
      %v3762 = vpop.f32.mrf.mxu0
      %3763 = vmatprep.mubr.f32.mxu0 %v3207
      %3764 = vmatmul.mubr.f32.gmra.mxu0 %v3206
      %v3765 = vpop.f32.mrf.mxu0
      %v3766 = vadd.f32 %v3571, %v3765
      %v3767 = vpop.f32.mrf.mxu0
      %3768 = vmatprep.mubr.f32.mxu0 %v3215
      %3769 = vmatmul.mubr.f32.gmra.mxu0 %v3214
      %v3770 = vpop.f32.mrf.mxu0
      %v3771 = vadd.f32 %v3576, %v3770
      %v3772 = vpop.f32.mrf.mxu0
      %3773 = vmatprep.mubr.f32.mxu0 %v3223
      %3774 = vmatmul.mubr.f32.gmra.mxu0 %v3222
      %v3775 = vpop.f32.mrf.mxu0
      %v3776 = vadd.f32 %v3581, %v3775
      %v3777 = vpop.f32.mrf.mxu0
      %3778 = vmatprep.mubr.f32.mxu0 %v3231
      %3779 = vmatmul.mubr.f32.gmra.mxu0 %v3230
      %v3780 = vpop.f32.mrf.mxu0
      %v3781 = vadd.f32 %v3586, %v3780
      %v3782 = vpop.f32.mrf.mxu0
      %3783 = vmatprep.mubr.f32.mxu0 %v3239
      %3784 = vmatmul.mubr.f32.gmra.mxu0 %v3238
      %v3785 = vpop.f32.mrf.mxu0
      %v3786 = vadd.f32 %v3591, %v3785
      %v3787 = vpop.f32.mrf.mxu0
      %3788 = vmatprep.mubr.f32.mxu0 %v3247
      %3789 = vmatmul.mubr.f32.gmra.mxu0 %v3246
      %v3790 = vpop.f32.mrf.mxu0
      %v3791 = vadd.f32 %v3596, %v3790
      %v3792 = vpop.f32.mrf.mxu0
      %3793 = vmatprep.mubr.f32.mxu0 %v3255
      %3794 = vmatmul.mubr.f32.gmra.mxu0 %v3254
      %v3795 = vpop.f32.mrf.mxu0
      %v3796 = vadd.f32 %v3601, %v3795
      %v3797 = vpop.f32.mrf.mxu0
      %3798 = vmatprep.mubr.f32.mxu0 %v3263
      %3799 = vmatmul.mubr.f32.gmra.mxu0 %v3262
      %v3800 = vpop.f32.mrf.mxu0
      %v3801 = vadd.f32 %v3606, %v3800
      %v3802 = vpop.f32.mrf.mxu0
      %3803 = vmatprep.mubr.f32.mxu0 %v3271
      %3804 = vmatmul.mubr.f32.gmra.mxu0 %v3270
      %v3805 = vpop.f32.mrf.mxu0
      %v3806 = vadd.f32 %v3611, %v3805
      %v3807 = vpop.f32.mrf.mxu0
      %3808 = vmatprep.mubr.f32.mxu0 %v3279
      %3809 = vmatmul.mubr.f32.gmra.mxu0 %v3278
      %v3810 = vpop.f32.mrf.mxu0
      %v3811 = vadd.f32 %v3616, %v3810
      %v3812 = vpop.f32.mrf.mxu0
      %3813 = vmatprep.mubr.f32.mxu0 %v3287
      %3814 = vmatmul.mubr.f32.gmra.mxu0 %v3286
      %v3815 = vpop.f32.mrf.mxu0
      %v3816 = vadd.f32 %v3621, %v3815
      %v3817 = vpop.f32.mrf.mxu0
      %3818 = vmatprep.mubr.f32.mxu0 %v3295
      %3819 = vmatmul.mubr.f32.gmra.mxu0 %v3294
      %v3820 = vpop.f32.mrf.mxu0
      %v3821 = vadd.f32 %v3626, %v3820
      %v3822 = vpop.f32.mrf.mxu0
      %3823 = vmatprep.mubr.f32.mxu0 %v3303
      %3824 = vmatmul.mubr.f32.gmra.mxu0 %v3302
      %v3825 = vpop.f32.mrf.mxu0
      %v3826 = vadd.f32 %v3631, %v3825
      %v3827 = vpop.f32.mrf.mxu0
      %3828 = vmatprep.mubr.f32.mxu0 %v3311
      %3829 = vmatmul.mubr.f32.gmra.mxu0 %v3310
      %v3830 = vpop.f32.mrf.mxu0
      %v3831 = vadd.f32 %v3636, %v3830
      %v3832 = vpop.f32.mrf.mxu0
      %3833 = vdwg.mxu0
      %3834 = vmatprep.subr.mxu0 0.0
      %3835 = vmatpush1.msra.mxu0 %v3395
      %3836 = vmatprep.subr.mxu0 0.0
      %3837 = vmatpush1.msra.mxu0 %v3394
      %3838 = vmatprep.subr.mxu0 0.0
      %3839 = vmatpush1.msra.mxu0 %v3393
      %3840 = vmatprep.subr.mxu0 0.0
      %3841 = vmatpush1.msra.mxu0 %v3392
      %3842 = vmatprep.subr.mxu0 0.0
      %3843 = vmatpush1.msra.mxu0 %v3391
      %3844 = vmatprep.subr.mxu0 0.0
      %3845 = vmatpush1.msra.mxu0 %v3390
      %3846 = vmatprep.subr.mxu0 0.0
      %3847 = vmatpush1.msra.mxu0 %v3389
      %3848 = vmatprep.subr.mxu0 0.0
      %3849 = vmatpush1.msra.mxu0 %v3388
      %3850 = vmatprep.subr.mxu0 0.0
      %3851 = vmatpush1.msra.mxu0 %v3387
      %3852 = vmatprep.subr.mxu0 0.0
      %3853 = vmatpush1.msra.mxu0 %v3386
      %3854 = vmatprep.subr.mxu0 0.0
      %3855 = vmatpush1.msra.mxu0 %v3385
      %3856 = vmatprep.subr.mxu0 0.0
      %3857 = vmatpush1.msra.mxu0 %v3384
      %3858 = vmatprep.subr.mxu0 0.0
      %3859 = vmatpush1.msra.mxu0 %v3383
      %3860 = vmatprep.subr.mxu0 0.0
      %3861 = vmatpush1.msra.mxu0 %v3382
      %3862 = vmatprep.subr.mxu0 0.0
      %3863 = vmatpush1.msra.mxu0 %v3381
      %3864 = vmatprep.subr.mxu0 0.0
      %3865 = vmatpush1.msra.mxu0 %v3380
      %3866 = vmatprep.subr.mxu0 0.0
      %3867 = vmatpush2.msra.mxu0 %v3411
      %3868 = vmatprep.subr.mxu0 0.0
      %3869 = vmatpush2.msra.mxu0 %v3410
      %3870 = vmatprep.subr.mxu0 0.0
      %3871 = vmatpush2.msra.mxu0 %v3409
      %3872 = vmatprep.subr.mxu0 0.0
      %3873 = vmatpush2.msra.mxu0 %v3408
      %3874 = vmatprep.subr.mxu0 0.0
      %3875 = vmatpush2.msra.mxu0 %v3407
      %3876 = vmatprep.subr.mxu0 0.0
      %3877 = vmatpush2.msra.mxu0 %v3406
      %3878 = vmatprep.subr.mxu0 0.0
      %3879 = vmatpush2.msra.mxu0 %v3405
      %3880 = vmatprep.subr.mxu0 0.0
      %3881 = vmatpush2.msra.mxu0 %v3404
      %3882 = vmatprep.subr.mxu0 0.0
      %3883 = vmatpush2.msra.mxu0 %v3403
      %3884 = vmatprep.subr.mxu0 0.0
      %3885 = vmatpush2.msra.mxu0 %v3402
      %3886 = vmatprep.subr.mxu0 0.0
      %3887 = vmatpush2.msra.mxu0 %v3401
      %3888 = vmatprep.subr.mxu0 0.0
      %3889 = vmatpush2.msra.mxu0 %v3400
      %3890 = vmatprep.subr.mxu0 0.0
      %3891 = vmatpush2.msra.mxu0 %v3399
      %3892 = vmatprep.subr.mxu0 0.0
      %3893 = vmatpush2.msra.mxu0 %v3398
      %3894 = vmatprep.subr.mxu0 0.0
      %3895 = vmatpush2.msra.mxu0 %v3397
      %3896 = vmatprep.subr.mxu0 0.0
      %3897 = vmatpush2.msra.mxu0 %v3396
      %3898 = vmatprep.mubr.f32.mxu0 %v3113
      %3899 = vmatmul.mubr.f32.gmra.mxu0 %v3112
      %v3900 = vpop.f32.mrf.mxu0
      %v3901 = vadd.f32 %v3706, %v3900
      %v3902 = vpop.f32.mrf.mxu0
      %3903 = vmatprep.mubr.f32.mxu0 %v3121
      %3904 = vmatmul.mubr.f32.gmra.mxu0 %v3120
      %v3905 = vpop.f32.mrf.mxu0
      %v3906 = vadd.f32 %v3711, %v3905
      %v3907 = vpop.f32.mrf.mxu0
      %3908 = vmatprep.mubr.f32.mxu0 %v3129
      %3909 = vmatmul.mubr.f32.gmra.mxu0 %v3128
      %v3910 = vpop.f32.mrf.mxu0
      %v3911 = vadd.f32 %v3716, %v3910
      %v3912 = vpop.f32.mrf.mxu0
      %3913 = vmatprep.mubr.f32.mxu0 %v3137
      %3914 = vmatmul.mubr.f32.gmra.mxu0 %v3136
      %v3915 = vpop.f32.mrf.mxu0
      %v3916 = vadd.f32 %v3721, %v3915
      %v3917 = vpop.f32.mrf.mxu0
      %3918 = vmatprep.mubr.f32.mxu0 %v3145
      %3919 = vmatmul.mubr.f32.gmra.mxu0 %v3144
      %v3920 = vpop.f32.mrf.mxu0
      %v3921 = vadd.f32 %v3726, %v3920
      %v3922 = vpop.f32.mrf.mxu0
      %3923 = vmatprep.mubr.f32.mxu0 %v3153
      %3924 = vmatmul.mubr.f32.gmra.mxu0 %v3152
      %v3925 = vpop.f32.mrf.mxu0
      %v3926 = vadd.f32 %v3731, %v3925
      %v3927 = vpop.f32.mrf.mxu0
      %3928 = vmatprep.mubr.f32.mxu0 %v3161
      %3929 = vmatmul.mubr.f32.gmra.mxu0 %v3160
      %v3930 = vpop.f32.mrf.mxu0
      %v3931 = vadd.f32 %v3736, %v3930
      %v3932 = vpop.f32.mrf.mxu0
      %3933 = vmatprep.mubr.f32.mxu0 %v3169
      %3934 = vmatmul.mubr.f32.gmra.mxu0 %v3168
      %v3935 = vpop.f32.mrf.mxu0
      %v3936 = vadd.f32 %v3741, %v3935
      %v3937 = vpop.f32.mrf.mxu0
      %3938 = vmatprep.mubr.f32.mxu0 %v3177
      %3939 = vmatmul.mubr.f32.gmra.mxu0 %v3176
      %v3940 = vpop.f32.mrf.mxu0
      %v3941 = vadd.f32 %v3746, %v3940
      %v3942 = vpop.f32.mrf.mxu0
      %3943 = vmatprep.mubr.f32.mxu0 %v3185
      %3944 = vmatmul.mubr.f32.gmra.mxu0 %v3184
      %v3945 = vpop.f32.mrf.mxu0
      %v3946 = vadd.f32 %v3751, %v3945
      %v3947 = vpop.f32.mrf.mxu0
      %3948 = vmatprep.mubr.f32.mxu0 %v3193
      %3949 = vmatmul.mubr.f32.gmra.mxu0 %v3192
      %v3950 = vpop.f32.mrf.mxu0
      %v3951 = vadd.f32 %v3756, %v3950
      %v3952 = vpop.f32.mrf.mxu0
      %3953 = vmatprep.mubr.f32.mxu0 %v3201
      %3954 = vmatmul.mubr.f32.gmra.mxu0 %v3200
      %v3955 = vpop.f32.mrf.mxu0
      %v3956 = vadd.f32 %v3761, %v3955
      %v3957 = vpop.f32.mrf.mxu0
      %3958 = vmatprep.mubr.f32.mxu0 %v3209
      %3959 = vmatmul.mubr.f32.gmra.mxu0 %v3208
      %v3960 = vpop.f32.mrf.mxu0
      %v3961 = vadd.f32 %v3766, %v3960
      %v3962 = vpop.f32.mrf.mxu0
      %3963 = vmatprep.mubr.f32.mxu0 %v3217
      %3964 = vmatmul.mubr.f32.gmra.mxu0 %v3216
      %v3965 = vpop.f32.mrf.mxu0
      %v3966 = vadd.f32 %v3771, %v3965
      %v3967 = vpop.f32.mrf.mxu0
      %3968 = vmatprep.mubr.f32.mxu0 %v3225
      %3969 = vmatmul.mubr.f32.gmra.mxu0 %v3224
      %v3970 = vpop.f32.mrf.mxu0
      %v3971 = vadd.f32 %v3776, %v3970
      %v3972 = vpop.f32.mrf.mxu0
      %3973 = vmatprep.mubr.f32.mxu0 %v3233
      %3974 = vmatmul.mubr.f32.gmra.mxu0 %v3232
      %v3975 = vpop.f32.mrf.mxu0
      %v3976 = vadd.f32 %v3781, %v3975
      %v3977 = vpop.f32.mrf.mxu0
      %3978 = vmatprep.mubr.f32.mxu0 %v3241
      %3979 = vmatmul.mubr.f32.gmra.mxu0 %v3240
      %v3980 = vpop.f32.mrf.mxu0
      %v3981 = vadd.f32 %v3786, %v3980
      %v3982 = vpop.f32.mrf.mxu0
      %3983 = vmatprep.mubr.f32.mxu0 %v3249
      %3984 = vmatmul.mubr.f32.gmra.mxu0 %v3248
      %v3985 = vpop.f32.mrf.mxu0
      %v3986 = vadd.f32 %v3791, %v3985
      %v3987 = vpop.f32.mrf.mxu0
      %3988 = vmatprep.mubr.f32.mxu0 %v3257
      %3989 = vmatmul.mubr.f32.gmra.mxu0 %v3256
      %v3990 = vpop.f32.mrf.mxu0
      %v3991 = vadd.f32 %v3796, %v3990
      %v3992 = vpop.f32.mrf.mxu0
      %3993 = vmatprep.mubr.f32.mxu0 %v3265
      %3994 = vmatmul.mubr.f32.gmra.mxu0 %v3264
      %v3995 = vpop.f32.mrf.mxu0
      %v3996 = vadd.f32 %v3801, %v3995
      %v3997 = vpop.f32.mrf.mxu0
      %3998 = vmatprep.mubr.f32.mxu0 %v3273
      %3999 = vmatmul.mubr.f32.gmra.mxu0 %v3272
      %v4000 = vpop.f32.mrf.mxu0
      %v4001 = vadd.f32 %v3806, %v4000
      %v4002 = vpop.f32.mrf.mxu0
      %4003 = vmatprep.mubr.f32.mxu0 %v3281
      %4004 = vmatmul.mubr.f32.gmra.mxu0 %v3280
      %v4005 = vpop.f32.mrf.mxu0
      %v4006 = vadd.f32 %v3811, %v4005
      %v4007 = vpop.f32.mrf.mxu0
      %4008 = vmatprep.mubr.f32.mxu0 %v3289
      %4009 = vmatmul.mubr.f32.gmra.mxu0 %v3288
      %v4010 = vpop.f32.mrf.mxu0
      %v4011 = vadd.f32 %v3816, %v4010
      %v4012 = vpop.f32.mrf.mxu0
      %4013 = vmatprep.mubr.f32.mxu0 %v3297
      %4014 = vmatmul.mubr.f32.gmra.mxu0 %v3296
      %v4015 = vpop.f32.mrf.mxu0
      %v4016 = vadd.f32 %v3821, %v4015
      %v4017 = vpop.f32.mrf.mxu0
      %4018 = vmatprep.mubr.f32.mxu0 %v3305
      %4019 = vmatmul.mubr.f32.gmra.mxu0 %v3304
      %v4020 = vpop.f32.mrf.mxu0
      %v4021 = vadd.f32 %v3826, %v4020
      %v4022 = vpop.f32.mrf.mxu0
      %4023 = vmatprep.mubr.f32.mxu0 %v3313
      %4024 = vmatmul.mubr.f32.gmra.mxu0 %v3312
      %v4025 = vpop.f32.mrf.mxu0
      %v4026 = vadd.f32 %v3831, %v4025
      %v4027 = vpop.f32.mrf.mxu0
      %4028 = vdwg.mxu0
      %4029 = vmatprep.subr.mxu0 0.0
      %4030 = vmatpush1.msra.mxu0 %v3427
      %4031 = vmatprep.subr.mxu0 0.0
      %4032 = vmatpush1.msra.mxu0 %v3426
      %4033 = vmatprep.subr.mxu0 0.0
      %4034 = vmatpush1.msra.mxu0 %v3425
      %4035 = vmatprep.subr.mxu0 0.0
      %4036 = vmatpush1.msra.mxu0 %v3424
      %4037 = vmatprep.subr.mxu0 0.0
      %4038 = vmatpush1.msra.mxu0 %v3423
      %4039 = vmatprep.subr.mxu0 0.0
      %4040 = vmatpush1.msra.mxu0 %v3422
      %4041 = vmatprep.subr.mxu0 0.0
      %4042 = vmatpush1.msra.mxu0 %v3421
      %4043 = vmatprep.subr.mxu0 0.0
      %4044 = vmatpush1.msra.mxu0 %v3420
      %4045 = vmatprep.subr.mxu0 0.0
      %4046 = vmatpush1.msra.mxu0 %v3419
      %4047 = vmatprep.subr.mxu0 0.0
      %4048 = vmatpush1.msra.mxu0 %v3418
      %4049 = vmatprep.subr.mxu0 0.0
      %4050 = vmatpush1.msra.mxu0 %v3417
      %4051 = vmatprep.subr.mxu0 0.0
      %4052 = vmatpush1.msra.mxu0 %v3416
      %4053 = vmatprep.subr.mxu0 0.0
      %4054 = vmatpush1.msra.mxu0 %v3415
      %4055 = vmatprep.subr.mxu0 0.0
      %4056 = vmatpush1.msra.mxu0 %v3414
      %4057 = vmatprep.subr.mxu0 0.0
      %4058 = vmatpush1.msra.mxu0 %v3413
      %4059 = vmatprep.subr.mxu0 0.0
      %4060 = vmatpush1.msra.mxu0 %v3412
      %4061 = vmatprep.subr.mxu0 0.0
      %4062 = vmatpush2.msra.mxu0 %v3443
      %4063 = vmatprep.subr.mxu0 0.0
      %4064 = vmatpush2.msra.mxu0 %v3442
      %4065 = vmatprep.subr.mxu0 0.0
      %4066 = vmatpush2.msra.mxu0 %v3441
      %4067 = vmatprep.subr.mxu0 0.0
      %4068 = vmatpush2.msra.mxu0 %v3440
      %4069 = vmatprep.subr.mxu0 0.0
      %4070 = vmatpush2.msra.mxu0 %v3439
      %4071 = vmatprep.subr.mxu0 0.0
      %4072 = vmatpush2.msra.mxu0 %v3438
      %4073 = vmatprep.subr.mxu0 0.0
      %4074 = vmatpush2.msra.mxu0 %v3437
      %4075 = vmatprep.subr.mxu0 0.0
      %4076 = vmatpush2.msra.mxu0 %v3436
      %4077 = vmatprep.subr.mxu0 0.0
      %4078 = vmatpush2.msra.mxu0 %v3435
      %4079 = vmatprep.subr.mxu0 0.0
      %4080 = vmatpush2.msra.mxu0 %v3434
      %4081 = vmatprep.subr.mxu0 0.0
      %4082 = vmatpush2.msra.mxu0 %v3433
      %4083 = vmatprep.subr.mxu0 0.0
      %4084 = vmatpush2.msra.mxu0 %v3432
      %4085 = vmatprep.subr.mxu0 0.0
      %4086 = vmatpush2.msra.mxu0 %v3431
      %4087 = vmatprep.subr.mxu0 0.0
      %4088 = vmatpush2.msra.mxu0 %v3430
      %4089 = vmatprep.subr.mxu0 0.0
      %4090 = vmatpush2.msra.mxu0 %v3429
      %4091 = vmatprep.subr.mxu0 0.0
      %4092 = vmatpush2.msra.mxu0 %v3428
      %4093 = vmatprep.mubr.f32.mxu0 %v3115
      %4094 = vmatmul.mubr.f32.gmra.mxu0 %v3114
      %v4095 = vpop.f32.mrf.mxu0
      %v4096 = vadd.f32 %v3901, %v4095
      %v4097 = vpop.f32.mrf.mxu0
      %4098 = vmatprep.mubr.f32.mxu0 %v3123
      %4099 = vmatmul.mubr.f32.gmra.mxu0 %v3122
      %v4100 = vpop.f32.mrf.mxu0
      %v4101 = vadd.f32 %v3906, %v4100
      %v4102 = vpop.f32.mrf.mxu0
      %4103 = vmatprep.mubr.f32.mxu0 %v3131
      %4104 = vmatmul.mubr.f32.gmra.mxu0 %v3130
      %v4105 = vpop.f32.mrf.mxu0
      %v4106 = vadd.f32 %v3911, %v4105
      %v4107 = vpop.f32.mrf.mxu0
      %4108 = vmatprep.mubr.f32.mxu0 %v3139
      %4109 = vmatmul.mubr.f32.gmra.mxu0 %v3138
      %v4110 = vpop.f32.mrf.mxu0
      %v4111 = vadd.f32 %v3916, %v4110
      %v4112 = vpop.f32.mrf.mxu0
      %4113 = vmatprep.mubr.f32.mxu0 %v3147
      %4114 = vmatmul.mubr.f32.gmra.mxu0 %v3146
      %v4115 = vpop.f32.mrf.mxu0
      %v4116 = vadd.f32 %v3921, %v4115
      %v4117 = vpop.f32.mrf.mxu0
      %4118 = vmatprep.mubr.f32.mxu0 %v3155
      %4119 = vmatmul.mubr.f32.gmra.mxu0 %v3154
      %v4120 = vpop.f32.mrf.mxu0
      %v4121 = vadd.f32 %v3926, %v4120
      %v4122 = vpop.f32.mrf.mxu0
      %4123 = vmatprep.mubr.f32.mxu0 %v3163
      %4124 = vmatmul.mubr.f32.gmra.mxu0 %v3162
      %v4125 = vpop.f32.mrf.mxu0
      %v4126 = vadd.f32 %v3931, %v4125
      %v4127 = vpop.f32.mrf.mxu0
      %4128 = vmatprep.mubr.f32.mxu0 %v3171
      %4129 = vmatmul.mubr.f32.gmra.mxu0 %v3170
      %v4130 = vpop.f32.mrf.mxu0
      %v4131 = vadd.f32 %v3936, %v4130
      %v4132 = vpop.f32.mrf.mxu0
      %4133 = vmatprep.mubr.f32.mxu0 %v3179
      %4134 = vmatmul.mubr.f32.gmra.mxu0 %v3178
      %v4135 = vpop.f32.mrf.mxu0
      %v4136 = vadd.f32 %v3941, %v4135
      %v4137 = vpop.f32.mrf.mxu0
      %4138 = vmatprep.mubr.f32.mxu0 %v3187
      %4139 = vmatmul.mubr.f32.gmra.mxu0 %v3186
      %v4140 = vpop.f32.mrf.mxu0
      %v4141 = vadd.f32 %v3946, %v4140
      %v4142 = vpop.f32.mrf.mxu0
      %4143 = vmatprep.mubr.f32.mxu0 %v3195
      %4144 = vmatmul.mubr.f32.gmra.mxu0 %v3194
      %v4145 = vpop.f32.mrf.mxu0
      %v4146 = vadd.f32 %v3951, %v4145
      %v4147 = vpop.f32.mrf.mxu0
      %4148 = vmatprep.mubr.f32.mxu0 %v3203
      %4149 = vmatmul.mubr.f32.gmra.mxu0 %v3202
      %v4150 = vpop.f32.mrf.mxu0
      %v4151 = vadd.f32 %v3956, %v4150
      %v4152 = vpop.f32.mrf.mxu0
      %4153 = vmatprep.mubr.f32.mxu0 %v3211
      %4154 = vmatmul.mubr.f32.gmra.mxu0 %v3210
      %v4155 = vpop.f32.mrf.mxu0
      %v4156 = vadd.f32 %v3961, %v4155
      %v4157 = vpop.f32.mrf.mxu0
      %4158 = vmatprep.mubr.f32.mxu0 %v3219
      %4159 = vmatmul.mubr.f32.gmra.mxu0 %v3218
      %v4160 = vpop.f32.mrf.mxu0
      %v4161 = vadd.f32 %v3966, %v4160
      %v4162 = vpop.f32.mrf.mxu0
      %4163 = vmatprep.mubr.f32.mxu0 %v3227
      %4164 = vmatmul.mubr.f32.gmra.mxu0 %v3226
      %v4165 = vpop.f32.mrf.mxu0
      %v4166 = vadd.f32 %v3971, %v4165
      %v4167 = vpop.f32.mrf.mxu0
      %4168 = vmatprep.mubr.f32.mxu0 %v3235
      %4169 = vmatmul.mubr.f32.gmra.mxu0 %v3234
      %v4170 = vpop.f32.mrf.mxu0
      %v4171 = vadd.f32 %v3976, %v4170
      %v4172 = vpop.f32.mrf.mxu0
      %4173 = vmatprep.mubr.f32.mxu0 %v3243
      %4174 = vmatmul.mubr.f32.gmra.mxu0 %v3242
      %v4175 = vpop.f32.mrf.mxu0
      %v4176 = vadd.f32 %v3981, %v4175
      %v4177 = vpop.f32.mrf.mxu0
      %4178 = vmatprep.mubr.f32.mxu0 %v3251
      %4179 = vmatmul.mubr.f32.gmra.mxu0 %v3250
      %v4180 = vpop.f32.mrf.mxu0
      %v4181 = vadd.f32 %v3986, %v4180
      %v4182 = vpop.f32.mrf.mxu0
      %4183 = vmatprep.mubr.f32.mxu0 %v3259
      %4184 = vmatmul.mubr.f32.gmra.mxu0 %v3258
      %v4185 = vpop.f32.mrf.mxu0
      %v4186 = vadd.f32 %v3991, %v4185
      %v4187 = vpop.f32.mrf.mxu0
      %4188 = vmatprep.mubr.f32.mxu0 %v3267
      %4189 = vmatmul.mubr.f32.gmra.mxu0 %v3266
      %v4190 = vpop.f32.mrf.mxu0
      %v4191 = vadd.f32 %v3996, %v4190
      %v4192 = vpop.f32.mrf.mxu0
      %4193 = vmatprep.mubr.f32.mxu0 %v3275
      %4194 = vmatmul.mubr.f32.gmra.mxu0 %v3274
      %v4195 = vpop.f32.mrf.mxu0
      %v4196 = vadd.f32 %v4001, %v4195
      %v4197 = vpop.f32.mrf.mxu0
      %4198 = vmatprep.mubr.f32.mxu0 %v3283
      %4199 = vmatmul.mubr.f32.gmra.mxu0 %v3282
      %v4200 = vpop.f32.mrf.mxu0
      %v4201 = vadd.f32 %v4006, %v4200
      %v4202 = vpop.f32.mrf.mxu0
      %4203 = vmatprep.mubr.f32.mxu0 %v3291
      %4204 = vmatmul.mubr.f32.gmra.mxu0 %v3290
      %v4205 = vpop.f32.mrf.mxu0
      %v4206 = vadd.f32 %v4011, %v4205
      %v4207 = vpop.f32.mrf.mxu0
      %4208 = vmatprep.mubr.f32.mxu0 %v3299
      %4209 = vmatmul.mubr.f32.gmra.mxu0 %v3298
      %v4210 = vpop.f32.mrf.mxu0
      %v4211 = vadd.f32 %v4016, %v4210
      %v4212 = vpop.f32.mrf.mxu0
      %4213 = vmatprep.mubr.f32.mxu0 %v3307
      %4214 = vmatmul.mubr.f32.gmra.mxu0 %v3306
      %v4215 = vpop.f32.mrf.mxu0
      %v4216 = vadd.f32 %v4021, %v4215
      %v4217 = vpop.f32.mrf.mxu0
      %4218 = vmatprep.mubr.f32.mxu0 %v3315
      %4219 = vmatmul.mubr.f32.gmra.mxu0 %v3314
      %v4220 = vpop.f32.mrf.mxu0
      %v4221 = vadd.f32 %v4026, %v4220
      %v4222 = vpop.f32.mrf.mxu0
      %4223 = vdwg.mxu0
      %4225 = vset.pattern.permute.xlu0 32
      %4226 = vperm.xlu0 %4225, %v4096
      %v4227 = vpop.permute.xlu0 %4226
      %4230 = vset.pattern.permute.xlu0 32
      %4231 = vperm.xlu0 %4230, %v4101
      %v4232 = vpop.permute.xlu0 %4231
      %4235 = vset.pattern.permute.xlu0 32
      %4236 = vperm.xlu0 %4235, %v4106
      %v4237 = vpop.permute.xlu0 %4236
      %4240 = vset.pattern.permute.xlu0 32
      %4241 = vperm.xlu0 %4240, %v4111
      %v4242 = vpop.permute.xlu0 %4241
      %4245 = vset.pattern.permute.xlu0 32
      %4246 = vperm.xlu0 %4245, %v4116
      %v4247 = vpop.permute.xlu0 %4246
      %4250 = vset.pattern.permute.xlu0 32
      %4251 = vperm.xlu0 %4250, %v4121
      %v4252 = vpop.permute.xlu0 %4251
      %4255 = vset.pattern.permute.xlu0 32
      %4256 = vperm.xlu0 %4255, %v4126
      %v4257 = vpop.permute.xlu0 %4256
      %4260 = vset.pattern.permute.xlu0 32
      %4261 = vperm.xlu0 %4260, %v4131
      %v4262 = vpop.permute.xlu0 %4261
      %4265 = vset.pattern.permute.xlu0 32
      %4266 = vperm.xlu0 %4265, %v4136
      %v4267 = vpop.permute.xlu0 %4266
      %4270 = vset.pattern.permute.xlu0 32
      %4271 = vperm.xlu0 %4270, %v4141
      %v4272 = vpop.permute.xlu0 %4271
      %4275 = vset.pattern.permute.xlu0 32
      %4276 = vperm.xlu0 %4275, %v4146
      %v4277 = vpop.permute.xlu0 %4276
      %4280 = vset.pattern.permute.xlu0 32
      %4281 = vperm.xlu0 %4280, %v4151
      %v4282 = vpop.permute.xlu0 %4281
      %4285 = vset.pattern.permute.xlu0 32
      %4286 = vperm.xlu0 %4285, %v4156
      %v4287 = vpop.permute.xlu0 %4286
      %4290 = vset.pattern.permute.xlu0 32
      %4291 = vperm.xlu0 %4290, %v4161
      %v4292 = vpop.permute.xlu0 %4291
      %4295 = vset.pattern.permute.xlu0 32
      %4296 = vperm.xlu0 %4295, %v4166
      %v4297 = vpop.permute.xlu0 %4296
      %4300 = vset.pattern.permute.xlu0 32
      %4301 = vperm.xlu0 %4300, %v4171
      %v4302 = vpop.permute.xlu0 %4301
      %4305 = vset.pattern.permute.xlu0 32
      %4306 = vperm.xlu0 %4305, %v4176
      %v4307 = vpop.permute.xlu0 %4306
      %4310 = vset.pattern.permute.xlu0 32
      %4311 = vperm.xlu0 %4310, %v4181
      %v4312 = vpop.permute.xlu0 %4311
      %4315 = vset.pattern.permute.xlu0 32
      %4316 = vperm.xlu0 %4315, %v4186
      %v4317 = vpop.permute.xlu0 %4316
      %4320 = vset.pattern.permute.xlu0 32
      %4321 = vperm.xlu0 %4320, %v4191
      %v4322 = vpop.permute.xlu0 %4321
      %4325 = vset.pattern.permute.xlu0 32
      %4326 = vperm.xlu0 %4325, %v4196
      %v4327 = vpop.permute.xlu0 %4326
      %4330 = vset.pattern.permute.xlu0 32
      %4331 = vperm.xlu0 %4330, %v4201
      %v4332 = vpop.permute.xlu0 %4331
      %4335 = vset.pattern.permute.xlu0 32
      %4336 = vperm.xlu0 %4335, %v4206
      %v4337 = vpop.permute.xlu0 %4336
      %4340 = vset.pattern.permute.xlu0 32
      %4341 = vperm.xlu0 %4340, %v4211
      %v4342 = vpop.permute.xlu0 %4341
      %4345 = vset.pattern.permute.xlu0 32
      %4346 = vperm.xlu0 %4345, %v4216
      %v4347 = vpop.permute.xlu0 %4346
      %4350 = vset.pattern.permute.xlu0 32
      %4351 = vperm.xlu0 %4350, %v4221
      %v4352 = vpop.permute.xlu0 %4351
      %v4354 = vsub.f32 %v4096, %v4227
      %v4355 = vsub.f32 %v4101, %v4232
      %v4356 = vsub.f32 %v4106, %v4237
      %v4357 = vsub.f32 %v4111, %v4242
      %v4358 = vsub.f32 %v4116, %v4247
      %v4359 = vsub.f32 %v4121, %v4252
      %v4360 = vsub.f32 %v4126, %v4257
      %v4361 = vsub.f32 %v4131, %v4262
      %v4362 = vsub.f32 %v4136, %v4267
      %v4363 = vsub.f32 %v4141, %v4272
      %v4364 = vsub.f32 %v4146, %v4277
      %v4365 = vsub.f32 %v4151, %v4282
      %v4366 = vsub.f32 %v4156, %v4287
      %v4367 = vsub.f32 %v4161, %v4292
      %v4368 = vsub.f32 %v4166, %v4297
      %v4369 = vsub.f32 %v4171, %v4302
      %v4370 = vsub.f32 %v4176, %v4307
      %v4371 = vsub.f32 %v4181, %v4312
      %v4372 = vsub.f32 %v4186, %v4317
      %v4373 = vsub.f32 %v4191, %v4322
      %v4374 = vsub.f32 %v4196, %v4327
      %v4375 = vsub.f32 %v4201, %v4332
      %v4376 = vsub.f32 %v4206, %v4337
      %v4377 = vsub.f32 %v4211, %v4342
      %v4378 = vsub.f32 %v4216, %v4347
      %v4379 = vsub.f32 %v4221, %v4352
      %v4380 = vmul.f32 %v4354, %v4354
      %v4381 = vmul.f32 %v4355, %v4355
      %v4382 = vmul.f32 %v4356, %v4356
      %v4383 = vmul.f32 %v4357, %v4357
      %v4384 = vmul.f32 %v4358, %v4358
      %v4385 = vmul.f32 %v4359, %v4359
      %v4386 = vmul.f32 %v4360, %v4360
      %v4387 = vmul.f32 %v4361, %v4361
      %v4388 = vmul.f32 %v4362, %v4362
      %v4389 = vmul.f32 %v4363, %v4363
      %v4390 = vmul.f32 %v4364, %v4364
      %v4391 = vmul.f32 %v4365, %v4365
      %v4392 = vmul.f32 %v4366, %v4366
      %v4393 = vmul.f32 %v4367, %v4367
      %v4394 = vmul.f32 %v4368, %v4368
      %v4395 = vmul.f32 %v4369, %v4369
      %v4396 = vmul.f32 %v4370, %v4370
      %v4397 = vmul.f32 %v4371, %v4371
      %v4398 = vmul.f32 %v4372, %v4372
      %v4399 = vmul.f32 %v4373, %v4373
      %v4400 = vmul.f32 %v4374, %v4374
      %v4401 = vmul.f32 %v4375, %v4375
      %v4402 = vmul.f32 %v4376, %v4376
      %v4403 = vmul.f32 %v4377, %v4377
      %v4404 = vmul.f32 %v4378, %v4378
      %v4405 = vmul.f32 %v4379, %v4379
      %v4406 = vsel %vm716, %v4380, 0.0
      %4407 = vadd.xlane.f32.xlu0 %v4406
      %v4408 = vpop.xlane.xlu0 %4407
      %v4409 = vsel %vm716, %v4381, 0.0
      %4410 = vadd.xlane.f32.xlu0 %v4409
      %v4411 = vpop.xlane.xlu0 %4410
      %v4412 = vsel %vm716, %v4382, 0.0
      %4413 = vadd.xlane.f32.xlu0 %v4412
      %v4414 = vpop.xlane.xlu0 %4413
      %v4415 = vsel %vm716, %v4383, 0.0
      %4416 = vadd.xlane.f32.xlu0 %v4415
      %v4417 = vpop.xlane.xlu0 %4416
      %v4418 = vsel %vm716, %v4384, 0.0
      %4419 = vadd.xlane.f32.xlu0 %v4418
      %v4420 = vpop.xlane.xlu0 %4419
      %v4421 = vsel %vm716, %v4385, 0.0
      %4422 = vadd.xlane.f32.xlu0 %v4421
      %v4423 = vpop.xlane.xlu0 %4422
      %v4424 = vsel %vm716, %v4386, 0.0
      %4425 = vadd.xlane.f32.xlu0 %v4424
      %v4426 = vpop.xlane.xlu0 %4425
      %v4427 = vsel %vm716, %v4387, 0.0
      %4428 = vadd.xlane.f32.xlu0 %v4427
      %v4429 = vpop.xlane.xlu0 %4428
      %v4430 = vsel %vm716, %v4388, 0.0
      %4431 = vadd.xlane.f32.xlu0 %v4430
      %v4432 = vpop.xlane.xlu0 %4431
      %v4433 = vsel %vm716, %v4389, 0.0
      %4434 = vadd.xlane.f32.xlu0 %v4433
      %v4435 = vpop.xlane.xlu0 %4434
      %v4436 = vsel %vm716, %v4390, 0.0
      %4437 = vadd.xlane.f32.xlu0 %v4436
      %v4438 = vpop.xlane.xlu0 %4437
      %v4439 = vsel %vm716, %v4391, 0.0
      %4440 = vadd.xlane.f32.xlu0 %v4439
      %v4441 = vpop.xlane.xlu0 %4440
      %v4442 = vsel %vm716, %v4392, 0.0
      %4443 = vadd.xlane.f32.xlu0 %v4442
      %v4444 = vpop.xlane.xlu0 %4443
      %v4445 = vsel %vm716, %v4393, 0.0
      %4446 = vadd.xlane.f32.xlu0 %v4445
      %v4447 = vpop.xlane.xlu0 %4446
      %v4448 = vsel %vm716, %v4394, 0.0
      %4449 = vadd.xlane.f32.xlu0 %v4448
      %v4450 = vpop.xlane.xlu0 %4449
      %v4451 = vsel %vm716, %v4395, 0.0
      %4452 = vadd.xlane.f32.xlu0 %v4451
      %v4453 = vpop.xlane.xlu0 %4452
      %v4454 = vsel %vm716, %v4396, 0.0
      %4455 = vadd.xlane.f32.xlu0 %v4454
      %v4456 = vpop.xlane.xlu0 %4455
      %v4457 = vsel %vm716, %v4397, 0.0
      %4458 = vadd.xlane.f32.xlu0 %v4457
      %v4459 = vpop.xlane.xlu0 %4458
      %v4460 = vsel %vm716, %v4398, 0.0
      %4461 = vadd.xlane.f32.xlu0 %v4460
      %v4462 = vpop.xlane.xlu0 %4461
      %v4463 = vsel %vm716, %v4399, 0.0
      %4464 = vadd.xlane.f32.xlu0 %v4463
      %v4465 = vpop.xlane.xlu0 %4464
      %v4466 = vsel %vm716, %v4400, 0.0
      %4467 = vadd.xlane.f32.xlu0 %v4466
      %v4468 = vpop.xlane.xlu0 %4467
      %v4469 = vsel %vm716, %v4401, 0.0
      %4470 = vadd.xlane.f32.xlu0 %v4469
      %v4471 = vpop.xlane.xlu0 %4470
      %v4472 = vsel %vm716, %v4402, 0.0
      %4473 = vadd.xlane.f32.xlu0 %v4472
      %v4474 = vpop.xlane.xlu0 %4473
      %v4475 = vsel %vm716, %v4403, 0.0
      %4476 = vadd.xlane.f32.xlu0 %v4475
      %v4477 = vpop.xlane.xlu0 %4476
      %v4478 = vsel %vm716, %v4404, 0.0
      %4479 = vadd.xlane.f32.xlu0 %v4478
      %v4480 = vpop.xlane.xlu0 %4479
      %v4481 = vsel %vm716, %v4405, 0.0
      %4482 = vadd.xlane.f32.xlu0 %v4481
      %v4483 = vpop.xlane.xlu0 %4482
      %v4484 = vrcp.pop 32.0
      %v4485 = vmul.f32 %v4408, %v4484
      %v4486 = vmul.f32 %v4411, %v4484
      %v4487 = vmul.f32 %v4414, %v4484
      %v4488 = vmul.f32 %v4417, %v4484
      %v4489 = vmul.f32 %v4420, %v4484
      %v4490 = vmul.f32 %v4423, %v4484
      %v4491 = vmul.f32 %v4426, %v4484
      %v4492 = vmul.f32 %v4429, %v4484
      %v4493 = vmul.f32 %v4432, %v4484
      %v4494 = vmul.f32 %v4435, %v4484
      %v4495 = vmul.f32 %v4438, %v4484
      %v4496 = vmul.f32 %v4441, %v4484
      %v4497 = vmul.f32 %v4444, %v4484
      %v4498 = vmul.f32 %v4447, %v4484
      %v4499 = vmul.f32 %v4450, %v4484
      %v4500 = vmul.f32 %v4453, %v4484
      %v4501 = vmul.f32 %v4456, %v4484
      %v4502 = vmul.f32 %v4459, %v4484
      %v4503 = vmul.f32 %v4462, %v4484
      %v4504 = vmul.f32 %v4465, %v4484
      %v4505 = vmul.f32 %v4468, %v4484
      %v4506 = vmul.f32 %v4471, %v4484
      %v4507 = vmul.f32 %v4474, %v4484
      %v4508 = vmul.f32 %v4477, %v4484
      %v4509 = vmul.f32 %v4480, %v4484
      %v4510 = vmul.f32 %v4483, %v4484
      %v4511 = vadd.f32 %v4485, 1e-05
      %v4512 = vadd.f32 %v4486, 1e-05
      %v4513 = vadd.f32 %v4487, 1e-05
      %v4514 = vadd.f32 %v4488, 1e-05
      %v4515 = vadd.f32 %v4489, 1e-05
      %v4516 = vadd.f32 %v4490, 1e-05
      %v4517 = vadd.f32 %v4491, 1e-05
      %v4518 = vadd.f32 %v4492, 1e-05
      %v4519 = vadd.f32 %v4493, 1e-05
      %v4520 = vadd.f32 %v4494, 1e-05
      %v4521 = vadd.f32 %v4495, 1e-05
      %v4522 = vadd.f32 %v4496, 1e-05
      %v4523 = vadd.f32 %v4497, 1e-05
      %v4524 = vadd.f32 %v4498, 1e-05
      %v4525 = vadd.f32 %v4499, 1e-05
      %v4526 = vadd.f32 %v4500, 1e-05
      %v4527 = vadd.f32 %v4501, 1e-05
      %v4528 = vadd.f32 %v4502, 1e-05
      %v4529 = vadd.f32 %v4503, 1e-05
      %v4530 = vadd.f32 %v4504, 1e-05
      %v4531 = vadd.f32 %v4505, 1e-05
      %v4532 = vadd.f32 %v4506, 1e-05
      %v4533 = vadd.f32 %v4507, 1e-05
      %v4534 = vadd.f32 %v4508, 1e-05
      %v4535 = vadd.f32 %v4509, 1e-05
      %v4536 = vadd.f32 %v4510, 1e-05
      %v4537 = vrsqrt.pop %v4511
      %v4538 = vrsqrt.pop %v4512
      %v4539 = vrsqrt.pop %v4513
      %v4540 = vrsqrt.pop %v4514
      %v4541 = vrsqrt.pop %v4515
      %v4542 = vrsqrt.pop %v4516
      %v4543 = vrsqrt.pop %v4517
      %v4544 = vrsqrt.pop %v4518
      %v4545 = vrsqrt.pop %v4519
      %v4546 = vrsqrt.pop %v4520
      %v4547 = vrsqrt.pop %v4521
      %v4548 = vrsqrt.pop %v4522
      %v4549 = vrsqrt.pop %v4523
      %v4550 = vrsqrt.pop %v4524
      %v4551 = vrsqrt.pop %v4525
      %v4552 = vrsqrt.pop %v4526
      %v4553 = vrsqrt.pop %v4527
      %v4554 = vrsqrt.pop %v4528
      %v4555 = vrsqrt.pop %v4529
      %v4556 = vrsqrt.pop %v4530
      %v4557 = vrsqrt.pop %v4531
      %v4558 = vrsqrt.pop %v4532
      %v4559 = vrsqrt.pop %v4533
      %v4560 = vrsqrt.pop %v4534
      %v4561 = vrsqrt.pop %v4535
      %v4562 = vrsqrt.pop %v4536
      %v4563 = vmul.f32 %v4354, %v4537
      %v4564 = vmul.f32 %v4355, %v4538
      %v4565 = vmul.f32 %v4356, %v4539
      %v4566 = vmul.f32 %v4357, %v4540
      %v4567 = vmul.f32 %v4358, %v4541
      %v4568 = vmul.f32 %v4359, %v4542
      %v4569 = vmul.f32 %v4360, %v4543
      %v4570 = vmul.f32 %v4361, %v4544
      %v4571 = vmul.f32 %v4362, %v4545
      %v4572 = vmul.f32 %v4363, %v4546
      %v4573 = vmul.f32 %v4364, %v4547
      %v4574 = vmul.f32 %v4365, %v4548
      %v4575 = vmul.f32 %v4366, %v4549
      %v4576 = vmul.f32 %v4367, %v4550
      %v4577 = vmul.f32 %v4368, %v4551
      %v4578 = vmul.f32 %v4369, %v4552
      %v4579 = vmul.f32 %v4370, %v4553
      %v4580 = vmul.f32 %v4371, %v4554
      %v4581 = vmul.f32 %v4372, %v4555
      %v4582 = vmul.f32 %v4373, %v4556
      %v4583 = vmul.f32 %v4374, %v4557
      %v4584 = vmul.f32 %v4375, %v4558
      %v4585 = vmul.f32 %v4376, %v4559
      %v4586 = vmul.f32 %v4377, %v4560
      %v4587 = vmul.f32 %v4378, %v4561
      %v4588 = vmul.f32 %v4379, %v4562
      %v4589 = vld [vmem:[%s9] sm:$0x1]
      %v4590 = vlaneseq
      %v4591 = vshrl.u32 %v4590, 7
      %v4592 = vsub.s32 0, %v4591
      %v4593 = vrot.slane %v4589, %v4592
      %v4594 = vmul.f32 %v4563, %v4593
      %v4595 = vmul.f32 %v4564, %v4593
      %v4596 = vmul.f32 %v4565, %v4593
      %v4597 = vmul.f32 %v4566, %v4593
      %v4598 = vmul.f32 %v4567, %v4593
      %v4599 = vmul.f32 %v4568, %v4593
      %v4600 = vmul.f32 %v4569, %v4593
      %v4601 = vmul.f32 %v4570, %v4593
      %v4602 = vmul.f32 %v4571, %v4593
      %v4603 = vmul.f32 %v4572, %v4593
      %v4604 = vmul.f32 %v4573, %v4593
      %v4605 = vmul.f32 %v4574, %v4593
      %v4606 = vmul.f32 %v4575, %v4593
      %v4607 = vmul.f32 %v4576, %v4593
      %v4608 = vmul.f32 %v4577, %v4593
      %v4609 = vmul.f32 %v4578, %v4593
      %v4610 = vmul.f32 %v4579, %v4593
      %v4611 = vmul.f32 %v4580, %v4593
      %v4612 = vmul.f32 %v4581, %v4593
      %v4613 = vmul.f32 %v4582, %v4593
      %v4614 = vmul.f32 %v4583, %v4593
      %v4615 = vmul.f32 %v4584, %v4593
      %v4616 = vmul.f32 %v4585, %v4593
      %v4617 = vmul.f32 %v4586, %v4593
      %v4618 = vmul.f32 %v4587, %v4593
      %v4619 = vmul.f32 %v4588, %v4593
      %v4620 = vld [vmem:[%s9 + $0x1] sm:$0x1]
      %v4621 = vlaneseq
      %v4622 = vshrl.u32 %v4621, 7
      %v4623 = vsub.s32 0, %v4622
      %v4624 = vrot.slane %v4620, %v4623
      %v4625 = vadd.f32 %v4594, %v4624
      %v4626 = vadd.f32 %v4595, %v4624
      %v4627 = vadd.f32 %v4596, %v4624
      %v4628 = vadd.f32 %v4597, %v4624
      %v4629 = vadd.f32 %v4598, %v4624
      %v4630 = vadd.f32 %v4599, %v4624
      %v4631 = vadd.f32 %v4600, %v4624
      %v4632 = vadd.f32 %v4601, %v4624
      %v4633 = vadd.f32 %v4602, %v4624
      %v4634 = vadd.f32 %v4603, %v4624
      %v4635 = vadd.f32 %v4604, %v4624
      %v4636 = vadd.f32 %v4605, %v4624
      %v4637 = vadd.f32 %v4606, %v4624
      %v4638 = vadd.f32 %v4607, %v4624
      %v4639 = vadd.f32 %v4608, %v4624
      %v4640 = vadd.f32 %v4609, %v4624
      %v4641 = vadd.f32 %v4610, %v4624
      %v4642 = vadd.f32 %v4611, %v4624
      %v4643 = vadd.f32 %v4612, %v4624
      %v4644 = vadd.f32 %v4613, %v4624
      %v4645 = vadd.f32 %v4614, %v4624
      %v4646 = vadd.f32 %v4615, %v4624
      %v4647 = vadd.f32 %v4616, %v4624
      %v4648 = vadd.f32 %v4617, %v4624
      %v4649 = vadd.f32 %v4618, %v4624
      %v4650 = vadd.f32 %v4619, %v4624
      %v4651 = vmax.f32 %v4625, 0.0
      %v4652 = vmax.f32 %v4626, 0.0
      %v4653 = vmax.f32 %v4627, 0.0
      %v4654 = vmax.f32 %v4628, 0.0
      %v4655 = vmax.f32 %v4629, 0.0
      %v4656 = vmax.f32 %v4630, 0.0
      %v4657 = vmax.f32 %v4631, 0.0
      %v4658 = vmax.f32 %v4632, 0.0
      %v4659 = vmax.f32 %v4633, 0.0
      %v4660 = vmax.f32 %v4634, 0.0
      %v4661 = vmax.f32 %v4635, 0.0
      %v4662 = vmax.f32 %v4636, 0.0
      %v4663 = vmax.f32 %v4637, 0.0
      %v4664 = vmax.f32 %v4638, 0.0
      %v4665 = vmax.f32 %v4639, 0.0
      %v4666 = vmax.f32 %v4640, 0.0
      %v4667 = vmax.f32 %v4641, 0.0
      %v4668 = vmax.f32 %v4642, 0.0
      %v4669 = vmax.f32 %v4643, 0.0
      %v4670 = vmax.f32 %v4644, 0.0
      %v4671 = vmax.f32 %v4645, 0.0
      %v4672 = vmax.f32 %v4646, 0.0
      %v4673 = vmax.f32 %v4647, 0.0
      %v4674 = vmax.f32 %v4648, 0.0
      %v4675 = vmax.f32 %v4649, 0.0
      %v4676 = vmax.f32 %v4650, 0.0
      %v4677 = vld [vmem:[%s8] sm:$0xff]
      %v4678 = vld [vmem:[%s8 + $0x8] sm:$0xff]
      %v4679 = vld [vmem:[%s8 + $0x10] sm:$0xff]
      %v4680 = vld [vmem:[%s8 + $0x18] sm:$0xff]
      %v4681 = vld [vmem:[%s9 + $0x2] sm:$0x1]
      %v4682 = vlaneseq
      %v4683 = vshrl.u32 %v4682, 7
      %v4684 = vsub.s32 0, %v4683
      %v4685 = vrot.slane %v4681, %v4684
      %v4687 = vsel %vm716, %v4651, 0
      %v4690 = vsel %vm716, %v4652, 0
      %v4693 = vsel %vm716, %v4653, 0
      %v4696 = vsel %vm716, %v4654, 0
      %v4699 = vsel %vm716, %v4655, 0
      %v4702 = vsel %vm716, %v4656, 0
      %v4705 = vsel %vm716, %v4657, 0
      %v4708 = vsel %vm716, %v4658, 0
      %v4711 = vsel %vm716, %v4659, 0
      %v4714 = vsel %vm716, %v4660, 0
      %v4717 = vsel %vm716, %v4661, 0
      %v4720 = vsel %vm716, %v4662, 0
      %v4723 = vsel %vm716, %v4663, 0
      %v4726 = vsel %vm716, %v4664, 0
      %v4729 = vsel %vm716, %v4665, 0
      %v4732 = vsel %vm716, %v4666, 0
      %v4735 = vsel %vm716, %v4667, 0
      %v4738 = vsel %vm716, %v4668, 0
      %v4741 = vsel %vm716, %v4669, 0
      %v4744 = vsel %vm716, %v4670, 0
      %v4747 = vsel %vm716, %v4671, 0
      %v4750 = vsel %vm716, %v4672, 0
      %v4753 = vsel %vm716, %v4673, 0
      %v4756 = vsel %vm716, %v4674, 0
      %v4759 = vsel %vm716, %v4675, 0
      %v4762 = vsel %vm716, %v4676, 0
      %4764 = vmatprep.subr.mxu0 0.0
      %4765 = vmatpush1.msra.mxu0 0.0
      %4766 = vmatprep.subr.mxu0 0.0
      %4767 = vmatpush1.msra.mxu0 0.0
      %4768 = vmatprep.subr.mxu0 0.0
      %4769 = vmatpush1.msra.mxu0 0.0
      %4770 = vmatprep.subr.mxu0 0.0
      %4771 = vmatpush1.msra.mxu0 0.0
      %4772 = vmatprep.subr.mxu0 0.0
      %4773 = vmatpush1.msra.mxu0 0.0
      %4774 = vmatprep.subr.mxu0 0.0
      %4775 = vmatpush1.msra.mxu0 0.0
      %4776 = vmatprep.subr.mxu0 0.0
      %4777 = vmatpush1.msra.mxu0 0.0
      %4778 = vmatprep.subr.mxu0 0.0
      %4779 = vmatpush1.msra.mxu0 0.0
      %4780 = vmatprep.subr.mxu0 0.0
      %4781 = vmatpush1.msra.mxu0 0.0
      %4782 = vmatprep.subr.mxu0 0.0
      %4783 = vmatpush1.msra.mxu0 0.0
      %4784 = vmatprep.subr.mxu0 0.0
      %4785 = vmatpush1.msra.mxu0 0.0
      %4786 = vmatprep.subr.mxu0 0.0
      %4787 = vmatpush1.msra.mxu0 0.0
      %4788 = vmatprep.subr.mxu0 0.0
      %4789 = vmatpush1.msra.mxu0 %v4680
      %4790 = vmatprep.subr.mxu0 0.0
      %4791 = vmatpush1.msra.mxu0 %v4679
      %4792 = vmatprep.subr.mxu0 0.0
      %4793 = vmatpush1.msra.mxu0 %v4678
      %4794 = vmatprep.subr.mxu0 0.0
      %4795 = vmatpush1.msra.mxu0 %v4677
      %4796 = vmatprep.subr.mxu0 0.0
      %4797 = vmatpush2.msra.mxu0 0.0
      %4798 = vmatprep.subr.mxu0 0.0
      %4799 = vmatpush2.msra.mxu0 0.0
      %4800 = vmatprep.subr.mxu0 0.0
      %4801 = vmatpush2.msra.mxu0 0.0
      %4802 = vmatprep.subr.mxu0 0.0
      %4803 = vmatpush2.msra.mxu0 0.0
      %4804 = vmatprep.subr.mxu0 0.0
      %4805 = vmatpush2.msra.mxu0 0.0
      %4806 = vmatprep.subr.mxu0 0.0
      %4807 = vmatpush2.msra.mxu0 0.0
      %4808 = vmatprep.subr.mxu0 0.0
      %4809 = vmatpush2.msra.mxu0 0.0
      %4810 = vmatprep.subr.mxu0 0.0
      %4811 = vmatpush2.msra.mxu0 0.0
      %4812 = vmatprep.subr.mxu0 0.0
      %4813 = vmatpush2.msra.mxu0 0.0
      %4814 = vmatprep.subr.mxu0 0.0
      %4815 = vmatpush2.msra.mxu0 0.0
      %4816 = vmatprep.subr.mxu0 0.0
      %4817 = vmatpush2.msra.mxu0 0.0
      %4818 = vmatprep.subr.mxu0 0.0
      %4819 = vmatpush2.msra.mxu0 0.0
      %4820 = vmatprep.subr.mxu0 0.0
      %4821 = vmatpush2.msra.mxu0 0.0
      %4822 = vmatprep.subr.mxu0 0.0
      %4823 = vmatpush2.msra.mxu0 0.0
      %4824 = vmatprep.subr.mxu0 0.0
      %4825 = vmatpush2.msra.mxu0 0.0
      %4826 = vmatprep.subr.mxu0 0.0
      %4827 = vmatpush2.msra.mxu0 0.0
      %4828 = vmatprep.mubr.f32.mxu0 0.0
      %4829 = vmatmul.mubr.f32.gmra.mxu0 %v4687
      %v4830 = vpop.f32.mrf.mxu0
      %v4831 = vadd.f32 %v4685, %v4830
      %v4832 = vpop.f32.mrf.mxu0
      %4833 = vmatprep.mubr.f32.mxu0 0.0
      %4834 = vmatmul.mubr.f32.gmra.mxu0 %v4690
      %v4835 = vpop.f32.mrf.mxu0
      %v4836 = vadd.f32 %v4685, %v4835
      %v4837 = vpop.f32.mrf.mxu0
      %4838 = vmatprep.mubr.f32.mxu0 0.0
      %4839 = vmatmul.mubr.f32.gmra.mxu0 %v4693
      %v4840 = vpop.f32.mrf.mxu0
      %v4841 = vadd.f32 %v4685, %v4840
      %v4842 = vpop.f32.mrf.mxu0
      %4843 = vmatprep.mubr.f32.mxu0 0.0
      %4844 = vmatmul.mubr.f32.gmra.mxu0 %v4696
      %v4845 = vpop.f32.mrf.mxu0
      %v4846 = vadd.f32 %v4685, %v4845
      %v4847 = vpop.f32.mrf.mxu0
      %4848 = vmatprep.mubr.f32.mxu0 0.0
      %4849 = vmatmul.mubr.f32.gmra.mxu0 %v4699
      %v4850 = vpop.f32.mrf.mxu0
      %v4851 = vadd.f32 %v4685, %v4850
      %v4852 = vpop.f32.mrf.mxu0
      %4853 = vmatprep.mubr.f32.mxu0 0.0
      %4854 = vmatmul.mubr.f32.gmra.mxu0 %v4702
      %v4855 = vpop.f32.mrf.mxu0
      %v4856 = vadd.f32 %v4685, %v4855
      %v4857 = vpop.f32.mrf.mxu0
      %4858 = vmatprep.mubr.f32.mxu0 0.0
      %4859 = vmatmul.mubr.f32.gmra.mxu0 %v4705
      %v4860 = vpop.f32.mrf.mxu0
      %v4861 = vadd.f32 %v4685, %v4860
      %v4862 = vpop.f32.mrf.mxu0
      %4863 = vmatprep.mubr.f32.mxu0 0.0
      %4864 = vmatmul.mubr.f32.gmra.mxu0 %v4708
      %v4865 = vpop.f32.mrf.mxu0
      %v4866 = vadd.f32 %v4685, %v4865
      %v4867 = vpop.f32.mrf.mxu0
      %4868 = vmatprep.mubr.f32.mxu0 0.0
      %4869 = vmatmul.mubr.f32.gmra.mxu0 %v4711
      %v4870 = vpop.f32.mrf.mxu0
      %v4871 = vadd.f32 %v4685, %v4870
      %v4872 = vpop.f32.mrf.mxu0
      %4873 = vmatprep.mubr.f32.mxu0 0.0
      %4874 = vmatmul.mubr.f32.gmra.mxu0 %v4714
      %v4875 = vpop.f32.mrf.mxu0
      %v4876 = vadd.f32 %v4685, %v4875
      %v4877 = vpop.f32.mrf.mxu0
      %4878 = vmatprep.mubr.f32.mxu0 0.0
      %4879 = vmatmul.mubr.f32.gmra.mxu0 %v4717
      %v4880 = vpop.f32.mrf.mxu0
      %v4881 = vadd.f32 %v4685, %v4880
      %v4882 = vpop.f32.mrf.mxu0
      %4883 = vmatprep.mubr.f32.mxu0 0.0
      %4884 = vmatmul.mubr.f32.gmra.mxu0 %v4720
      %v4885 = vpop.f32.mrf.mxu0
      %v4886 = vadd.f32 %v4685, %v4885
      %v4887 = vpop.f32.mrf.mxu0
      %4888 = vmatprep.mubr.f32.mxu0 0.0
      %4889 = vmatmul.mubr.f32.gmra.mxu0 %v4723
      %v4890 = vpop.f32.mrf.mxu0
      %v4891 = vadd.f32 %v4685, %v4890
      %v4892 = vpop.f32.mrf.mxu0
      %4893 = vmatprep.mubr.f32.mxu0 0.0
      %4894 = vmatmul.mubr.f32.gmra.mxu0 %v4726
      %v4895 = vpop.f32.mrf.mxu0
      %v4896 = vadd.f32 %v4685, %v4895
      %v4897 = vpop.f32.mrf.mxu0
      %4898 = vmatprep.mubr.f32.mxu0 0.0
      %4899 = vmatmul.mubr.f32.gmra.mxu0 %v4729
      %v4900 = vpop.f32.mrf.mxu0
      %v4901 = vadd.f32 %v4685, %v4900
      %v4902 = vpop.f32.mrf.mxu0
      %4903 = vmatprep.mubr.f32.mxu0 0.0
      %4904 = vmatmul.mubr.f32.gmra.mxu0 %v4732
      %v4905 = vpop.f32.mrf.mxu0
      %v4906 = vadd.f32 %v4685, %v4905
      %v4907 = vpop.f32.mrf.mxu0
      %4908 = vmatprep.mubr.f32.mxu0 0.0
      %4909 = vmatmul.mubr.f32.gmra.mxu0 %v4735
      %v4910 = vpop.f32.mrf.mxu0
      %v4911 = vadd.f32 %v4685, %v4910
      %v4912 = vpop.f32.mrf.mxu0
      %4913 = vmatprep.mubr.f32.mxu0 0.0
      %4914 = vmatmul.mubr.f32.gmra.mxu0 %v4738
      %v4915 = vpop.f32.mrf.mxu0
      %v4916 = vadd.f32 %v4685, %v4915
      %v4917 = vpop.f32.mrf.mxu0
      %4918 = vmatprep.mubr.f32.mxu0 0.0
      %4919 = vmatmul.mubr.f32.gmra.mxu0 %v4741
      %v4920 = vpop.f32.mrf.mxu0
      %v4921 = vadd.f32 %v4685, %v4920
      %v4922 = vpop.f32.mrf.mxu0
      %4923 = vmatprep.mubr.f32.mxu0 0.0
      %4924 = vmatmul.mubr.f32.gmra.mxu0 %v4744
      %v4925 = vpop.f32.mrf.mxu0
      %v4926 = vadd.f32 %v4685, %v4925
      %v4927 = vpop.f32.mrf.mxu0
      %4928 = vmatprep.mubr.f32.mxu0 0.0
      %4929 = vmatmul.mubr.f32.gmra.mxu0 %v4747
      %v4930 = vpop.f32.mrf.mxu0
      %v4931 = vadd.f32 %v4685, %v4930
      %v4932 = vpop.f32.mrf.mxu0
      %4933 = vmatprep.mubr.f32.mxu0 0.0
      %4934 = vmatmul.mubr.f32.gmra.mxu0 %v4750
      %v4935 = vpop.f32.mrf.mxu0
      %v4936 = vadd.f32 %v4685, %v4935
      %v4937 = vpop.f32.mrf.mxu0
      %4938 = vmatprep.mubr.f32.mxu0 0.0
      %4939 = vmatmul.mubr.f32.gmra.mxu0 %v4753
      %v4940 = vpop.f32.mrf.mxu0
      %v4941 = vadd.f32 %v4685, %v4940
      %v4942 = vpop.f32.mrf.mxu0
      %4943 = vmatprep.mubr.f32.mxu0 0.0
      %4944 = vmatmul.mubr.f32.gmra.mxu0 %v4756
      %v4945 = vpop.f32.mrf.mxu0
      %v4946 = vadd.f32 %v4685, %v4945
      %v4947 = vpop.f32.mrf.mxu0
      %4948 = vmatprep.mubr.f32.mxu0 0.0
      %4949 = vmatmul.mubr.f32.gmra.mxu0 %v4759
      %v4950 = vpop.f32.mrf.mxu0
      %v4951 = vadd.f32 %v4685, %v4950
      %v4952 = vpop.f32.mrf.mxu0
      %4953 = vmatprep.mubr.f32.mxu0 0.0
      %4954 = vmatmul.mubr.f32.gmra.mxu0 %v4762
      %v4955 = vpop.f32.mrf.mxu0
      %v4956 = vadd.f32 %v4685, %v4955
      %v4957 = vpop.f32.mrf.mxu0
      %4958 = vdwg.mxu0
      %4959 = vst.msk [vmem:[%s383] sm:$0xff] %vm716, %v4831
      %4960 = vst.msk [vmem:[%s383 + $0x8] sm:$0xff] %vm716, %v4836
      %4961 = vst.msk [vmem:[%s383 + $0x10] sm:$0xff] %vm716, %v4841
      %4962 = vst.msk [vmem:[%s383 + $0x18] sm:$0xff] %vm716, %v4846
      %4963 = vst.msk [vmem:[%s383 + $0x20] sm:$0xff] %vm716, %v4851
      %4964 = vst.msk [vmem:[%s383 + $0x28] sm:$0xff] %vm716, %v4856
      %4965 = vst.msk [vmem:[%s383 + $0x30] sm:$0xff] %vm716, %v4861
      %4966 = vst.msk [vmem:[%s383 + $0x38] sm:$0xff] %vm716, %v4866
      %4967 = vst.msk [vmem:[%s383 + $0x40] sm:$0xff] %vm716, %v4871
      %4968 = vst.msk [vmem:[%s383 + $0x48] sm:$0xff] %vm716, %v4876
      %4969 = vst.msk [vmem:[%s383 + $0x50] sm:$0xff] %vm716, %v4881
      %4970 = vst.msk [vmem:[%s383 + $0x58] sm:$0xff] %vm716, %v4886
      %4971 = vst.msk [vmem:[%s383 + $0x60] sm:$0xff] %vm716, %v4891
      %4972 = vst.msk [vmem:[%s383 + $0x68] sm:$0xff] %vm716, %v4896
      %4973 = vst.msk [vmem:[%s383 + $0x70] sm:$0xff] %vm716, %v4901
      %4974 = vst.msk [vmem:[%s383 + $0x78] sm:$0xff] %vm716, %v4906
      %4975 = vst.msk [vmem:[%s383 + $0x80] sm:$0xff] %vm716, %v4911
      %4976 = vst.msk [vmem:[%s383 + $0x88] sm:$0xff] %vm716, %v4916
      %4977 = vst.msk [vmem:[%s383 + $0x90] sm:$0xff] %vm716, %v4921
      %4978 = vst.msk [vmem:[%s383 + $0x98] sm:$0xff] %vm716, %v4926
      %4979 = vst.msk [vmem:[%s383 + $0xa0] sm:$0xff] %vm716, %v4931
      %4980 = vst.msk [vmem:[%s383 + $0xa8] sm:$0xff] %vm716, %v4936
      %4981 = vst.msk [vmem:[%s383 + $0xb0] sm:$0xff] %vm716, %v4941
      %4982 = vst.msk [vmem:[%s383 + $0xb8] sm:$0xff] %vm716, %v4946
      %4983 = vst.msk [vmem:[%s383 + $0xc0] sm:$0xff] %vm716, %v4951
      %4984 = vst.msk [vmem:[%s383 + $0xc8] sm:$0xff] %vm716, %v4956
      %s4985 = smul.u32 26, %s21
      %p4986 = scmp.lt.s32.totalorder %s4985, 51
      %s4987 = scalar_select %p4986, %s4985, 51
      %s4988 = smul.addr %s4987, 8
      %s4989 = scalar_lea.vmem %s10, %s4988
      // Predicated region
      $region61: #{tpu_custom_call.1} parent=59 // pred_check
        %p4990 = pneg %p259
      $region62: #{tpu_custom_call.1} parent=59 // pred_check_branch
        %4992 = sbr.rel (%p4990) target = $region64
      $region63: #{tpu_custom_call.1} parent=59 // pred_region
        %s4993 = smul.u32 26, %s21
      $region64: #{tpu_custom_call.1} parent=59 // pred_fallthru
        _
    $region60: #{tpu_custom_call.1} parent=5 // pred_fallthru
      _
    %p4994 = scmp.le.s32.totalorder 2, %s16
    // Predicated region
    $region65: #{tpu_custom_call.1} parent=5 // pred_check
      %p4995 = pneg %p4994
    $region66: #{tpu_custom_call.1} parent=5 // pred_check_branch
      %4997 = sbr.rel (%p4995) target = $region68
    $region67: #{tpu_custom_call.1} parent=5 // pred_region
      %s4998 = ssub.s32 %s16, 2
      // Predicated region
      $region69: #{tpu_custom_call.1} parent=67 // pred_check
        %p4999 = pneg %p265
      $region70: #{tpu_custom_call.1} parent=67 // pred_check_branch
        %5001 = sbr.rel (%p4999) target = $region72
      $region71: #{tpu_custom_call.1} parent=67 // pred_region
        %s5002 = smul.u32 26, %s22
        %p5003 = scmp.lt.s32.totalorder %s5002, 51
        %s5004 = scalar_select %p5003, %s5002, 51
        %s5005 = smul.addr %s5004, 8
        %s5006 = scalar_lea.vmem %s10, %s5005
      $region72: #{tpu_custom_call.1} parent=67 // pred_fallthru
        _
    $region68: #{tpu_custom_call.1} parent=5 // pred_fallthru
      _
  $region6: #{tpu_custom_call.1} parent=0 // loop_footer
    %s20 = sadd.s32 1, %s16
  $region7: #{tpu_custom_call.1} parent=0 // loop_footer_branch
    %15 = sbr.rel target = $region3
  $region8: #{tpu_custom_call.1} parent=0 // loop_exit
    _

</llo_original>
